<compile_context>
chip_gen: v5e
topology: v5e:2x2
jax: 0.10.0
libtpu: 0.0.40
codegen_flags: <defaults>
</compile_context>

<pallas_src>
import functools

import jax
import jax.numpy as jnp
from jax.experimental import pallas as pl
from jax.experimental.pallas import tpu as pltpu

NEG_SLOPE = 0.01                 # torch.nn.LeakyReLU default negative_slope
_VMEM_LIMIT = 32 << 20           # raise v5e's 16 MiB scoped default; <= v6e/v7x defaults
_BLOCK_BUDGET = 8 << 20          # double-buffered (x + out) block bytes per grid step


def _leaky(x):
    return jnp.where(x >= 0, x, NEG_SLOPE * x)


@functools.lru_cache(maxsize=None)
def _min_grid_steps():
    """~2 steps suffice for double-buffering on single-TC chips (v5e/v6e);
    v7x shards 'parallel' grid axes across 2 TensorCores, so ask for more."""
    try:
        kind = jax.devices()[0].device_kind.lower()
    except Exception:
        return 2
    return 8 if "v7" in kind else 2


# -----------------------------------------------------------------------------
# Generic kernel: out(b, Cout, TP) = max_g LeakyReLU(W(Cout,K) @ X[b,g](K,TP))
#   - non-stem, stride=1 : G=1, K=Cin       (1x1 conv + LeakyReLU)
#   - non-stem, stride=2 : G=4, K=Cin       (the four MaxPool2d(2,2) offsets)
#   - stem fallback      : G=3, K=9*Cin     (im2col, only for stride != 1)
# BT frames per grid step; lane axis is the flattened spatial axis (padded to a
# multiple of 128 by the wrapper so every store is an unmasked full-lane vst).
# -----------------------------------------------------------------------------
def _linkconv_kernel(x_ref, w_ref, o_ref):
    # x_ref: (BT, G, K, TP)  w_ref: (Cout, K)  o_ref: (BT, Cout, TP)
    w = w_ref[...]
    bt, g = x_ref.shape[0], x_ref.shape[1]
    for b in range(bt):
        y = _leaky(jnp.dot(w, x_ref[b, 0], preferred_element_type=jnp.float32))
        for gi in range(1, g):
            y = jnp.maximum(
                y, _leaky(jnp.dot(w, x_ref[b, gi],
                                  preferred_element_type=jnp.float32)))
        o_ref[b] = y.astype(o_ref.dtype)


def _pick_tiles(b, g, k, cout, p, itemsize, max_bt=8, max_tp=4096):
    """Choose (BT, TP): TP = largest 128-multiple divisor of p (p already padded
    to a 128 multiple), BT = largest divisor of b fitting the VMEM budget while
    keeping >= min_steps grid steps (pipelining / 2-TC sharding)."""
    min_steps = _min_grid_steps()
    divs = [d for d in range(128, min(p, max_tp) + 1, 128) if p % d == 0] or [p]
    tp = divs[-1]
    for d in reversed(divs):
        if b * (p // d) >= min_steps:
            tp = d
            break
    bt = 1
    for cand in range(min(b, max_bt), 0, -1):
        if b % cand:
            continue
        blk = 2 * cand * (g * k + cout) * tp * itemsize   # double-buffered x+out
        if blk <= _BLOCK_BUDGET and (b // cand) * (p // tp) >= min_steps:
            bt = cand
            break
    return bt, tp


def _run_linkconv(xg, wk):
    """xg: (B, G, K, P) channels-first tiles; wk: (Cout, K).
    Returns (B, Cout, P) = max_g leaky(wk @ xg[:, g])."""
    b, g, k, p = xg.shape
    cout = wk.shape[0]
    itemsize = jnp.dtype(xg.dtype).itemsize
    # Pad the lane (spatial) axis to a multiple of 128 -> unmasked stores.
    p_pad = -(-p // 128) * 128
    if p_pad != p:
        xg = jnp.pad(xg, ((0, 0), (0, 0), (0, 0), (0, p_pad - p)))
    bt, tp = _pick_tiles(b, g, k, cout, p_pad, itemsize)
    flops = 2 * b * g * k * cout * p_pad
    bytes_accessed = (b * g * k * p_pad + cout * k + b * cout * p_pad) * itemsize
    out = pl.pallas_call(
        _linkconv_kernel,
        out_shape=jax.ShapeDtypeStruct((b, cout, p_pad), xg.dtype),
        grid=(b // bt, p_pad // tp),
        in_specs=[pl.BlockSpec((bt, g, k, tp), lambda i, j: (i, 0, 0, j)),
                  pl.BlockSpec((cout, k), lambda i, j: (0, 0))],
        out_specs=pl.BlockSpec((bt, cout, tp), lambda i, j: (i, 0, j)),
        compiler_params=pltpu.CompilerParams(
            dimension_semantics=("parallel", "parallel"),
            vmem_limit_bytes=_VMEM_LIMIT),
        cost_estimate=pl.CostEstimate(flops=int(flops), transcendentals=0,
                                      bytes_accessed=int(bytes_accessed)),
    )(xg, wk)
    if p_pad != p:
        out = out[..., :p]
    return out


# -----------------------------------------------------------------------------
# Stem kernel (stride=1): 3x3 conv (pad=1) + LeakyReLU + MaxPool3d((3,1,1)),
# fully fused.  The 9 taps are formed in-kernel with pltpu.roll on the lane
# axis (XLU slot, ~free) plus precomputed 0/1 boundary masks, so no im2col
# materialization ever hits HBM.
# -----------------------------------------------------------------------------
def _stem_kernel(x_ref, w_ref, m_ref, o_ref, *, width, hw):
    # x_ref: (BT, 3, Cin, H*W)  w_ref: (3, 3, Cout, Cin)
    # m_ref: (9, 1, H*W)        o_ref: (BT, Cout, H*W)
    w_all = w_ref[...]
    m_all = m_ref[...]
    bt = x_ref.shape[0]
    for b in range(bt):
        y = None
        for g in range(3):                               # 3 frames of one group
            x = x_ref[b, g]                              # (Cin, H*W)
            acc = jnp.dot(w_all[1, 1], x, preferred_element_type=jnp.float32)
            taps = [(dy, dx) for dy in (-1, 0, 1) for dx in (-1, 0, 1)]
            for tap, (dy, dx) in enumerate(taps):
                if dy == 0 and dx == 0:
                    continue
                shift = (-(dy * width + dx)) % hw        # roll(x, s)[l] = x[l - s]
                xs = pltpu.roll(x, shift, 1) * m_all[tap]  # zero-padded edges
                acc = acc + jnp.dot(w_all[dy + 1, dx + 1], xs,
                                    preferred_element_type=jnp.float32)
            yg = _leaky(acc)                             # LeakyReLU
            y = yg if y is None else jnp.maximum(y, yg)  # MaxPool3d((3,1,1))
        o_ref[b] = y.astype(o_ref.dtype)


def _stem_masks(h, w, dtype):
    idx = jnp.arange(h * w, dtype=jnp.int32)
    row, col = idx // w, idx % w
    ms = []
    for dy in (-1, 0, 1):
        for dx in (-1, 0, 1):
            ok = ((row + dy >= 0) & (row + dy < h) &
                  (col + dx >= 0) & (col + dx < w))
            ms.append(ok.astype(dtype))
    return jnp.stack(ms).reshape(9, 1, h * w)


def _pick_bt_stem(b, cin, cout, hw, itemsize, max_bt=8):
    min_steps = _min_grid_steps()
    for cand in range(min(b, max_bt), 0, -1):
        if b % cand:
            continue
        blk = 2 * cand * (3 * cin + cout) * hw * itemsize
        if blk <= _BLOCK_BUDGET and (b // cand) >= min_steps:
            return cand
    return 1


def _run_stemconv(xg, w_taps, masks, height, width):
    """xg: (B, 3, Cin, H*W); w_taps: (3, 3, Cout, Cin); masks: (9, 1, H*W).
    Returns (B, Cout, H*W) = max over the 3 frames of leaky(conv3x3(frame))."""
    b, _, cin, hw = xg.shape
    cout = w_taps.shape[2]
    itemsize = jnp.dtype(xg.dtype).itemsize
    bt = _pick_bt_stem(b, cin, cout, hw, itemsize)
    flops = 2 * b * 3 * 9 * cin * cout * hw
    bytes_accessed = (b * 3 * cin * hw + 9 * cout * cin + b * cout * hw) * itemsize
    kernel = functools.partial(_stem_kernel, width=width, hw=hw)
    return pl.pallas_call(
        kernel,
        out_shape=jax.ShapeDtypeStruct((b, cout, hw), xg.dtype),
        grid=(b // bt,),
        in_specs=[pl.BlockSpec((bt, 3, cin, hw), lambda i: (i, 0, 0, 0)),
                  pl.BlockSpec((3, 3, cout, cin), lambda i: (0, 0, 0, 0)),
                  pl.BlockSpec((9, 1, hw), lambda i: (0, 0, 0))],
        out_specs=pl.BlockSpec((bt, cout, hw), lambda i: (i, 0, 0)),
        compiler_params=pltpu.CompilerParams(
            dimension_semantics=("parallel",),
            vmem_limit_bytes=_VMEM_LIMIT),
        cost_estimate=pl.CostEstimate(flops=int(flops), transcendentals=0,
                                      bytes_accessed=int(bytes_accessed)),
    )(xg, w_taps, masks)


# -----------------------------------------------------------------------------
# Jitted forward wrappers (glue is pure reshape; only link2 pays one transpose
# pass, which also folds the batch into the lane axis so stores stay unmasked).
# -----------------------------------------------------------------------------
@jax.jit
def _forward_stem1(x, w_taps):
    n, s, c, h, w = x.shape
    cout = w_taps.shape[2]
    s3 = s // 3
    xg = x[:, :3 * s3].reshape(n * s3, 3, c, h * w)      # pure reshape
    masks = _stem_masks(h, w, x.dtype)
    out = _run_stemconv(xg, w_taps, masks, h, w)         # (n*s3, Cout, H*W)
    return out.reshape(n, s3, cout, h, w)


@functools.partial(jax.jit, static_argnames=("stride",))
def _forward_stem_im2col(x, wk, *, stride):
    # TODO(synk): general-stride stem keeps the (correct but slower) im2col path.
    n, s, c, h, w = x.shape
    cout = wk.shape[0]
    st = stride
    ho = (h - 1) // st + 1
    wo = (w - 1) // st + 1
    s3 = s // 3
    frames = x[:, :3 * s3].reshape(n * 3 * s3, c, h, w)
    xpad = jnp.pad(frames, ((0, 0), (0, 0), (1, 1), (1, 1)))
    taps = [xpad[:, :, dy:dy + st * (ho - 1) + 1:st, dx:dx + st * (wo - 1) + 1:st]
            for dy in range(3) for dx in range(3)]
    xcol = jnp.stack(taps, axis=1).reshape(n * s3, 3, 9 * c, ho * wo)
    out = _run_linkconv(xcol, wk)                        # (n*s3, Cout, Ho*Wo)
    return out.reshape(n, s3, cout, ho, wo)


@jax.jit
def _forward_link1(x, wk):
    n, s, c, h, w = x.shape
    cout = wk.shape[0]
    xg = x.reshape(n * s, 1, c, h * w)                   # pure reshape
    out = _run_linkconv(xg, wk)                          # (n*s, Cout, H*W)
    return out.reshape(n, s, cout, h, w)


@jax.jit
def _forward_link2(x, wk):
    n, s, c, h, w = x.shape
    cout = wk.shape[0]
    b = n * s
    ho, wo = h // 2, w // 2
    xb = x.reshape(b, c, h, w)[:, :, :2 * ho, :2 * wo]
    # One transpose pass groups the four MaxPool2d(2,2) offsets as the G axis
    # AND folds the batch into the lane axis (B*Ho*Wo), so the kernel's output
    # lane width is a large multiple of 128 even for tiny feature maps.
    x4 = (xb.reshape(b, c, ho, 2, wo, 2)
            .transpose(3, 5, 1, 0, 2, 4)                 # (2, 2, C, B, Ho, Wo)
            .reshape(1, 4, c, b * ho * wo))
    out = _run_linkconv(x4, wk)                          # (1, Cout, B*Ho*Wo)
    out = out.reshape(cout, b, ho, wo).transpose(1, 0, 2, 3)
    return out.reshape(n, s, cout, ho, wo)


# -----------------------------------------------------------------------------
# LinkLayer (forward pass)
# -----------------------------------------------------------------------------
class LinkLayer:
    """JAX/Pallas port of opengait LinkLayer (forward pass only)."""

    def __init__(self, in_channels, out_channels, stride, is_stem=False, key=None):
        self.in_channels = in_channels
        self.out_channels = out_channels
        self.stride = stride
        self.is_stem = is_stem
        key = jax.random.PRNGKey(42) if key is None else key
        kh = kw = 3 if is_stem else 1
        fan_in = in_channels * kh * kw
        # Deterministic init; PyTorch OIHW weight layout, conv has bias=False.
        w = jax.random.normal(key, (out_channels, in_channels, kh, kw), jnp.float32)
        self.w_oihw = w / jnp.sqrt(jnp.float32(fan_in))
        if is_stem:
            # (3, 3, Cout, Cin) tap-major layout for the fused stem kernel.
            self.w_taps = jnp.transpose(self.w_oihw, (2, 3, 0, 1))
            # (Cout, 9*Cin) im2col layout for the general-stride fallback.
            self.w_im2col = jnp.transpose(self.w_oihw, (0, 2, 3, 1)).reshape(
                out_channels, kh * kw * in_channels)
        else:
            self.w_kernel = self.w_oihw[:, :, 0, 0]      # (Cout, Cin)

    def __call__(self, x):
        n, s, c, h, w = x.shape
        assert c == self.in_channels
        if self.is_stem:
            if self.stride == 1:
                return _forward_stem1(x, self.w_taps)
            return _forward_stem_im2col(x, self.w_im2col, stride=self.stride)
        if self.stride == 2:
            return _forward_link2(x, self.w_kernel)
        return _forward_link1(x, self.w_kernel)


# -----------------------------------------------------------------------------
# Pure-JAX reference (for the in-script correctness check only)
# -----------------------------------------------------------------------------
def _ref_forward(layer, x):
    n, s, c, h, w = x.shape
    xf = x.reshape(n * s, c, h, w)
    st = layer.stride
    if layer.is_stem:
        y = jax.lax.conv_general_dilated(
            xf, layer.w_oihw, window_strides=(st, st), padding=((1, 1), (1, 1)),
            dimension_numbers=('NCHW', 'OIHW', 'NCHW'),
            precision=jax.lax.Precision.HIGHEST)
        y = _leaky(y)
        _, cout, ho, wo = y.shape
        s3 = s // 3
        y = y.reshape(n, s, cout, ho, wo)[:, :3 * s3]
        return y.reshape(n, s3, 3, cout, ho, wo).max(axis=2)
    else:
        y = jax.lax.conv_general_dilated(
            xf, layer.w_oihw, window_strides=(1, 1), padding='VALID',
            dimension_numbers=('NCHW', 'OIHW', 'NCHW'),
            precision=jax.lax.Precision.HIGHEST)
        y = _leaky(y)
        if st == 2:
            y = jax.lax.reduce_window(
                y, jnp.array(-jnp.inf, y.dtype), jax.lax.max,
                (1, 1, 2, 2), (1, 1, 2, 2), 'VALID')
        _, cout, ho, wo = y.shape
        return y.reshape(n, s, cout, ho, wo)


if __name__ == "__main__":
    key = jax.random.PRNGKey(0)
    k1, k2, k3 = jax.random.split(key, 3)

    # 1) stem branch: 3x3 conv (stride=1, pad=1) + LeakyReLU + MaxPool3d((3,1,1))
    x_stem = jax.random.normal(k1, (2, 6, 3, 16, 16), jnp.float32)
    stem = LinkLayer(3, 16, stride=1, is_stem=True)
    y_stem = jax.block_until_ready(stem(x_stem))
    assert y_stem.shape == (2, 2, 16, 16, 16)
    assert jnp.allclose(y_stem, _ref_forward(stem, x_stem), atol=1e-3, rtol=1e-3)

    # 2) non-stem, stride=1: 1x1 conv + LeakyReLU
    x_s1 = jax.random.normal(k2, (2, 6, 16, 16, 16), jnp.float32)
    link1 = LinkLayer(16, 32, stride=1, is_stem=False)
    y_s1 = jax.block_until_ready(link1(x_s1))
    assert y_s1.shape == (2, 6, 32, 16, 16)
    assert jnp.allclose(y_s1, _ref_forward(link1, x_s1), atol=1e-3, rtol=1e-3)

    # 3) non-stem, stride=2: 1x1 conv + LeakyReLU + MaxPool2d(2, 2)
    x_s2 = jax.random.normal(k3, (2, 6, 16, 16, 16), jnp.float32)
    link2 = LinkLayer(16, 32, stride=2, is_stem=False)
    y_s2 = jax.block_until_ready(link2(x_s2))
    assert y_s2.shape == (2, 6, 32, 8, 8)
    assert jnp.allclose(y_s2, _ref_forward(link2, x_s2), atol=1e-3, rtol=1e-3)

    print("KERNEL_OK")
</pallas_src>

<mosaic_0001>
module attributes {stable_mosaic.version = 11 : i64} {
  func.func @_stem_kernel(%arg0: i32, %arg1: memref<2x3x3x256xf32, #tpu.memory_space<vmem>>, %arg2: memref<3x3x16x3xf32, #tpu.memory_space<vmem>>, %arg3: memref<9x1x256xf32, #tpu.memory_space<vmem>>, %arg4: memref<2x16x256xf32, #tpu.memory_space<vmem>>) attributes {dimension_semantics = [#tpu.dimension_semantics<parallel>], iteration_bounds = array<i64: 2>, scalar_prefetch = 0 : i64, scratch_operands = 0 : i64, tpu.core_type = #tpu.core_type<tc>, window_params = [{transform_indices = @transform_0, window_bounds = array<i64: 2, 3, 3, 256>}, {pipeline_mode = #tpu.pipeline_mode<synchronous>, transform_indices = @transform_1, window_bounds = array<i64: 3, 3, 16, 3>}, {pipeline_mode = #tpu.pipeline_mode<synchronous>, transform_indices = @transform_2, window_bounds = array<i64: 9, 1, 256>}, {transform_indices = @transform_3, window_bounds = array<i64: 2, 16, 256>}]} {
    %c0 = arith.constant 0 : index
    %c0_0 = arith.constant 0 : index
    %c0_1 = arith.constant 0 : index
    %c0_2 = arith.constant 0 : index
    %0 = vector.load %arg2[%c0, %c0_0, %c0_1, %c0_2] : memref<3x3x16x3xf32, #tpu.memory_space<vmem>>, vector<3x3x16x3xf32>
    %c0_3 = arith.constant 0 : index
    %c0_4 = arith.constant 0 : index
    %c0_5 = arith.constant 0 : index
    %1 = vector.load %arg3[%c0_3, %c0_4, %c0_5] : memref<9x1x256xf32, #tpu.memory_space<vmem>>, vector<9x1x256xf32>
    %c0_6 = arith.constant 0 : index
    %c0_7 = arith.constant 0 : index
    %c0_8 = arith.constant 0 : index
    %c0_9 = arith.constant 0 : index
    %2 = vector.load %arg1[%c0_6, %c0_7, %c0_8, %c0_9] : memref<2x3x3x256xf32, #tpu.memory_space<vmem>>, vector<1x1x3x256xf32>
    %3 = vector.shape_cast %2 : vector<1x1x3x256xf32> to vector<3x256xf32>
    %4 = vector.extract_strided_slice %0 {offsets = [1, 1, 0, 0], sizes = [1, 1, 16, 3], strides = [1, 1, 1, 1]} : vector<3x3x16x3xf32> to vector<1x1x16x3xf32>
    %5 = vector.shape_cast %4 : vector<1x1x16x3xf32> to vector<16x3xf32>
    %cst = arith.constant dense<0.000000e+00> : vector<16x256xf32>
    %6 = tpu.matmul %5, %3, %cst {dimension_numbers = #tpu.dot_dimension_numbers<[1], [0], [0], [1], [0, 0, 1, 1], [], []>} : vector<16x3xf32>, vector<3x256xf32>, vector<16x256xf32> -> vector<16x256xf32>
    %c17_i32 = arith.constant 17 : i32
    %7 = tpu.dynamic_rotate %3 by %c17_i32 dim 1 : vector<3x256xf32>, i32 -> vector<3x256xf32>
    %8 = vector.extract_strided_slice %1 {offsets = [0, 0, 0], sizes = [1, 1, 256], strides = [1, 1, 1]} : vector<9x1x256xf32> to vector<1x1x256xf32>
    %9 = vector.shape_cast %8 : vector<1x1x256xf32> to vector<1x256xf32>
    %10 = vector.broadcast %9 : vector<1x256xf32> to vector<3x256xf32>
    %11 = arith.mulf %7, %10 : vector<3x256xf32>
    %12 = vector.extract_strided_slice %0 {offsets = [0, 0, 0, 0], sizes = [1, 1, 16, 3], strides = [1, 1, 1, 1]} : vector<3x3x16x3xf32> to vector<1x1x16x3xf32>
    %13 = vector.shape_cast %12 : vector<1x1x16x3xf32> to vector<16x3xf32>
    %cst_10 = arith.constant dense<0.000000e+00> : vector<16x256xf32>
    %14 = tpu.matmul %13, %11, %cst_10 {dimension_numbers = #tpu.dot_dimension_numbers<[1], [0], [0], [1], [0, 0, 1, 1], [], []>} : vector<16x3xf32>, vector<3x256xf32>, vector<16x256xf32> -> vector<16x256xf32>
    %15 = arith.addf %6, %14 : vector<16x256xf32>
    %c16_i32 = arith.constant 16 : i32
    %16 = tpu.dynamic_rotate %3 by %c16_i32 dim 1 : vector<3x256xf32>, i32 -> vector<3x256xf32>
    %17 = vector.extract_strided_slice %1 {offsets = [1, 0, 0], sizes = [1, 1, 256], strides = [1, 1, 1]} : vector<9x1x256xf32> to vector<1x1x256xf32>
    %18 = vector.shape_cast %17 : vector<1x1x256xf32> to vector<1x256xf32>
    %19 = vector.broadcast %18 : vector<1x256xf32> to vector<3x256xf32>
    %20 = arith.mulf %16, %19 : vector<3x256xf32>
    %21 = vector.extract_strided_slice %0 {offsets = [0, 1, 0, 0], sizes = [1, 1, 16, 3], strides = [1, 1, 1, 1]} : vector<3x3x16x3xf32> to vector<1x1x16x3xf32>
    %22 = vector.shape_cast %21 : vector<1x1x16x3xf32> to vector<16x3xf32>
    %cst_11 = arith.constant dense<0.000000e+00> : vector<16x256xf32>
    %23 = tpu.matmul %22, %20, %cst_11 {dimension_numbers = #tpu.dot_dimension_numbers<[1], [0], [0], [1], [0, 0, 1, 1], [], []>} : vector<16x3xf32>, vector<3x256xf32>, vector<16x256xf32> -> vector<16x256xf32>
    %24 = arith.addf %15, %23 : vector<16x256xf32>
    %c15_i32 = arith.constant 15 : i32
    %25 = tpu.dynamic_rotate %3 by %c15_i32 dim 1 : vector<3x256xf32>, i32 -> vector<3x256xf32>
    %26 = vector.extract_strided_slice %1 {offsets = [2, 0, 0], sizes = [1, 1, 256], strides = [1, 1, 1]} : vector<9x1x256xf32> to vector<1x1x256xf32>
    %27 = vector.shape_cast %26 : vector<1x1x256xf32> to vector<1x256xf32>
    %28 = vector.broadcast %27 : vector<1x256xf32> to vector<3x256xf32>
    %29 = arith.mulf %25, %28 : vector<3x256xf32>
    %30 = vector.extract_strided_slice %0 {offsets = [0, 2, 0, 0], sizes = [1, 1, 16, 3], strides = [1, 1, 1, 1]} : vector<3x3x16x3xf32> to vector<1x1x16x3xf32>
    %31 = vector.shape_cast %30 : vector<1x1x16x3xf32> to vector<16x3xf32>
    %cst_12 = arith.constant dense<0.000000e+00> : vector<16x256xf32>
    %32 = tpu.matmul %31, %29, %cst_12 {dimension_numbers = #tpu.dot_dimension_numbers<[1], [0], [0], [1], [0, 0, 1, 1], [], []>} : vector<16x3xf32>, vector<3x256xf32>, vector<16x256xf32> -> vector<16x256xf32>
    %33 = arith.addf %24, %32 : vector<16x256xf32>
    %c1_i32 = arith.constant 1 : i32
    %34 = tpu.dynamic_rotate %3 by %c1_i32 dim 1 : vector<3x256xf32>, i32 -> vector<3x256xf32>
    %35 = vector.extract_strided_slice %1 {offsets = [3, 0, 0], sizes = [1, 1, 256], strides = [1, 1, 1]} : vector<9x1x256xf32> to vector<1x1x256xf32>
    %36 = vector.shape_cast %35 : vector<1x1x256xf32> to vector<1x256xf32>
    %37 = vector.broadcast %36 : vector<1x256xf32> to vector<3x256xf32>
    %38 = arith.mulf %34, %37 : vector<3x256xf32>
    %39 = vector.extract_strided_slice %0 {offsets = [1, 0, 0, 0], sizes = [1, 1, 16, 3], strides = [1, 1, 1, 1]} : vector<3x3x16x3xf32> to vector<1x1x16x3xf32>
    %40 = vector.shape_cast %39 : vector<1x1x16x3xf32> to vector<16x3xf32>
    %cst_13 = arith.constant dense<0.000000e+00> : vector<16x256xf32>
    %41 = tpu.matmul %40, %38, %cst_13 {dimension_numbers = #tpu.dot_dimension_numbers<[1], [0], [0], [1], [0, 0, 1, 1], [], []>} : vector<16x3xf32>, vector<3x256xf32>, vector<16x256xf32> -> vector<16x256xf32>
    %42 = arith.addf %33, %41 : vector<16x256xf32>
    %c255_i32 = arith.constant 255 : i32
    %43 = tpu.dynamic_rotate %3 by %c255_i32 dim 1 : vector<3x256xf32>, i32 -> vector<3x256xf32>
    %44 = vector.extract_strided_slice %1 {offsets = [5, 0, 0], sizes = [1, 1, 256], strides = [1, 1, 1]} : vector<9x1x256xf32> to vector<1x1x256xf32>
    %45 = vector.shape_cast %44 : vector<1x1x256xf32> to vector<1x256xf32>
    %46 = vector.broadcast %45 : vector<1x256xf32> to vector<3x256xf32>
    %47 = arith.mulf %43, %46 : vector<3x256xf32>
    %48 = vector.extract_strided_slice %0 {offsets = [1, 2, 0, 0], sizes = [1, 1, 16, 3], strides = [1, 1, 1, 1]} : vector<3x3x16x3xf32> to vector<1x1x16x3xf32>
    %49 = vector.shape_cast %48 : vector<1x1x16x3xf32> to vector<16x3xf32>
    %cst_14 = arith.constant dense<0.000000e+00> : vector<16x256xf32>
    %50 = tpu.matmul %49, %47, %cst_14 {dimension_numbers = #tpu.dot_dimension_numbers<[1], [0], [0], [1], [0, 0, 1, 1], [], []>} : vector<16x3xf32>, vector<3x256xf32>, vector<16x256xf32> -> vector<16x256xf32>
    %51 = arith.addf %42, %50 : vector<16x256xf32>
    %c241_i32 = arith.constant 241 : i32
    %52 = tpu.dynamic_rotate %3 by %c241_i32 dim 1 : vector<3x256xf32>, i32 -> vector<3x256xf32>
    %53 = vector.extract_strided_slice %1 {offsets = [6, 0, 0], sizes = [1, 1, 256], strides = [1, 1, 1]} : vector<9x1x256xf32> to vector<1x1x256xf32>
    %54 = vector.shape_cast %53 : vector<1x1x256xf32> to vector<1x256xf32>
    %55 = vector.broadcast %54 : vector<1x256xf32> to vector<3x256xf32>
    %56 = arith.mulf %52, %55 : vector<3x256xf32>
    %57 = vector.extract_strided_slice %0 {offsets = [2, 0, 0, 0], sizes = [1, 1, 16, 3], strides = [1, 1, 1, 1]} : vector<3x3x16x3xf32> to vector<1x1x16x3xf32>
    %58 = vector.shape_cast %57 : vector<1x1x16x3xf32> to vector<16x3xf32>
    %cst_15 = arith.constant dense<0.000000e+00> : vector<16x256xf32>
    %59 = tpu.matmul %58, %56, %cst_15 {dimension_numbers = #tpu.dot_dimension_numbers<[1], [0], [0], [1], [0, 0, 1, 1], [], []>} : vector<16x3xf32>, vector<3x256xf32>, vector<16x256xf32> -> vector<16x256xf32>
    %60 = arith.addf %51, %59 : vector<16x256xf32>
    %c240_i32 = arith.constant 240 : i32
    %61 = tpu.dynamic_rotate %3 by %c240_i32 dim 1 : vector<3x256xf32>, i32 -> vector<3x256xf32>
    %62 = vector.extract_strided_slice %1 {offsets = [7, 0, 0], sizes = [1, 1, 256], strides = [1, 1, 1]} : vector<9x1x256xf32> to vector<1x1x256xf32>
    %63 = vector.shape_cast %62 : vector<1x1x256xf32> to vector<1x256xf32>
    %64 = vector.broadcast %63 : vector<1x256xf32> to vector<3x256xf32>
    %65 = arith.mulf %61, %64 : vector<3x256xf32>
    %66 = vector.extract_strided_slice %0 {offsets = [2, 1, 0, 0], sizes = [1, 1, 16, 3], strides = [1, 1, 1, 1]} : vector<3x3x16x3xf32> to vector<1x1x16x3xf32>
    %67 = vector.shape_cast %66 : vector<1x1x16x3xf32> to vector<16x3xf32>
    %cst_16 = arith.constant dense<0.000000e+00> : vector<16x256xf32>
    %68 = tpu.matmul %67, %65, %cst_16 {dimension_numbers = #tpu.dot_dimension_numbers<[1], [0], [0], [1], [0, 0, 1, 1], [], []>} : vector<16x3xf32>, vector<3x256xf32>, vector<16x256xf32> -> vector<16x256xf32>
    %69 = arith.addf %60, %68 : vector<16x256xf32>
    %c239_i32 = arith.constant 239 : i32
    %70 = tpu.dynamic_rotate %3 by %c239_i32 dim 1 : vector<3x256xf32>, i32 -> vector<3x256xf32>
    %71 = vector.extract_strided_slice %1 {offsets = [8, 0, 0], sizes = [1, 1, 256], strides = [1, 1, 1]} : vector<9x1x256xf32> to vector<1x1x256xf32>
    %72 = vector.shape_cast %71 : vector<1x1x256xf32> to vector<1x256xf32>
    %73 = vector.broadcast %72 : vector<1x256xf32> to vector<3x256xf32>
    %74 = arith.mulf %70, %73 : vector<3x256xf32>
    %75 = vector.extract_strided_slice %0 {offsets = [2, 2, 0, 0], sizes = [1, 1, 16, 3], strides = [1, 1, 1, 1]} : vector<3x3x16x3xf32> to vector<1x1x16x3xf32>
    %76 = vector.shape_cast %75 : vector<1x1x16x3xf32> to vector<16x3xf32>
    %cst_17 = arith.constant dense<0.000000e+00> : vector<16x256xf32>
    %77 = tpu.matmul %76, %74, %cst_17 {dimension_numbers = #tpu.dot_dimension_numbers<[1], [0], [0], [1], [0, 0, 1, 1], [], []>} : vector<16x3xf32>, vector<3x256xf32>, vector<16x256xf32> -> vector<16x256xf32>
    %78 = arith.addf %69, %77 : vector<16x256xf32>
    %cst_18 = arith.constant 0.000000e+00 : f32
    %79 = vector.broadcast %cst_18 : f32 to vector<16x256xf32>
    %80 = arith.cmpf oge, %78, %79 : vector<16x256xf32>
    %cst_19 = arith.constant 0.00999999977 : f32
    %81 = vector.broadcast %cst_19 : f32 to vector<16x256xf32>
    %82 = arith.mulf %81, %78 : vector<16x256xf32>
    %83 = arith.select %80, %78, %82 : vector<16x256xi1>, vector<16x256xf32>
    %c0_20 = arith.constant 0 : index
    %c1 = arith.constant 1 : index
    %c0_21 = arith.constant 0 : index
    %c0_22 = arith.constant 0 : index
    %84 = vector.load %arg1[%c0_20, %c1, %c0_21, %c0_22] : memref<2x3x3x256xf32, #tpu.memory_space<vmem>>, vector<1x1x3x256xf32>
    %85 = vector.shape_cast %84 : vector<1x1x3x256xf32> to vector<3x256xf32>
    %86 = vector.extract_strided_slice %0 {offsets = [1, 1, 0, 0], sizes = [1, 1, 16, 3], strides = [1, 1, 1, 1]} : vector<3x3x16x3xf32> to vector<1x1x16x3xf32>
    %87 = vector.shape_cast %86 : vector<1x1x16x3xf32> to vector<16x3xf32>
    %cst_23 = arith.constant dense<0.000000e+00> : vector<16x256xf32>
    %88 = tpu.matmul %87, %85, %cst_23 {dimension_numbers = #tpu.dot_dimension_numbers<[1], [0], [0], [1], [0, 0, 1, 1], [], []>} : vector<16x3xf32>, vector<3x256xf32>, vector<16x256xf32> -> vector<16x256xf32>
    %c17_i32_24 = arith.constant 17 : i32
    %89 = tpu.dynamic_rotate %85 by %c17_i32_24 dim 1 : vector<3x256xf32>, i32 -> vector<3x256xf32>
    %90 = vector.extract_strided_slice %1 {offsets = [0, 0, 0], sizes = [1, 1, 256], strides = [1, 1, 1]} : vector<9x1x256xf32> to vector<1x1x256xf32>
    %91 = vector.shape_cast %90 : vector<1x1x256xf32> to vector<1x256xf32>
    %92 = vector.broadcast %91 : vector<1x256xf32> to vector<3x256xf32>
    %93 = arith.mulf %89, %92 : vector<3x256xf32>
    %94 = vector.extract_strided_slice %0 {offsets = [0, 0, 0, 0], sizes = [1, 1, 16, 3], strides = [1, 1, 1, 1]} : vector<3x3x16x3xf32> to vector<1x1x16x3xf32>
    %95 = vector.shape_cast %94 : vector<1x1x16x3xf32> to vector<16x3xf32>
    %cst_25 = arith.constant dense<0.000000e+00> : vector<16x256xf32>
    %96 = tpu.matmul %95, %93, %cst_25 {dimension_numbers = #tpu.dot_dimension_numbers<[1], [0], [0], [1], [0, 0, 1, 1], [], []>} : vector<16x3xf32>, vector<3x256xf32>, vector<16x256xf32> -> vector<16x256xf32>
    %97 = arith.addf %88, %96 : vector<16x256xf32>
    %c16_i32_26 = arith.constant 16 : i32
    %98 = tpu.dynamic_rotate %85 by %c16_i32_26 dim 1 : vector<3x256xf32>, i32 -> vector<3x256xf32>
    %99 = vector.extract_strided_slice %1 {offsets = [1, 0, 0], sizes = [1, 1, 256], strides = [1, 1, 1]} : vector<9x1x256xf32> to vector<1x1x256xf32>
    %100 = vector.shape_cast %99 : vector<1x1x256xf32> to vector<1x256xf32>
    %101 = vector.broadcast %100 : vector<1x256xf32> to vector<3x256xf32>
    %102 = arith.mulf %98, %101 : vector<3x256xf32>
    %103 = vector.extract_strided_slice %0 {offsets = [0, 1, 0, 0], sizes = [1, 1, 16, 3], strides = [1, 1, 1, 1]} : vector<3x3x16x3xf32> to vector<1x1x16x3xf32>
    %104 = vector.shape_cast %103 : vector<1x1x16x3xf32> to vector<16x3xf32>
    %cst_27 = arith.constant dense<0.000000e+00> : vector<16x256xf32>
    %105 = tpu.matmul %104, %102, %cst_27 {dimension_numbers = #tpu.dot_dimension_numbers<[1], [0], [0], [1], [0, 0, 1, 1], [], []>} : vector<16x3xf32>, vector<3x256xf32>, vector<16x256xf32> -> vector<16x256xf32>
    %106 = arith.addf %97, %105 : vector<16x256xf32>
    %c15_i32_28 = arith.constant 15 : i32
    %107 = tpu.dynamic_rotate %85 by %c15_i32_28 dim 1 : vector<3x256xf32>, i32 -> vector<3x256xf32>
    %108 = vector.extract_strided_slice %1 {offsets = [2, 0, 0], sizes = [1, 1, 256], strides = [1, 1, 1]} : vector<9x1x256xf32> to vector<1x1x256xf32>
    %109 = vector.shape_cast %108 : vector<1x1x256xf32> to vector<1x256xf32>
    %110 = vector.broadcast %109 : vector<1x256xf32> to vector<3x256xf32>
    %111 = arith.mulf %107, %110 : vector<3x256xf32>
    %112 = vector.extract_strided_slice %0 {offsets = [0, 2, 0, 0], sizes = [1, 1, 16, 3], strides = [1, 1, 1, 1]} : vector<3x3x16x3xf32> to vector<1x1x16x3xf32>
    %113 = vector.shape_cast %112 : vector<1x1x16x3xf32> to vector<16x3xf32>
    %cst_29 = arith.constant dense<0.000000e+00> : vector<16x256xf32>
    %114 = tpu.matmul %113, %111, %cst_29 {dimension_numbers = #tpu.dot_dimension_numbers<[1], [0], [0], [1], [0, 0, 1, 1], [], []>} : vector<16x3xf32>, vector<3x256xf32>, vector<16x256xf32> -> vector<16x256xf32>
    %115 = arith.addf %106, %114 : vector<16x256xf32>
    %c1_i32_30 = arith.constant 1 : i32
    %116 = tpu.dynamic_rotate %85 by %c1_i32_30 dim 1 : vector<3x256xf32>, i32 -> vector<3x256xf32>
    %117 = vector.extract_strided_slice %1 {offsets = [3, 0, 0], sizes = [1, 1, 256], strides = [1, 1, 1]} : vector<9x1x256xf32> to vector<1x1x256xf32>
    %118 = vector.shape_cast %117 : vector<1x1x256xf32> to vector<1x256xf32>
    %119 = vector.broadcast %118 : vector<1x256xf32> to vector<3x256xf32>
    %120 = arith.mulf %116, %119 : vector<3x256xf32>
    %121 = vector.extract_strided_slice %0 {offsets = [1, 0, 0, 0], sizes = [1, 1, 16, 3], strides = [1, 1, 1, 1]} : vector<3x3x16x3xf32> to vector<1x1x16x3xf32>
    %122 = vector.shape_cast %121 : vector<1x1x16x3xf32> to vector<16x3xf32>
    %cst_31 = arith.constant dense<0.000000e+00> : vector<16x256xf32>
    %123 = tpu.matmul %122, %120, %cst_31 {dimension_numbers = #tpu.dot_dimension_numbers<[1], [0], [0], [1], [0, 0, 1, 1], [], []>} : vector<16x3xf32>, vector<3x256xf32>, vector<16x256xf32> -> vector<16x256xf32>
    %124 = arith.addf %115, %123 : vector<16x256xf32>
    %c255_i32_32 = arith.constant 255 : i32
    %125 = tpu.dynamic_rotate %85 by %c255_i32_32 dim 1 : vector<3x256xf32>, i32 -> vector<3x256xf32>
    %126 = vector.extract_strided_slice %1 {offsets = [5, 0, 0], sizes = [1, 1, 256], strides = [1, 1, 1]} : vector<9x1x256xf32> to vector<1x1x256xf32>
    %127 = vector.shape_cast %126 : vector<1x1x256xf32> to vector<1x256xf32>
    %128 = vector.broadcast %127 : vector<1x256xf32> to vector<3x256xf32>
    %129 = arith.mulf %125, %128 : vector<3x256xf32>
    %130 = vector.extract_strided_slice %0 {offsets = [1, 2, 0, 0], sizes = [1, 1, 16, 3], strides = [1, 1, 1, 1]} : vector<3x3x16x3xf32> to vector<1x1x16x3xf32>
    %131 = vector.shape_cast %130 : vector<1x1x16x3xf32> to vector<16x3xf32>
    %cst_33 = arith.constant dense<0.000000e+00> : vector<16x256xf32>
    %132 = tpu.matmul %131, %129, %cst_33 {dimension_numbers = #tpu.dot_dimension_numbers<[1], [0], [0], [1], [0, 0, 1, 1], [], []>} : vector<16x3xf32>, vector<3x256xf32>, vector<16x256xf32> -> vector<16x256xf32>
    %133 = arith.addf %124, %132 : vector<16x256xf32>
    %c241_i32_34 = arith.constant 241 : i32
    %134 = tpu.dynamic_rotate %85 by %c241_i32_34 dim 1 : vector<3x256xf32>, i32 -> vector<3x256xf32>
    %135 = vector.extract_strided_slice %1 {offsets = [6, 0, 0], sizes = [1, 1, 256], strides = [1, 1, 1]} : vector<9x1x256xf32> to vector<1x1x256xf32>
    %136 = vector.shape_cast %135 : vector<1x1x256xf32> to vector<1x256xf32>
    %137 = vector.broadcast %136 : vector<1x256xf32> to vector<3x256xf32>
    %138 = arith.mulf %134, %137 : vector<3x256xf32>
    %139 = vector.extract_strided_slice %0 {offsets = [2, 0, 0, 0], sizes = [1, 1, 16, 3], strides = [1, 1, 1, 1]} : vector<3x3x16x3xf32> to vector<1x1x16x3xf32>
    %140 = vector.shape_cast %139 : vector<1x1x16x3xf32> to vector<16x3xf32>
    %cst_35 = arith.constant dense<0.000000e+00> : vector<16x256xf32>
    %141 = tpu.matmul %140, %138, %cst_35 {dimension_numbers = #tpu.dot_dimension_numbers<[1], [0], [0], [1], [0, 0, 1, 1], [], []>} : vector<16x3xf32>, vector<3x256xf32>, vector<16x256xf32> -> vector<16x256xf32>
    %142 = arith.addf %133, %141 : vector<16x256xf32>
    %c240_i32_36 = arith.constant 240 : i32
    %143 = tpu.dynamic_rotate %85 by %c240_i32_36 dim 1 : vector<3x256xf32>, i32 -> vector<3x256xf32>
    %144 = vector.extract_strided_slice %1 {offsets = [7, 0, 0], sizes = [1, 1, 256], strides = [1, 1, 1]} : vector<9x1x256xf32> to vector<1x1x256xf32>
    %145 = vector.shape_cast %144 : vector<1x1x256xf32> to vector<1x256xf32>
    %146 = vector.broadcast %145 : vector<1x256xf32> to vector<3x256xf32>
    %147 = arith.mulf %143, %146 : vector<3x256xf32>
    %148 = vector.extract_strided_slice %0 {offsets = [2, 1, 0, 0], sizes = [1, 1, 16, 3], strides = [1, 1, 1, 1]} : vector<3x3x16x3xf32> to vector<1x1x16x3xf32>
    %149 = vector.shape_cast %148 : vector<1x1x16x3xf32> to vector<16x3xf32>
    %cst_37 = arith.constant dense<0.000000e+00> : vector<16x256xf32>
    %150 = tpu.matmul %149, %147, %cst_37 {dimension_numbers = #tpu.dot_dimension_numbers<[1], [0], [0], [1], [0, 0, 1, 1], [], []>} : vector<16x3xf32>, vector<3x256xf32>, vector<16x256xf32> -> vector<16x256xf32>
    %151 = arith.addf %142, %150 : vector<16x256xf32>
    %c239_i32_38 = arith.constant 239 : i32
    %152 = tpu.dynamic_rotate %85 by %c239_i32_38 dim 1 : vector<3x256xf32>, i32 -> vector<3x256xf32>
    %153 = vector.extract_strided_slice %1 {offsets = [8, 0, 0], sizes = [1, 1, 256], strides = [1, 1, 1]} : vector<9x1x256xf32> to vector<1x1x256xf32>
    %154 = vector.shape_cast %153 : vector<1x1x256xf32> to vector<1x256xf32>
    %155 = vector.broadcast %154 : vector<1x256xf32> to vector<3x256xf32>
    %156 = arith.mulf %152, %155 : vector<3x256xf32>
    %157 = vector.extract_strided_slice %0 {offsets = [2, 2, 0, 0], sizes = [1, 1, 16, 3], strides = [1, 1, 1, 1]} : vector<3x3x16x3xf32> to vector<1x1x16x3xf32>
    %158 = vector.shape_cast %157 : vector<1x1x16x3xf32> to vector<16x3xf32>
    %cst_39 = arith.constant dense<0.000000e+00> : vector<16x256xf32>
    %159 = tpu.matmul %158, %156, %cst_39 {dimension_numbers = #tpu.dot_dimension_numbers<[1], [0], [0], [1], [0, 0, 1, 1], [], []>} : vector<16x3xf32>, vector<3x256xf32>, vector<16x256xf32> -> vector<16x256xf32>
    %160 = arith.addf %151, %159 : vector<16x256xf32>
    %cst_40 = arith.constant 0.000000e+00 : f32
    %161 = vector.broadcast %cst_40 : f32 to vector<16x256xf32>
    %162 = arith.cmpf oge, %160, %161 : vector<16x256xf32>
    %cst_41 = arith.constant 0.00999999977 : f32
    %163 = vector.broadcast %cst_41 : f32 to vector<16x256xf32>
    %164 = arith.mulf %163, %160 : vector<16x256xf32>
    %165 = arith.select %162, %160, %164 : vector<16x256xi1>, vector<16x256xf32>
    %166 = arith.maximumf %83, %165 : vector<16x256xf32>
    %c0_42 = arith.constant 0 : index
    %c2 = arith.constant 2 : index
    %c0_43 = arith.constant 0 : index
    %c0_44 = arith.constant 0 : index
    %167 = vector.load %arg1[%c0_42, %c2, %c0_43, %c0_44] : memref<2x3x3x256xf32, #tpu.memory_space<vmem>>, vector<1x1x3x256xf32>
    %168 = vector.shape_cast %167 : vector<1x1x3x256xf32> to vector<3x256xf32>
    %169 = vector.extract_strided_slice %0 {offsets = [1, 1, 0, 0], sizes = [1, 1, 16, 3], strides = [1, 1, 1, 1]} : vector<3x3x16x3xf32> to vector<1x1x16x3xf32>
    %170 = vector.shape_cast %169 : vector<1x1x16x3xf32> to vector<16x3xf32>
    %cst_45 = arith.constant dense<0.000000e+00> : vector<16x256xf32>
    %171 = tpu.matmul %170, %168, %cst_45 {dimension_numbers = #tpu.dot_dimension_numbers<[1], [0], [0], [1], [0, 0, 1, 1], [], []>} : vector<16x3xf32>, vector<3x256xf32>, vector<16x256xf32> -> vector<16x256xf32>
    %c17_i32_46 = arith.constant 17 : i32
    %172 = tpu.dynamic_rotate %168 by %c17_i32_46 dim 1 : vector<3x256xf32>, i32 -> vector<3x256xf32>
    %173 = vector.extract_strided_slice %1 {offsets = [0, 0, 0], sizes = [1, 1, 256], strides = [1, 1, 1]} : vector<9x1x256xf32> to vector<1x1x256xf32>
    %174 = vector.shape_cast %173 : vector<1x1x256xf32> to vector<1x256xf32>
    %175 = vector.broadcast %174 : vector<1x256xf32> to vector<3x256xf32>
    %176 = arith.mulf %172, %175 : vector<3x256xf32>
    %177 = vector.extract_strided_slice %0 {offsets = [0, 0, 0, 0], sizes = [1, 1, 16, 3], strides = [1, 1, 1, 1]} : vector<3x3x16x3xf32> to vector<1x1x16x3xf32>
    %178 = vector.shape_cast %177 : vector<1x1x16x3xf32> to vector<16x3xf32>
    %cst_47 = arith.constant dense<0.000000e+00> : vector<16x256xf32>
    %179 = tpu.matmul %178, %176, %cst_47 {dimension_numbers = #tpu.dot_dimension_numbers<[1], [0], [0], [1], [0, 0, 1, 1], [], []>} : vector<16x3xf32>, vector<3x256xf32>, vector<16x256xf32> -> vector<16x256xf32>
    %180 = arith.addf %171, %179 : vector<16x256xf32>
    %c16_i32_48 = arith.constant 16 : i32
    %181 = tpu.dynamic_rotate %168 by %c16_i32_48 dim 1 : vector<3x256xf32>, i32 -> vector<3x256xf32>
    %182 = vector.extract_strided_slice %1 {offsets = [1, 0, 0], sizes = [1, 1, 256], strides = [1, 1, 1]} : vector<9x1x256xf32> to vector<1x1x256xf32>
    %183 = vector.shape_cast %182 : vector<1x1x256xf32> to vector<1x256xf32>
    %184 = vector.broadcast %183 : vector<1x256xf32> to vector<3x256xf32>
    %185 = arith.mulf %181, %184 : vector<3x256xf32>
    %186 = vector.extract_strided_slice %0 {offsets = [0, 1, 0, 0], sizes = [1, 1, 16, 3], strides = [1, 1, 1, 1]} : vector<3x3x16x3xf32> to vector<1x1x16x3xf32>
    %187 = vector.shape_cast %186 : vector<1x1x16x3xf32> to vector<16x3xf32>
    %cst_49 = arith.constant dense<0.000000e+00> : vector<16x256xf32>
    %188 = tpu.matmul %187, %185, %cst_49 {dimension_numbers = #tpu.dot_dimension_numbers<[1], [0], [0], [1], [0, 0, 1, 1], [], []>} : vector<16x3xf32>, vector<3x256xf32>, vector<16x256xf32> -> vector<16x256xf32>
    %189 = arith.addf %180, %188 : vector<16x256xf32>
    %c15_i32_50 = arith.constant 15 : i32
    %190 = tpu.dynamic_rotate %168 by %c15_i32_50 dim 1 : vector<3x256xf32>, i32 -> vector<3x256xf32>
    %191 = vector.extract_strided_slice %1 {offsets = [2, 0, 0], sizes = [1, 1, 256], strides = [1, 1, 1]} : vector<9x1x256xf32> to vector<1x1x256xf32>
    %192 = vector.shape_cast %191 : vector<1x1x256xf32> to vector<1x256xf32>
    %193 = vector.broadcast %192 : vector<1x256xf32> to vector<3x256xf32>
    %194 = arith.mulf %190, %193 : vector<3x256xf32>
    %195 = vector.extract_strided_slice %0 {offsets = [0, 2, 0, 0], sizes = [1, 1, 16, 3], strides = [1, 1, 1, 1]} : vector<3x3x16x3xf32> to vector<1x1x16x3xf32>
    %196 = vector.shape_cast %195 : vector<1x1x16x3xf32> to vector<16x3xf32>
    %cst_51 = arith.constant dense<0.000000e+00> : vector<16x256xf32>
    %197 = tpu.matmul %196, %194, %cst_51 {dimension_numbers = #tpu.dot_dimension_numbers<[1], [0], [0], [1], [0, 0, 1, 1], [], []>} : vector<16x3xf32>, vector<3x256xf32>, vector<16x256xf32> -> vector<16x256xf32>
    %198 = arith.addf %189, %197 : vector<16x256xf32>
    %c1_i32_52 = arith.constant 1 : i32
    %199 = tpu.dynamic_rotate %168 by %c1_i32_52 dim 1 : vector<3x256xf32>, i32 -> vector<3x256xf32>
    %200 = vector.extract_strided_slice %1 {offsets = [3, 0, 0], sizes = [1, 1, 256], strides = [1, 1, 1]} : vector<9x1x256xf32> to vector<1x1x256xf32>
    %201 = vector.shape_cast %200 : vector<1x1x256xf32> to vector<1x256xf32>
    %202 = vector.broadcast %201 : vector<1x256xf32> to vector<3x256xf32>
    %203 = arith.mulf %199, %202 : vector<3x256xf32>
    %204 = vector.extract_strided_slice %0 {offsets = [1, 0, 0, 0], sizes = [1, 1, 16, 3], strides = [1, 1, 1, 1]} : vector<3x3x16x3xf32> to vector<1x1x16x3xf32>
    %205 = vector.shape_cast %204 : vector<1x1x16x3xf32> to vector<16x3xf32>
    %cst_53 = arith.constant dense<0.000000e+00> : vector<16x256xf32>
    %206 = tpu.matmul %205, %203, %cst_53 {dimension_numbers = #tpu.dot_dimension_numbers<[1], [0], [0], [1], [0, 0, 1, 1], [], []>} : vector<16x3xf32>, vector<3x256xf32>, vector<16x256xf32> -> vector<16x256xf32>
    %207 = arith.addf %198, %206 : vector<16x256xf32>
    %c255_i32_54 = arith.constant 255 : i32
    %208 = tpu.dynamic_rotate %168 by %c255_i32_54 dim 1 : vector<3x256xf32>, i32 -> vector<3x256xf32>
    %209 = vector.extract_strided_slice %1 {offsets = [5, 0, 0], sizes = [1, 1, 256], strides = [1, 1, 1]} : vector<9x1x256xf32> to vector<1x1x256xf32>
    %210 = vector.shape_cast %209 : vector<1x1x256xf32> to vector<1x256xf32>
    %211 = vector.broadcast %210 : vector<1x256xf32> to vector<3x256xf32>
    %212 = arith.mulf %208, %211 : vector<3x256xf32>
    %213 = vector.extract_strided_slice %0 {offsets = [1, 2, 0, 0], sizes = [1, 1, 16, 3], strides = [1, 1, 1, 1]} : vector<3x3x16x3xf32> to vector<1x1x16x3xf32>
    %214 = vector.shape_cast %213 : vector<1x1x16x3xf32> to vector<16x3xf32>
    %cst_55 = arith.constant dense<0.000000e+00> : vector<16x256xf32>
    %215 = tpu.matmul %214, %212, %cst_55 {dimension_numbers = #tpu.dot_dimension_numbers<[1], [0], [0], [1], [0, 0, 1, 1], [], []>} : vector<16x3xf32>, vector<3x256xf32>, vector<16x256xf32> -> vector<16x256xf32>
    %216 = arith.addf %207, %215 : vector<16x256xf32>
    %c241_i32_56 = arith.constant 241 : i32
    %217 = tpu.dynamic_rotate %168 by %c241_i32_56 dim 1 : vector<3x256xf32>, i32 -> vector<3x256xf32>
    %218 = vector.extract_strided_slice %1 {offsets = [6, 0, 0], sizes = [1, 1, 256], strides = [1, 1, 1]} : vector<9x1x256xf32> to vector<1x1x256xf32>
    %219 = vector.shape_cast %218 : vector<1x1x256xf32> to vector<1x256xf32>
    %220 = vector.broadcast %219 : vector<1x256xf32> to vector<3x256xf32>
    %221 = arith.mulf %217, %220 : vector<3x256xf32>
    %222 = vector.extract_strided_slice %0 {offsets = [2, 0, 0, 0], sizes = [1, 1, 16, 3], strides = [1, 1, 1, 1]} : vector<3x3x16x3xf32> to vector<1x1x16x3xf32>
    %223 = vector.shape_cast %222 : vector<1x1x16x3xf32> to vector<16x3xf32>
    %cst_57 = arith.constant dense<0.000000e+00> : vector<16x256xf32>
    %224 = tpu.matmul %223, %221, %cst_57 {dimension_numbers = #tpu.dot_dimension_numbers<[1], [0], [0], [1], [0, 0, 1, 1], [], []>} : vector<16x3xf32>, vector<3x256xf32>, vector<16x256xf32> -> vector<16x256xf32>
    %225 = arith.addf %216, %224 : vector<16x256xf32>
    %c240_i32_58 = arith.constant 240 : i32
    %226 = tpu.dynamic_rotate %168 by %c240_i32_58 dim 1 : vector<3x256xf32>, i32 -> vector<3x256xf32>
    %227 = vector.extract_strided_slice %1 {offsets = [7, 0, 0], sizes = [1, 1, 256], strides = [1, 1, 1]} : vector<9x1x256xf32> to vector<1x1x256xf32>
    %228 = vector.shape_cast %227 : vector<1x1x256xf32> to vector<1x256xf32>
    %229 = vector.broadcast %228 : vector<1x256xf32> to vector<3x256xf32>
    %230 = arith.mulf %226, %229 : vector<3x256xf32>
    %231 = vector.extract_strided_slice %0 {offsets = [2, 1, 0, 0], sizes = [1, 1, 16, 3], strides = [1, 1, 1, 1]} : vector<3x3x16x3xf32> to vector<1x1x16x3xf32>
    %232 = vector.shape_cast %231 : vector<1x1x16x3xf32> to vector<16x3xf32>
    %cst_59 = arith.constant dense<0.000000e+00> : vector<16x256xf32>
    %233 = tpu.matmul %232, %230, %cst_59 {dimension_numbers = #tpu.dot_dimension_numbers<[1], [0], [0], [1], [0, 0, 1, 1], [], []>} : vector<16x3xf32>, vector<3x256xf32>, vector<16x256xf32> -> vector<16x256xf32>
    %234 = arith.addf %225, %233 : vector<16x256xf32>
    %c239_i32_60 = arith.constant 239 : i32
    %235 = tpu.dynamic_rotate %168 by %c239_i32_60 dim 1 : vector<3x256xf32>, i32 -> vector<3x256xf32>
    %236 = vector.extract_strided_slice %1 {offsets = [8, 0, 0], sizes = [1, 1, 256], strides = [1, 1, 1]} : vector<9x1x256xf32> to vector<1x1x256xf32>
    %237 = vector.shape_cast %236 : vector<1x1x256xf32> to vector<1x256xf32>
    %238 = vector.broadcast %237 : vector<1x256xf32> to vector<3x256xf32>
    %239 = arith.mulf %235, %238 : vector<3x256xf32>
    %240 = vector.extract_strided_slice %0 {offsets = [2, 2, 0, 0], sizes = [1, 1, 16, 3], strides = [1, 1, 1, 1]} : vector<3x3x16x3xf32> to vector<1x1x16x3xf32>
    %241 = vector.shape_cast %240 : vector<1x1x16x3xf32> to vector<16x3xf32>
    %cst_61 = arith.constant dense<0.000000e+00> : vector<16x256xf32>
    %242 = tpu.matmul %241, %239, %cst_61 {dimension_numbers = #tpu.dot_dimension_numbers<[1], [0], [0], [1], [0, 0, 1, 1], [], []>} : vector<16x3xf32>, vector<3x256xf32>, vector<16x256xf32> -> vector<16x256xf32>
    %243 = arith.addf %234, %242 : vector<16x256xf32>
    %cst_62 = arith.constant 0.000000e+00 : f32
    %244 = vector.broadcast %cst_62 : f32 to vector<16x256xf32>
    %245 = arith.cmpf oge, %243, %244 : vector<16x256xf32>
    %cst_63 = arith.constant 0.00999999977 : f32
    %246 = vector.broadcast %cst_63 : f32 to vector<16x256xf32>
    %247 = arith.mulf %246, %243 : vector<16x256xf32>
    %248 = arith.select %245, %243, %247 : vector<16x256xi1>, vector<16x256xf32>
    %249 = arith.maximumf %166, %248 : vector<16x256xf32>
    %c0_64 = arith.constant 0 : index
    %c0_65 = arith.constant 0 : index
    %c0_66 = arith.constant 0 : index
    %250 = vector.load %arg4[%c0_64, %c0_65, %c0_66] : memref<2x16x256xf32, #tpu.memory_space<vmem>>, vector<1x16x256xf32>
    %251 = vector.shape_cast %250 : vector<1x16x256xf32> to vector<16x256xf32>
    %252 = vector.shape_cast %249 : vector<16x256xf32> to vector<1x16x256xf32>
    tpu.vector_store %arg4[%c0_64, %c0_65, %c0_66], %252 {strides = array<i32>} : memref<2x16x256xf32, #tpu.memory_space<vmem>>, vector<1x16x256xf32>,
    %c1_67 = arith.constant 1 : index
    %c0_68 = arith.constant 0 : index
    %c0_69 = arith.constant 0 : index
    %c0_70 = arith.constant 0 : index
    %253 = vector.load %arg1[%c1_67, %c0_68, %c0_69, %c0_70] : memref<2x3x3x256xf32, #tpu.memory_space<vmem>>, vector<1x1x3x256xf32>
    %254 = vector.shape_cast %253 : vector<1x1x3x256xf32> to vector<3x256xf32>
    %255 = vector.extract_strided_slice %0 {offsets = [1, 1, 0, 0], sizes = [1, 1, 16, 3], strides = [1, 1, 1, 1]} : vector<3x3x16x3xf32> to vector<1x1x16x3xf32>
    %256 = vector.shape_cast %255 : vector<1x1x16x3xf32> to vector<16x3xf32>
    %cst_71 = arith.constant dense<0.000000e+00> : vector<16x256xf32>
    %257 = tpu.matmul %256, %254, %cst_71 {dimension_numbers = #tpu.dot_dimension_numbers<[1], [0], [0], [1], [0, 0, 1, 1], [], []>} : vector<16x3xf32>, vector<3x256xf32>, vector<16x256xf32> -> vector<16x256xf32>
    %c17_i32_72 = arith.constant 17 : i32
    %258 = tpu.dynamic_rotate %254 by %c17_i32_72 dim 1 : vector<3x256xf32>, i32 -> vector<3x256xf32>
    %259 = vector.extract_strided_slice %1 {offsets = [0, 0, 0], sizes = [1, 1, 256], strides = [1, 1, 1]} : vector<9x1x256xf32> to vector<1x1x256xf32>
    %260 = vector.shape_cast %259 : vector<1x1x256xf32> to vector<1x256xf32>
    %261 = vector.broadcast %260 : vector<1x256xf32> to vector<3x256xf32>
    %262 = arith.mulf %258, %261 : vector<3x256xf32>
    %263 = vector.extract_strided_slice %0 {offsets = [0, 0, 0, 0], sizes = [1, 1, 16, 3], strides = [1, 1, 1, 1]} : vector<3x3x16x3xf32> to vector<1x1x16x3xf32>
    %264 = vector.shape_cast %263 : vector<1x1x16x3xf32> to vector<16x3xf32>
    %cst_73 = arith.constant dense<0.000000e+00> : vector<16x256xf32>
    %265 = tpu.matmul %264, %262, %cst_73 {dimension_numbers = #tpu.dot_dimension_numbers<[1], [0], [0], [1], [0, 0, 1, 1], [], []>} : vector<16x3xf32>, vector<3x256xf32>, vector<16x256xf32> -> vector<16x256xf32>
    %266 = arith.addf %257, %265 : vector<16x256xf32>
    %c16_i32_74 = arith.constant 16 : i32
    %267 = tpu.dynamic_rotate %254 by %c16_i32_74 dim 1 : vector<3x256xf32>, i32 -> vector<3x256xf32>
    %268 = vector.extract_strided_slice %1 {offsets = [1, 0, 0], sizes = [1, 1, 256], strides = [1, 1, 1]} : vector<9x1x256xf32> to vector<1x1x256xf32>
    %269 = vector.shape_cast %268 : vector<1x1x256xf32> to vector<1x256xf32>
    %270 = vector.broadcast %269 : vector<1x256xf32> to vector<3x256xf32>
    %271 = arith.mulf %267, %270 : vector<3x256xf32>
    %272 = vector.extract_strided_slice %0 {offsets = [0, 1, 0, 0], sizes = [1, 1, 16, 3], strides = [1, 1, 1, 1]} : vector<3x3x16x3xf32> to vector<1x1x16x3xf32>
    %273 = vector.shape_cast %272 : vector<1x1x16x3xf32> to vector<16x3xf32>
    %cst_75 = arith.constant dense<0.000000e+00> : vector<16x256xf32>
    %274 = tpu.matmul %273, %271, %cst_75 {dimension_numbers = #tpu.dot_dimension_numbers<[1], [0], [0], [1], [0, 0, 1, 1], [], []>} : vector<16x3xf32>, vector<3x256xf32>, vector<16x256xf32> -> vector<16x256xf32>
    %275 = arith.addf %266, %274 : vector<16x256xf32>
    %c15_i32_76 = arith.constant 15 : i32
    %276 = tpu.dynamic_rotate %254 by %c15_i32_76 dim 1 : vector<3x256xf32>, i32 -> vector<3x256xf32>
    %277 = vector.extract_strided_slice %1 {offsets = [2, 0, 0], sizes = [1, 1, 256], strides = [1, 1, 1]} : vector<9x1x256xf32> to vector<1x1x256xf32>
    %278 = vector.shape_cast %277 : vector<1x1x256xf32> to vector<1x256xf32>
    %279 = vector.broadcast %278 : vector<1x256xf32> to vector<3x256xf32>
    %280 = arith.mulf %276, %279 : vector<3x256xf32>
    %281 = vector.extract_strided_slice %0 {offsets = [0, 2, 0, 0], sizes = [1, 1, 16, 3], strides = [1, 1, 1, 1]} : vector<3x3x16x3xf32> to vector<1x1x16x3xf32>
    %282 = vector.shape_cast %281 : vector<1x1x16x3xf32> to vector<16x3xf32>
    %cst_77 = arith.constant dense<0.000000e+00> : vector<16x256xf32>
    %283 = tpu.matmul %282, %280, %cst_77 {dimension_numbers = #tpu.dot_dimension_numbers<[1], [0], [0], [1], [0, 0, 1, 1], [], []>} : vector<16x3xf32>, vector<3x256xf32>, vector<16x256xf32> -> vector<16x256xf32>
    %284 = arith.addf %275, %283 : vector<16x256xf32>
    %c1_i32_78 = arith.constant 1 : i32
    %285 = tpu.dynamic_rotate %254 by %c1_i32_78 dim 1 : vector<3x256xf32>, i32 -> vector<3x256xf32>
    %286 = vector.extract_strided_slice %1 {offsets = [3, 0, 0], sizes = [1, 1, 256], strides = [1, 1, 1]} : vector<9x1x256xf32> to vector<1x1x256xf32>
    %287 = vector.shape_cast %286 : vector<1x1x256xf32> to vector<1x256xf32>
    %288 = vector.broadcast %287 : vector<1x256xf32> to vector<3x256xf32>
    %289 = arith.mulf %285, %288 : vector<3x256xf32>
    %290 = vector.extract_strided_slice %0 {offsets = [1, 0, 0, 0], sizes = [1, 1, 16, 3], strides = [1, 1, 1, 1]} : vector<3x3x16x3xf32> to vector<1x1x16x3xf32>
    %291 = vector.shape_cast %290 : vector<1x1x16x3xf32> to vector<16x3xf32>
    %cst_79 = arith.constant dense<0.000000e+00> : vector<16x256xf32>
    %292 = tpu.matmul %291, %289, %cst_79 {dimension_numbers = #tpu.dot_dimension_numbers<[1], [0], [0], [1], [0, 0, 1, 1], [], []>} : vector<16x3xf32>, vector<3x256xf32>, vector<16x256xf32> -> vector<16x256xf32>
    %293 = arith.addf %284, %292 : vector<16x256xf32>
    %c255_i32_80 = arith.constant 255 : i32
    %294 = tpu.dynamic_rotate %254 by %c255_i32_80 dim 1 : vector<3x256xf32>, i32 -> vector<3x256xf32>
    %295 = vector.extract_strided_slice %1 {offsets = [5, 0, 0], sizes = [1, 1, 256], strides = [1, 1, 1]} : vector<9x1x256xf32> to vector<1x1x256xf32>
    %296 = vector.shape_cast %295 : vector<1x1x256xf32> to vector<1x256xf32>
    %297 = vector.broadcast %296 : vector<1x256xf32> to vector<3x256xf32>
    %298 = arith.mulf %294, %297 : vector<3x256xf32>
    %299 = vector.extract_strided_slice %0 {offsets = [1, 2, 0, 0], sizes = [1, 1, 16, 3], strides = [1, 1, 1, 1]} : vector<3x3x16x3xf32> to vector<1x1x16x3xf32>
    %300 = vector.shape_cast %299 : vector<1x1x16x3xf32> to vector<16x3xf32>
    %cst_81 = arith.constant dense<0.000000e+00> : vector<16x256xf32>
    %301 = tpu.matmul %300, %298, %cst_81 {dimension_numbers = #tpu.dot_dimension_numbers<[1], [0], [0], [1], [0, 0, 1, 1], [], []>} : vector<16x3xf32>, vector<3x256xf32>, vector<16x256xf32> -> vector<16x256xf32>
    %302 = arith.addf %293, %301 : vector<16x256xf32>
    %c241_i32_82 = arith.constant 241 : i32
    %303 = tpu.dynamic_rotate %254 by %c241_i32_82 dim 1 : vector<3x256xf32>, i32 -> vector<3x256xf32>
    %304 = vector.extract_strided_slice %1 {offsets = [6, 0, 0], sizes = [1, 1, 256], strides = [1, 1, 1]} : vector<9x1x256xf32> to vector<1x1x256xf32>
    %305 = vector.shape_cast %304 : vector<1x1x256xf32> to vector<1x256xf32>
    %306 = vector.broadcast %305 : vector<1x256xf32> to vector<3x256xf32>
    %307 = arith.mulf %303, %306 : vector<3x256xf32>
    %308 = vector.extract_strided_slice %0 {offsets = [2, 0, 0, 0], sizes = [1, 1, 16, 3], strides = [1, 1, 1, 1]} : vector<3x3x16x3xf32> to vector<1x1x16x3xf32>
    %309 = vector.shape_cast %308 : vector<1x1x16x3xf32> to vector<16x3xf32>
    %cst_83 = arith.constant dense<0.000000e+00> : vector<16x256xf32>
    %310 = tpu.matmul %309, %307, %cst_83 {dimension_numbers = #tpu.dot_dimension_numbers<[1], [0], [0], [1], [0, 0, 1, 1], [], []>} : vector<16x3xf32>, vector<3x256xf32>, vector<16x256xf32> -> vector<16x256xf32>
    %311 = arith.addf %302, %310 : vector<16x256xf32>
    %c240_i32_84 = arith.constant 240 : i32
    %312 = tpu.dynamic_rotate %254 by %c240_i32_84 dim 1 : vector<3x256xf32>, i32 -> vector<3x256xf32>
    %313 = vector.extract_strided_slice %1 {offsets = [7, 0, 0], sizes = [1, 1, 256], strides = [1, 1, 1]} : vector<9x1x256xf32> to vector<1x1x256xf32>
    %314 = vector.shape_cast %313 : vector<1x1x256xf32> to vector<1x256xf32>
    %315 = vector.broadcast %314 : vector<1x256xf32> to vector<3x256xf32>
    %316 = arith.mulf %312, %315 : vector<3x256xf32>
    %317 = vector.extract_strided_slice %0 {offsets = [2, 1, 0, 0], sizes = [1, 1, 16, 3], strides = [1, 1, 1, 1]} : vector<3x3x16x3xf32> to vector<1x1x16x3xf32>
    %318 = vector.shape_cast %317 : vector<1x1x16x3xf32> to vector<16x3xf32>
    %cst_85 = arith.constant dense<0.000000e+00> : vector<16x256xf32>
    %319 = tpu.matmul %318, %316, %cst_85 {dimension_numbers = #tpu.dot_dimension_numbers<[1], [0], [0], [1], [0, 0, 1, 1], [], []>} : vector<16x3xf32>, vector<3x256xf32>, vector<16x256xf32> -> vector<16x256xf32>
    %320 = arith.addf %311, %319 : vector<16x256xf32>
    %c239_i32_86 = arith.constant 239 : i32
    %321 = tpu.dynamic_rotate %254 by %c239_i32_86 dim 1 : vector<3x256xf32>, i32 -> vector<3x256xf32>
    %322 = vector.extract_strided_slice %1 {offsets = [8, 0, 0], sizes = [1, 1, 256], strides = [1, 1, 1]} : vector<9x1x256xf32> to vector<1x1x256xf32>
    %323 = vector.shape_cast %322 : vector<1x1x256xf32> to vector<1x256xf32>
    %324 = vector.broadcast %323 : vector<1x256xf32> to vector<3x256xf32>
    %325 = arith.mulf %321, %324 : vector<3x256xf32>
    %326 = vector.extract_strided_slice %0 {offsets = [2, 2, 0, 0], sizes = [1, 1, 16, 3], strides = [1, 1, 1, 1]} : vector<3x3x16x3xf32> to vector<1x1x16x3xf32>
    %327 = vector.shape_cast %326 : vector<1x1x16x3xf32> to vector<16x3xf32>
    %cst_87 = arith.constant dense<0.000000e+00> : vector<16x256xf32>
    %328 = tpu.matmul %327, %325, %cst_87 {dimension_numbers = #tpu.dot_dimension_numbers<[1], [0], [0], [1], [0, 0, 1, 1], [], []>} : vector<16x3xf32>, vector<3x256xf32>, vector<16x256xf32> -> vector<16x256xf32>
    %329 = arith.addf %320, %328 : vector<16x256xf32>
    %cst_88 = arith.constant 0.000000e+00 : f32
    %330 = vector.broadcast %cst_88 : f32 to vector<16x256xf32>
    %331 = arith.cmpf oge, %329, %330 : vector<16x256xf32>
    %cst_89 = arith.constant 0.00999999977 : f32
    %332 = vector.broadcast %cst_89 : f32 to vector<16x256xf32>
    %333 = arith.mulf %332, %329 : vector<16x256xf32>
    %334 = arith.select %331, %329, %333 : vector<16x256xi1>, vector<16x256xf32>
    %c1_90 = arith.constant 1 : index
    %c1_91 = arith.constant 1 : index
    %c0_92 = arith.constant 0 : index
    %c0_93 = arith.constant 0 : index
    %335 = vector.load %arg1[%c1_90, %c1_91, %c0_92, %c0_93] : memref<2x3x3x256xf32, #tpu.memory_space<vmem>>, vector<1x1x3x256xf32>
    %336 = vector.shape_cast %335 : vector<1x1x3x256xf32> to vector<3x256xf32>
    %337 = vector.extract_strided_slice %0 {offsets = [1, 1, 0, 0], sizes = [1, 1, 16, 3], strides = [1, 1, 1, 1]} : vector<3x3x16x3xf32> to vector<1x1x16x3xf32>
    %338 = vector.shape_cast %337 : vector<1x1x16x3xf32> to vector<16x3xf32>
    %cst_94 = arith.constant dense<0.000000e+00> : vector<16x256xf32>
    %339 = tpu.matmul %338, %336, %cst_94 {dimension_numbers = #tpu.dot_dimension_numbers<[1], [0], [0], [1], [0, 0, 1, 1], [], []>} : vector<16x3xf32>, vector<3x256xf32>, vector<16x256xf32> -> vector<16x256xf32>
    %c17_i32_95 = arith.constant 17 : i32
    %340 = tpu.dynamic_rotate %336 by %c17_i32_95 dim 1 : vector<3x256xf32>, i32 -> vector<3x256xf32>
    %341 = vector.extract_strided_slice %1 {offsets = [0, 0, 0], sizes = [1, 1, 256], strides = [1, 1, 1]} : vector<9x1x256xf32> to vector<1x1x256xf32>
    %342 = vector.shape_cast %341 : vector<1x1x256xf32> to vector<1x256xf32>
    %343 = vector.broadcast %342 : vector<1x256xf32> to vector<3x256xf32>
    %344 = arith.mulf %340, %343 : vector<3x256xf32>
    %345 = vector.extract_strided_slice %0 {offsets = [0, 0, 0, 0], sizes = [1, 1, 16, 3], strides = [1, 1, 1, 1]} : vector<3x3x16x3xf32> to vector<1x1x16x3xf32>
    %346 = vector.shape_cast %345 : vector<1x1x16x3xf32> to vector<16x3xf32>
    %cst_96 = arith.constant dense<0.000000e+00> : vector<16x256xf32>
    %347 = tpu.matmul %346, %344, %cst_96 {dimension_numbers = #tpu.dot_dimension_numbers<[1], [0], [0], [1], [0, 0, 1, 1], [], []>} : vector<16x3xf32>, vector<3x256xf32>, vector<16x256xf32> -> vector<16x256xf32>
    %348 = arith.addf %339, %347 : vector<16x256xf32>
    %c16_i32_97 = arith.constant 16 : i32
    %349 = tpu.dynamic_rotate %336 by %c16_i32_97 dim 1 : vector<3x256xf32>, i32 -> vector<3x256xf32>
    %350 = vector.extract_strided_slice %1 {offsets = [1, 0, 0], sizes = [1, 1, 256], strides = [1, 1, 1]} : vector<9x1x256xf32> to vector<1x1x256xf32>
    %351 = vector.shape_cast %350 : vector<1x1x256xf32> to vector<1x256xf32>
    %352 = vector.broadcast %351 : vector<1x256xf32> to vector<3x256xf32>
    %353 = arith.mulf %349, %352 : vector<3x256xf32>
    %354 = vector.extract_strided_slice %0 {offsets = [0, 1, 0, 0], sizes = [1, 1, 16, 3], strides = [1, 1, 1, 1]} : vector<3x3x16x3xf32> to vector<1x1x16x3xf32>
    %355 = vector.shape_cast %354 : vector<1x1x16x3xf32> to vector<16x3xf32>
    %cst_98 = arith.constant dense<0.000000e+00> : vector<16x256xf32>
    %356 = tpu.matmul %355, %353, %cst_98 {dimension_numbers = #tpu.dot_dimension_numbers<[1], [0], [0], [1], [0, 0, 1, 1], [], []>} : vector<16x3xf32>, vector<3x256xf32>, vector<16x256xf32> -> vector<16x256xf32>
    %357 = arith.addf %348, %356 : vector<16x256xf32>
    %c15_i32_99 = arith.constant 15 : i32
    %358 = tpu.dynamic_rotate %336 by %c15_i32_99 dim 1 : vector<3x256xf32>, i32 -> vector<3x256xf32>
    %359 = vector.extract_strided_slice %1 {offsets = [2, 0, 0], sizes = [1, 1, 256], strides = [1, 1, 1]} : vector<9x1x256xf32> to vector<1x1x256xf32>
    %360 = vector.shape_cast %359 : vector<1x1x256xf32> to vector<1x256xf32>
    %361 = vector.broadcast %360 : vector<1x256xf32> to vector<3x256xf32>
    %362 = arith.mulf %358, %361 : vector<3x256xf32>
    %363 = vector.extract_strided_slice %0 {offsets = [0, 2, 0, 0], sizes = [1, 1, 16, 3], strides = [1, 1, 1, 1]} : vector<3x3x16x3xf32> to vector<1x1x16x3xf32>
    %364 = vector.shape_cast %363 : vector<1x1x16x3xf32> to vector<16x3xf32>
    %cst_100 = arith.constant dense<0.000000e+00> : vector<16x256xf32>
    %365 = tpu.matmul %364, %362, %cst_100 {dimension_numbers = #tpu.dot_dimension_numbers<[1], [0], [0], [1], [0, 0, 1, 1], [], []>} : vector<16x3xf32>, vector<3x256xf32>, vector<16x256xf32> -> vector<16x256xf32>
    %366 = arith.addf %357, %365 : vector<16x256xf32>
    %c1_i32_101 = arith.constant 1 : i32
    %367 = tpu.dynamic_rotate %336 by %c1_i32_101 dim 1 : vector<3x256xf32>, i32 -> vector<3x256xf32>
    %368 = vector.extract_strided_slice %1 {offsets = [3, 0, 0], sizes = [1, 1, 256], strides = [1, 1, 1]} : vector<9x1x256xf32> to vector<1x1x256xf32>
    %369 = vector.shape_cast %368 : vector<1x1x256xf32> to vector<1x256xf32>
    %370 = vector.broadcast %369 : vector<1x256xf32> to vector<3x256xf32>
    %371 = arith.mulf %367, %370 : vector<3x256xf32>
    %372 = vector.extract_strided_slice %0 {offsets = [1, 0, 0, 0], sizes = [1, 1, 16, 3], strides = [1, 1, 1, 1]} : vector<3x3x16x3xf32> to vector<1x1x16x3xf32>
    %373 = vector.shape_cast %372 : vector<1x1x16x3xf32> to vector<16x3xf32>
    %cst_102 = arith.constant dense<0.000000e+00> : vector<16x256xf32>
    %374 = tpu.matmul %373, %371, %cst_102 {dimension_numbers = #tpu.dot_dimension_numbers<[1], [0], [0], [1], [0, 0, 1, 1], [], []>} : vector<16x3xf32>, vector<3x256xf32>, vector<16x256xf32> -> vector<16x256xf32>
    %375 = arith.addf %366, %374 : vector<16x256xf32>
    %c255_i32_103 = arith.constant 255 : i32
    %376 = tpu.dynamic_rotate %336 by %c255_i32_103 dim 1 : vector<3x256xf32>, i32 -> vector<3x256xf32>
    %377 = vector.extract_strided_slice %1 {offsets = [5, 0, 0], sizes = [1, 1, 256], strides = [1, 1, 1]} : vector<9x1x256xf32> to vector<1x1x256xf32>
    %378 = vector.shape_cast %377 : vector<1x1x256xf32> to vector<1x256xf32>
    %379 = vector.broadcast %378 : vector<1x256xf32> to vector<3x256xf32>
    %380 = arith.mulf %376, %379 : vector<3x256xf32>
    %381 = vector.extract_strided_slice %0 {offsets = [1, 2, 0, 0], sizes = [1, 1, 16, 3], strides = [1, 1, 1, 1]} : vector<3x3x16x3xf32> to vector<1x1x16x3xf32>
    %382 = vector.shape_cast %381 : vector<1x1x16x3xf32> to vector<16x3xf32>
    %cst_104 = arith.constant dense<0.000000e+00> : vector<16x256xf32>
    %383 = tpu.matmul %382, %380, %cst_104 {dimension_numbers = #tpu.dot_dimension_numbers<[1], [0], [0], [1], [0, 0, 1, 1], [], []>} : vector<16x3xf32>, vector<3x256xf32>, vector<16x256xf32> -> vector<16x256xf32>
    %384 = arith.addf %375, %383 : vector<16x256xf32>
    %c241_i32_105 = arith.constant 241 : i32
    %385 = tpu.dynamic_rotate %336 by %c241_i32_105 dim 1 : vector<3x256xf32>, i32 -> vector<3x256xf32>
    %386 = vector.extract_strided_slice %1 {offsets = [6, 0, 0], sizes = [1, 1, 256], strides = [1, 1, 1]} : vector<9x1x256xf32> to vector<1x1x256xf32>
    %387 = vector.shape_cast %386 : vector<1x1x256xf32> to vector<1x256xf32>
    %388 = vector.broadcast %387 : vector<1x256xf32> to vector<3x256xf32>
    %389 = arith.mulf %385, %388 : vector<3x256xf32>
    %390 = vector.extract_strided_slice %0 {offsets = [2, 0, 0, 0], sizes = [1, 1, 16, 3], strides = [1, 1, 1, 1]} : vector<3x3x16x3xf32> to vector<1x1x16x3xf32>
    %391 = vector.shape_cast %390 : vector<1x1x16x3xf32> to vector<16x3xf32>
    %cst_106 = arith.constant dense<0.000000e+00> : vector<16x256xf32>
    %392 = tpu.matmul %391, %389, %cst_106 {dimension_numbers = #tpu.dot_dimension_numbers<[1], [0], [0], [1], [0, 0, 1, 1], [], []>} : vector<16x3xf32>, vector<3x256xf32>, vector<16x256xf32> -> vector<16x256xf32>
    %393 = arith.addf %384, %392 : vector<16x256xf32>
    %c240_i32_107 = arith.constant 240 : i32
    %394 = tpu.dynamic_rotate %336 by %c240_i32_107 dim 1 : vector<3x256xf32>, i32 -> vector<3x256xf32>
    %395 = vector.extract_strided_slice %1 {offsets = [7, 0, 0], sizes = [1, 1, 256], strides = [1, 1, 1]} : vector<9x1x256xf32> to vector<1x1x256xf32>
    %396 = vector.shape_cast %395 : vector<1x1x256xf32> to vector<1x256xf32>
    %397 = vector.broadcast %396 : vector<1x256xf32> to vector<3x256xf32>
    %398 = arith.mulf %394, %397 : vector<3x256xf32>
    %399 = vector.extract_strided_slice %0 {offsets = [2, 1, 0, 0], sizes = [1, 1, 16, 3], strides = [1, 1, 1, 1]} : vector<3x3x16x3xf32> to vector<1x1x16x3xf32>
    %400 = vector.shape_cast %399 : vector<1x1x16x3xf32> to vector<16x3xf32>
    %cst_108 = arith.constant dense<0.000000e+00> : vector<16x256xf32>
    %401 = tpu.matmul %400, %398, %cst_108 {dimension_numbers = #tpu.dot_dimension_numbers<[1], [0], [0], [1], [0, 0, 1, 1], [], []>} : vector<16x3xf32>, vector<3x256xf32>, vector<16x256xf32> -> vector<16x256xf32>
    %402 = arith.addf %393, %401 : vector<16x256xf32>
    %c239_i32_109 = arith.constant 239 : i32
    %403 = tpu.dynamic_rotate %336 by %c239_i32_109 dim 1 : vector<3x256xf32>, i32 -> vector<3x256xf32>
    %404 = vector.extract_strided_slice %1 {offsets = [8, 0, 0], sizes = [1, 1, 256], strides = [1, 1, 1]} : vector<9x1x256xf32> to vector<1x1x256xf32>
    %405 = vector.shape_cast %404 : vector<1x1x256xf32> to vector<1x256xf32>
    %406 = vector.broadcast %405 : vector<1x256xf32> to vector<3x256xf32>
    %407 = arith.mulf %403, %406 : vector<3x256xf32>
    %408 = vector.extract_strided_slice %0 {offsets = [2, 2, 0, 0], sizes = [1, 1, 16, 3], strides = [1, 1, 1, 1]} : vector<3x3x16x3xf32> to vector<1x1x16x3xf32>
    %409 = vector.shape_cast %408 : vector<1x1x16x3xf32> to vector<16x3xf32>
    %cst_110 = arith.constant dense<0.000000e+00> : vector<16x256xf32>
    %410 = tpu.matmul %409, %407, %cst_110 {dimension_numbers = #tpu.dot_dimension_numbers<[1], [0], [0], [1], [0, 0, 1, 1], [], []>} : vector<16x3xf32>, vector<3x256xf32>, vector<16x256xf32> -> vector<16x256xf32>
    %411 = arith.addf %402, %410 : vector<16x256xf32>
    %cst_111 = arith.constant 0.000000e+00 : f32
    %412 = vector.broadcast %cst_111 : f32 to vector<16x256xf32>
    %413 = arith.cmpf oge, %411, %412 : vector<16x256xf32>
    %cst_112 = arith.constant 0.00999999977 : f32
    %414 = vector.broadcast %cst_112 : f32 to vector<16x256xf32>
    %415 = arith.mulf %414, %411 : vector<16x256xf32>
    %416 = arith.select %413, %411, %415 : vector<16x256xi1>, vector<16x256xf32>
    %417 = arith.maximumf %334, %416 : vector<16x256xf32>
    %c1_113 = arith.constant 1 : index
    %c2_114 = arith.constant 2 : index
    %c0_115 = arith.constant 0 : index
    %c0_116 = arith.constant 0 : index
    %418 = vector.load %arg1[%c1_113, %c2_114, %c0_115, %c0_116] : memref<2x3x3x256xf32, #tpu.memory_space<vmem>>, vector<1x1x3x256xf32>
    %419 = vector.shape_cast %418 : vector<1x1x3x256xf32> to vector<3x256xf32>
    %420 = vector.extract_strided_slice %0 {offsets = [1, 1, 0, 0], sizes = [1, 1, 16, 3], strides = [1, 1, 1, 1]} : vector<3x3x16x3xf32> to vector<1x1x16x3xf32>
    %421 = vector.shape_cast %420 : vector<1x1x16x3xf32> to vector<16x3xf32>
    %cst_117 = arith.constant dense<0.000000e+00> : vector<16x256xf32>
    %422 = tpu.matmul %421, %419, %cst_117 {dimension_numbers = #tpu.dot_dimension_numbers<[1], [0], [0], [1], [0, 0, 1, 1], [], []>} : vector<16x3xf32>, vector<3x256xf32>, vector<16x256xf32> -> vector<16x256xf32>
    %c17_i32_118 = arith.constant 17 : i32
    %423 = tpu.dynamic_rotate %419 by %c17_i32_118 dim 1 : vector<3x256xf32>, i32 -> vector<3x256xf32>
    %424 = vector.extract_strided_slice %1 {offsets = [0, 0, 0], sizes = [1, 1, 256], strides = [1, 1, 1]} : vector<9x1x256xf32> to vector<1x1x256xf32>
    %425 = vector.shape_cast %424 : vector<1x1x256xf32> to vector<1x256xf32>
    %426 = vector.broadcast %425 : vector<1x256xf32> to vector<3x256xf32>
    %427 = arith.mulf %423, %426 : vector<3x256xf32>
    %428 = vector.extract_strided_slice %0 {offsets = [0, 0, 0, 0], sizes = [1, 1, 16, 3], strides = [1, 1, 1, 1]} : vector<3x3x16x3xf32> to vector<1x1x16x3xf32>
    %429 = vector.shape_cast %428 : vector<1x1x16x3xf32> to vector<16x3xf32>
    %cst_119 = arith.constant dense<0.000000e+00> : vector<16x256xf32>
    %430 = tpu.matmul %429, %427, %cst_119 {dimension_numbers = #tpu.dot_dimension_numbers<[1], [0], [0], [1], [0, 0, 1, 1], [], []>} : vector<16x3xf32>, vector<3x256xf32>, vector<16x256xf32> -> vector<16x256xf32>
    %431 = arith.addf %422, %430 : vector<16x256xf32>
    %c16_i32_120 = arith.constant 16 : i32
    %432 = tpu.dynamic_rotate %419 by %c16_i32_120 dim 1 : vector<3x256xf32>, i32 -> vector<3x256xf32>
    %433 = vector.extract_strided_slice %1 {offsets = [1, 0, 0], sizes = [1, 1, 256], strides = [1, 1, 1]} : vector<9x1x256xf32> to vector<1x1x256xf32>
    %434 = vector.shape_cast %433 : vector<1x1x256xf32> to vector<1x256xf32>
    %435 = vector.broadcast %434 : vector<1x256xf32> to vector<3x256xf32>
    %436 = arith.mulf %432, %435 : vector<3x256xf32>
    %437 = vector.extract_strided_slice %0 {offsets = [0, 1, 0, 0], sizes = [1, 1, 16, 3], strides = [1, 1, 1, 1]} : vector<3x3x16x3xf32> to vector<1x1x16x3xf32>
    %438 = vector.shape_cast %437 : vector<1x1x16x3xf32> to vector<16x3xf32>
    %cst_121 = arith.constant dense<0.000000e+00> : vector<16x256xf32>
    %439 = tpu.matmul %438, %436, %cst_121 {dimension_numbers = #tpu.dot_dimension_numbers<[1], [0], [0], [1], [0, 0, 1, 1], [], []>} : vector<16x3xf32>, vector<3x256xf32>, vector<16x256xf32> -> vector<16x256xf32>
    %440 = arith.addf %431, %439 : vector<16x256xf32>
    %c15_i32_122 = arith.constant 15 : i32
    %441 = tpu.dynamic_rotate %419 by %c15_i32_122 dim 1 : vector<3x256xf32>, i32 -> vector<3x256xf32>
    %442 = vector.extract_strided_slice %1 {offsets = [2, 0, 0], sizes = [1, 1, 256], strides = [1, 1, 1]} : vector<9x1x256xf32> to vector<1x1x256xf32>
    %443 = vector.shape_cast %442 : vector<1x1x256xf32> to vector<1x256xf32>
    %444 = vector.broadcast %443 : vector<1x256xf32> to vector<3x256xf32>
    %445 = arith.mulf %441, %444 : vector<3x256xf32>
    %446 = vector.extract_strided_slice %0 {offsets = [0, 2, 0, 0], sizes = [1, 1, 16, 3], strides = [1, 1, 1, 1]} : vector<3x3x16x3xf32> to vector<1x1x16x3xf32>
    %447 = vector.shape_cast %446 : vector<1x1x16x3xf32> to vector<16x3xf32>
    %cst_123 = arith.constant dense<0.000000e+00> : vector<16x256xf32>
    %448 = tpu.matmul %447, %445, %cst_123 {dimension_numbers = #tpu.dot_dimension_numbers<[1], [0], [0], [1], [0, 0, 1, 1], [], []>} : vector<16x3xf32>, vector<3x256xf32>, vector<16x256xf32> -> vector<16x256xf32>
    %449 = arith.addf %440, %448 : vector<16x256xf32>
    %c1_i32_124 = arith.constant 1 : i32
    %450 = tpu.dynamic_rotate %419 by %c1_i32_124 dim 1 : vector<3x256xf32>, i32 -> vector<3x256xf32>
    %451 = vector.extract_strided_slice %1 {offsets = [3, 0, 0], sizes = [1, 1, 256], strides = [1, 1, 1]} : vector<9x1x256xf32> to vector<1x1x256xf32>
    %452 = vector.shape_cast %451 : vector<1x1x256xf32> to vector<1x256xf32>
    %453 = vector.broadcast %452 : vector<1x256xf32> to vector<3x256xf32>
    %454 = arith.mulf %450, %453 : vector<3x256xf32>
    %455 = vector.extract_strided_slice %0 {offsets = [1, 0, 0, 0], sizes = [1, 1, 16, 3], strides = [1, 1, 1, 1]} : vector<3x3x16x3xf32> to vector<1x1x16x3xf32>
    %456 = vector.shape_cast %455 : vector<1x1x16x3xf32> to vector<16x3xf32>
    %cst_125 = arith.constant dense<0.000000e+00> : vector<16x256xf32>
    %457 = tpu.matmul %456, %454, %cst_125 {dimension_numbers = #tpu.dot_dimension_numbers<[1], [0], [0], [1], [0, 0, 1, 1], [], []>} : vector<16x3xf32>, vector<3x256xf32>, vector<16x256xf32> -> vector<16x256xf32>
    %458 = arith.addf %449, %457 : vector<16x256xf32>
    %c255_i32_126 = arith.constant 255 : i32
    %459 = tpu.dynamic_rotate %419 by %c255_i32_126 dim 1 : vector<3x256xf32>, i32 -> vector<3x256xf32>
    %460 = vector.extract_strided_slice %1 {offsets = [5, 0, 0], sizes = [1, 1, 256], strides = [1, 1, 1]} : vector<9x1x256xf32> to vector<1x1x256xf32>
    %461 = vector.shape_cast %460 : vector<1x1x256xf32> to vector<1x256xf32>
    %462 = vector.broadcast %461 : vector<1x256xf32> to vector<3x256xf32>
    %463 = arith.mulf %459, %462 : vector<3x256xf32>
    %464 = vector.extract_strided_slice %0 {offsets = [1, 2, 0, 0], sizes = [1, 1, 16, 3], strides = [1, 1, 1, 1]} : vector<3x3x16x3xf32> to vector<1x1x16x3xf32>
    %465 = vector.shape_cast %464 : vector<1x1x16x3xf32> to vector<16x3xf32>
    %cst_127 = arith.constant dense<0.000000e+00> : vector<16x256xf32>
    %466 = tpu.matmul %465, %463, %cst_127 {dimension_numbers = #tpu.dot_dimension_numbers<[1], [0], [0], [1], [0, 0, 1, 1], [], []>} : vector<16x3xf32>, vector<3x256xf32>, vector<16x256xf32> -> vector<16x256xf32>
    %467 = arith.addf %458, %466 : vector<16x256xf32>
    %c241_i32_128 = arith.constant 241 : i32
    %468 = tpu.dynamic_rotate %419 by %c241_i32_128 dim 1 : vector<3x256xf32>, i32 -> vector<3x256xf32>
    %469 = vector.extract_strided_slice %1 {offsets = [6, 0, 0], sizes = [1, 1, 256], strides = [1, 1, 1]} : vector<9x1x256xf32> to vector<1x1x256xf32>
    %470 = vector.shape_cast %469 : vector<1x1x256xf32> to vector<1x256xf32>
    %471 = vector.broadcast %470 : vector<1x256xf32> to vector<3x256xf32>
    %472 = arith.mulf %468, %471 : vector<3x256xf32>
    %473 = vector.extract_strided_slice %0 {offsets = [2, 0, 0, 0], sizes = [1, 1, 16, 3], strides = [1, 1, 1, 1]} : vector<3x3x16x3xf32> to vector<1x1x16x3xf32>
    %474 = vector.shape_cast %473 : vector<1x1x16x3xf32> to vector<16x3xf32>
    %cst_129 = arith.constant dense<0.000000e+00> : vector<16x256xf32>
    %475 = tpu.matmul %474, %472, %cst_129 {dimension_numbers = #tpu.dot_dimension_numbers<[1], [0], [0], [1], [0, 0, 1, 1], [], []>} : vector<16x3xf32>, vector<3x256xf32>, vector<16x256xf32> -> vector<16x256xf32>
    %476 = arith.addf %467, %475 : vector<16x256xf32>
    %c240_i32_130 = arith.constant 240 : i32
    %477 = tpu.dynamic_rotate %419 by %c240_i32_130 dim 1 : vector<3x256xf32>, i32 -> vector<3x256xf32>
    %478 = vector.extract_strided_slice %1 {offsets = [7, 0, 0], sizes = [1, 1, 256], strides = [1, 1, 1]} : vector<9x1x256xf32> to vector<1x1x256xf32>
    %479 = vector.shape_cast %478 : vector<1x1x256xf32> to vector<1x256xf32>
    %480 = vector.broadcast %479 : vector<1x256xf32> to vector<3x256xf32>
    %481 = arith.mulf %477, %480 : vector<3x256xf32>
    %482 = vector.extract_strided_slice %0 {offsets = [2, 1, 0, 0], sizes = [1, 1, 16, 3], strides = [1, 1, 1, 1]} : vector<3x3x16x3xf32> to vector<1x1x16x3xf32>
    %483 = vector.shape_cast %482 : vector<1x1x16x3xf32> to vector<16x3xf32>
    %cst_131 = arith.constant dense<0.000000e+00> : vector<16x256xf32>
    %484 = tpu.matmul %483, %481, %cst_131 {dimension_numbers = #tpu.dot_dimension_numbers<[1], [0], [0], [1], [0, 0, 1, 1], [], []>} : vector<16x3xf32>, vector<3x256xf32>, vector<16x256xf32> -> vector<16x256xf32>
    %485 = arith.addf %476, %484 : vector<16x256xf32>
    %c239_i32_132 = arith.constant 239 : i32
    %486 = tpu.dynamic_rotate %419 by %c239_i32_132 dim 1 : vector<3x256xf32>, i32 -> vector<3x256xf32>
    %487 = vector.extract_strided_slice %1 {offsets = [8, 0, 0], sizes = [1, 1, 256], strides = [1, 1, 1]} : vector<9x1x256xf32> to vector<1x1x256xf32>
    %488 = vector.shape_cast %487 : vector<1x1x256xf32> to vector<1x256xf32>
    %489 = vector.broadcast %488 : vector<1x256xf32> to vector<3x256xf32>
    %490 = arith.mulf %486, %489 : vector<3x256xf32>
    %491 = vector.extract_strided_slice %0 {offsets = [2, 2, 0, 0], sizes = [1, 1, 16, 3], strides = [1, 1, 1, 1]} : vector<3x3x16x3xf32> to vector<1x1x16x3xf32>
    %492 = vector.shape_cast %491 : vector<1x1x16x3xf32> to vector<16x3xf32>
    %cst_133 = arith.constant dense<0.000000e+00> : vector<16x256xf32>
    %493 = tpu.matmul %492, %490, %cst_133 {dimension_numbers = #tpu.dot_dimension_numbers<[1], [0], [0], [1], [0, 0, 1, 1], [], []>} : vector<16x3xf32>, vector<3x256xf32>, vector<16x256xf32> -> vector<16x256xf32>
    %494 = arith.addf %485, %493 : vector<16x256xf32>
    %cst_134 = arith.constant 0.000000e+00 : f32
    %495 = vector.broadcast %cst_134 : f32 to vector<16x256xf32>
    %496 = arith.cmpf oge, %494, %495 : vector<16x256xf32>
    %cst_135 = arith.constant 0.00999999977 : f32
    %497 = vector.broadcast %cst_135 : f32 to vector<16x256xf32>
    %498 = arith.mulf %497, %494 : vector<16x256xf32>
    %499 = arith.select %496, %494, %498 : vector<16x256xi1>, vector<16x256xf32>
    %500 = arith.maximumf %417, %499 : vector<16x256xf32>
    %c1_136 = arith.constant 1 : index
    %c0_137 = arith.constant 0 : index
    %c0_138 = arith.constant 0 : index
    %501 = vector.load %arg4[%c1_136, %c0_137, %c0_138] : memref<2x16x256xf32, #tpu.memory_space<vmem>>, vector<1x16x256xf32>
    %502 = vector.shape_cast %501 : vector<1x16x256xf32> to vector<16x256xf32>
    %503 = vector.shape_cast %500 : vector<16x256xf32> to vector<1x16x256xf32>
    tpu.vector_store %arg4[%c1_136, %c0_137, %c0_138], %503 {strides = array<i32>} : memref<2x16x256xf32, #tpu.memory_space<vmem>>, vector<1x16x256xf32>,
    return
  }
  func.func @transform_0(%arg0: i32) -> (i32, i32, i32, i32) {
    %c0_i32 = arith.constant 0 : i32
    %c0_i32_0 = arith.constant 0 : i32
    %c0_i32_1 = arith.constant 0 : i32
    %c0_i32_2 = arith.constant 0 : i32
    return %arg0, %c0_i32, %c0_i32_0, %c0_i32_1 : i32, i32, i32, i32
  }
  func.func @transform_1(%arg0: i32) -> (i32, i32, i32, i32) {
    %c0_i32 = arith.constant 0 : i32
    %c0_i32_0 = arith.constant 0 : i32
    %c0_i32_1 = arith.constant 0 : i32
    %c0_i32_2 = arith.constant 0 : i32
    %c0_i32_3 = arith.constant 0 : i32
    return %c0_i32, %c0_i32_0, %c0_i32_1, %c0_i32_2 : i32, i32, i32, i32
  }
  func.func @transform_2(%arg0: i32) -> (i32, i32, i32) {
    %c0_i32 = arith.constant 0 : i32
    %c0_i32_0 = arith.constant 0 : i32
    %c0_i32_1 = arith.constant 0 : i32
    %c0_i32_2 = arith.constant 0 : i32
    return %c0_i32, %c0_i32_0, %c0_i32_1 : i32, i32, i32
  }
  func.func @transform_3(%arg0: i32) -> (i32, i32, i32) {
    %c0_i32 = arith.constant 0 : i32
    %c0_i32_0 = arith.constant 0 : i32
    %c0_i32_1 = arith.constant 0 : i32
    return %arg0, %c0_i32, %c0_i32_0 : i32, i32, i32
  }
}

</mosaic_0001>

<llo_original>
// kernel: _forward_stem1.1
$region0: #{_forward_stem1.1}
  #allocation0 [shape = 'u32[]', space=smem, size = 0x4, offset = 0x4, fixed_abs, tag = 'smem constant byte address 0x4 - core index']
  #allocation1 [shape = 'u32[72,128]{1,0:T(1,128)}', space=vmem, size = 0x9000, scoped, tag = 'internal scratch']
  %s0 = inlined_call_operand.vmem [shape: f32[4,3,3,256], index: 0, kind: input, shape index: {}]
  %s1 = inlined_call_operand.vmem [shape: f32[3,3,16,3], index: 1, kind: input, shape index: {}]
  %s2 = inlined_call_operand.vmem [shape: f32[9,1,256], index: 2, kind: input, shape index: {}]
  %s3 = inlined_call_operand.vmem [shape: f32[4,16,256], index: 3, kind: output, shape index: {}]
  %s4 = sld [smem:[#allocation0]]
  $region45: #{_forward_stem1.1} parent=0
    _
  %s6 = ssub.s32 1, %s4
  %s7 = scalar_select 0, %s6, %s4
  loop: start=0, step=1, limit=4
  $region2: #{_forward_stem1.1} parent=0 // loop_pre_header
    _
  $region3: #{_forward_stem1.1} parent=0 // loop_header
    %s9 = sphi 0, %s13
    %p10 = scmp.ge.s32.totalorder %s9, 4
    %s19 = sphi 0, %s21
    %s22 = sphi 0, %s19
    %s23 = sphi 0, %s22
    %s39 = sphi 0, %s23
    %s43 = sphi 0, %s43
    %s45 = sphi 0, %s43
    %s46 = sphi 0, %s45
    %s60 = sphi 0, %s46
    %s64 = sphi 0, %s64
    %s66 = sphi 0, %s64
    %s67 = sphi 0, %s66
    %s81 = sphi 0, %s67
    %s87 = sphi 0, %s89
    %s90 = sphi 0, %s87
    %s91 = sphi 0, %s90
    %s107 = sphi 0, %s91
  $region4: #{_forward_stem1.1} parent=0 // loop_header_branch
    %12 = sbr.rel (%p10) target = $region8
  $region5: #{_forward_stem1.1} parent=0 // loop_body
    %s14 = ssub.s32 %s9, 1
    %s15 = ssub.s32 %s9, 2
    %s16 = sadd.s32 %s9, 1
    %s17 = ssub.s32 %s9, %s16
    %p18 = scmp.eq.s32.totalorder %s17, 0
    %s20 = sadd.s32 %s19, 1
    %s21 = scalar_select %p18, %s19, %s20
    %p24 = pneg %p18
    %p25 = scmp.eq.s32.totalorder %s9, 1
    %p26 = por %p24, %p25
    %p27 = scmp.ne.s32.totalorder %s19, %s22
    %p28 = scmp.eq.s32.totalorder %s9, 0
    %p29 = por %p27, %p28
    %p30 = scmp.ne.s32.totalorder %s19, %s22
    %p31 = scmp.eq.s32.totalorder %s14, 1
    %p32 = por %p30, %p31
    %p33 = scmp.ne.s32.totalorder %s22, %s23
    %p34 = scmp.eq.s32.totalorder %s14, 0
    %p35 = por %p33, %p34
    %p36 = scmp.ne.s32.totalorder %s22, %s23
    %p37 = scmp.eq.s32.totalorder %s15, 1
    %p38 = por %p36, %p37
    %p40 = scmp.ne.s32.totalorder %s23, %s39
    %p41 = scmp.eq.s32.totalorder %s15, 0
    %p42 = por %p40, %p41
    %s44 = sadd.s32 %s43, 1
    %p47 = scmp.eq.s32.totalorder %s9, 1
    %p48 = scmp.ne.s32.totalorder %s43, %s45
    %p49 = scmp.eq.s32.totalorder %s9, 0
    %p50 = por %p48, %p49
    %p51 = scmp.ne.s32.totalorder %s43, %s45
    %p52 = scmp.eq.s32.totalorder %s14, 1
    %p53 = por %p51, %p52
    %p54 = scmp.ne.s32.totalorder %s45, %s46
    %p55 = scmp.eq.s32.totalorder %s14, 0
    %p56 = por %p54, %p55
    %p57 = scmp.ne.s32.totalorder %s45, %s46
    %p58 = scmp.eq.s32.totalorder %s15, 1
    %p59 = por %p57, %p58
    %p61 = scmp.ne.s32.totalorder %s46, %s60
    %p62 = scmp.eq.s32.totalorder %s15, 0
    %p63 = por %p61, %p62
    %s65 = sadd.s32 %s64, 1
    %p68 = scmp.eq.s32.totalorder %s9, 1
    %p69 = scmp.ne.s32.totalorder %s64, %s66
    %p70 = scmp.eq.s32.totalorder %s9, 0
    %p71 = por %p69, %p70
    %p72 = scmp.ne.s32.totalorder %s64, %s66
    %p73 = scmp.eq.s32.totalorder %s14, 1
    %p74 = por %p72, %p73
    %p75 = scmp.ne.s32.totalorder %s66, %s67
    %p76 = scmp.eq.s32.totalorder %s14, 0
    %p77 = por %p75, %p76
    %p78 = scmp.ne.s32.totalorder %s66, %s67
    %p79 = scmp.eq.s32.totalorder %s15, 1
    %p80 = por %p78, %p79
    %p82 = scmp.ne.s32.totalorder %s67, %s81
    %p83 = scmp.eq.s32.totalorder %s15, 0
    %p84 = por %p82, %p83
    %s85 = ssub.s32 %s9, %s16
    %p86 = scmp.eq.s32.totalorder %s85, 0
    %s88 = sadd.s32 %s87, 1
    %s89 = scalar_select %p86, %s87, %s88
    %p92 = pneg %p86
    %p93 = scmp.eq.s32.totalorder %s9, 1
    %p94 = por %p92, %p93
    %p95 = scmp.ne.s32.totalorder %s87, %s90
    %p96 = scmp.eq.s32.totalorder %s9, 0
    %p97 = por %p95, %p96
    %p98 = scmp.ne.s32.totalorder %s87, %s90
    %p99 = scmp.eq.s32.totalorder %s14, 1
    %p100 = por %p98, %p99
    %p101 = scmp.ne.s32.totalorder %s90, %s91
    %p102 = scmp.eq.s32.totalorder %s14, 0
    %p103 = por %p101, %p102
    %p104 = scmp.ne.s32.totalorder %s90, %s91
    %p105 = scmp.eq.s32.totalorder %s15, 1
    %p106 = por %p104, %p105
    %p108 = scmp.ne.s32.totalorder %s91, %s107
    %p109 = scmp.eq.s32.totalorder %s15, 0
    %p110 = por %p108, %p109
    %p111 = scmp.le.s32.totalorder 1, %s9
    %p112 = scmp.lt.s32.totalorder %s9, 3
    %p113 = pnand %p111, %p112
    %p114 = pneg %p113
    // Predicated region
    $region9: #{_forward_stem1.1} parent=5 // pred_check
      _
    $region10: #{_forward_stem1.1} parent=5 // pred_check_branch
      %116 = sbr.rel (%p113) target = $region12
    $region11: #{_forward_stem1.1} parent=5 // pred_region
      %s117 = ssub.s32 %s9, 1
      // Predicated region
      $region13: #{_forward_stem1.1} parent=11 // pred_check
        %p118 = pneg %p56
      $region14: #{_forward_stem1.1} parent=11 // pred_check_branch
        %120 = sbr.rel (%p118) target = $region16
      $region15: #{_forward_stem1.1} parent=11 // pred_region
        _
      $region16: #{_forward_stem1.1} parent=11 // pred_fallthru
        _
      // Predicated region
      $region17: #{_forward_stem1.1} parent=11 // pred_check
        %p121 = pneg %p77
      $region18: #{_forward_stem1.1} parent=11 // pred_check_branch
        %123 = sbr.rel (%p121) target = $region20
      $region19: #{_forward_stem1.1} parent=11 // pred_region
        _
      $region20: #{_forward_stem1.1} parent=11 // pred_fallthru
        _
    $region12: #{_forward_stem1.1} parent=5 // pred_fallthru
      _
    %p124 = scmp.lt.s32.totalorder %s9, 2
    // Predicated region
    $region21: #{_forward_stem1.1} parent=5 // pred_check
      %p125 = pneg %p124
    $region22: #{_forward_stem1.1} parent=5 // pred_check_branch
      %127 = sbr.rel (%p125) target = $region24
    $region23: #{_forward_stem1.1} parent=5 // pred_region
      // Predicated region
      $region25: #{_forward_stem1.1} parent=23 // pred_check
        %p128 = pneg %p29
      $region26: #{_forward_stem1.1} parent=23 // pred_check_branch
        %130 = sbr.rel (%p128) target = $region28
      $region27: #{_forward_stem1.1} parent=23 // pred_region
        %s131 = smul.u32 2, %s9
        %p132 = scmp.lt.s32.totalorder %s131, 3
        %s133 = scalar_select %p132, %s131, 3
        %s134 = smul.addr %s133, 6
        %s135 = smul.addr %s134, 4
        %s136 = scalar_lea.vmem %s0, %s135
        %s137 = smul.u32 2, %s9
      $region28: #{_forward_stem1.1} parent=23 // pred_fallthru
        _
    $region24: #{_forward_stem1.1} parent=5 // pred_fallthru
      _
    %p138 = scmp.le.s32.totalorder 1, %s9
    %p139 = scmp.lt.s32.totalorder %s9, 3
    %p140 = pnand %p138, %p139
    %p141 = pneg %p140
    // Predicated region
    $region29: #{_forward_stem1.1} parent=5 // pred_check
      _
    $region30: #{_forward_stem1.1} parent=5 // pred_check_branch
      %143 = sbr.rel (%p140) target = $region32
    $region31: #{_forward_stem1.1} parent=5 // pred_region
      %s144 = ssub.s32 %s9, 1
      %s145 = smul.u32 2, %s14
      %p146 = scmp.lt.s32.totalorder %s145, 3
      %s147 = scalar_select %p146, %s145, 3
      %s148 = smul.addr %s147, 6
      %s149 = smul.addr %s148, 4
      %s150 = scalar_lea.vmem %s0, %s149
      %p151 = pneg %p35
      %p152 = pneg %p32
      %p153 = pneg %p56
      %p154 = pneg %p53
      %p155 = pneg %p77
      %p156 = pneg %p74
      %p157 = pneg %p103
      %p158 = pneg %p100
      %s159 = smul.u32 2, %s14
      %p160 = scmp.lt.s32.totalorder %s159, 3
      %s161 = scalar_select %p160, %s159, 3
      %s162 = smul.addr %s161, 4
      %s163 = smul.addr %s162, 8
      %s164 = scalar_lea.vmem %s3, %s163
      %s165 = smul.u32 2, %s14
      %p166 = scmp.lt.s32.totalorder %s165, 3
      %s167 = scalar_select %p166, %s165, 3
      %s168 = smul.addr %s167, 6
      %s169 = smul.addr %s168, 4
      %s170 = scalar_lea.vmem %s0, %s169
      %s171 = smul.u32 2, %s14
      %s172 = smul.u32 2, %s14
      %p173 = scmp.lt.s32.totalorder %s172, 3
      %s174 = scalar_select %p173, %s172, 3
      %s175 = smul.addr %s174, 4
      %s176 = smul.addr %s175, 8
      %s177 = scalar_lea.vmem %s3, %s176
      %s178 = smul.u32 2, %s14
      %v179 = vld [vmem:[%s1] sm:$0xff]
      %v180 = vld [vmem:[%s1 + $0x8] sm:$0xff]
      %v181 = vld [vmem:[%s1 + $0x10] sm:$0xff]
      %v182 = vld [vmem:[%s1 + $0x18] sm:$0xff]
      %v183 = vld [vmem:[%s1 + $0x20] sm:$0xff]
      %v184 = vld [vmem:[%s1 + $0x28] sm:$0xff]
      %v185 = vld [vmem:[%s1 + $0x30] sm:$0xff]
      %v186 = vld [vmem:[%s1 + $0x38] sm:$0xff]
      %v187 = vld [vmem:[%s1 + $0x40] sm:$0xff]
      %v188 = vld [vmem:[%s1 + $0x48] sm:$0xff]
      %v189 = vld [vmem:[%s1 + $0x50] sm:$0xff]
      %v190 = vld [vmem:[%s1 + $0x58] sm:$0xff]
      %v191 = vld [vmem:[%s1 + $0x60] sm:$0xff]
      %v192 = vld [vmem:[%s1 + $0x68] sm:$0xff]
      %v193 = vld [vmem:[%s1 + $0x70] sm:$0xff]
      %v194 = vld [vmem:[%s1 + $0x78] sm:$0xff]
      %v195 = vld [vmem:[%s1 + $0x80] sm:$0xff]
      %v196 = vld [vmem:[%s1 + $0x88] sm:$0xff]
      %v197 = vld [vmem:[%s2] sm:$0x3]
      %v198 = vld [vmem:[%s2 + $0x2] sm:$0x3]
      %v199 = vld [vmem:[%s2 + $0x4] sm:$0x3]
      %v200 = vld [vmem:[%s2 + $0x6] sm:$0x3]
      %v201 = vld [vmem:[%s2 + $0xa] sm:$0x3]
      %v202 = vld [vmem:[%s2 + $0xc] sm:$0x3]
      %v203 = vld [vmem:[%s2 + $0xe] sm:$0x3]
      %v204 = vld [vmem:[%s2 + $0x10] sm:$0x3]
      %v205 = vld [vmem:[%s170] sm:$0x77]
      %207 = vst [vmem:[#allocation1] ss:$2 sm:$0xff] %v205
      %v208 = vld.sshfl [vmem:[#allocation1] sm:$0xff pattern:$0x75316420]
      %v209 = vld.sshfl [vmem:[#allocation1 + $0x8] sm:$0xff pattern:$0x75316420]
      %212 = vrot.lane.b32.xlu0 %v208, 17
      %v213 = vpop.permute.xlu0 %212
      %214 = vrot.lane.b32.xlu0 %v209, 17
      %v215 = vpop.permute.xlu0 %214
      %v216 = vlaneseq
      %v217 = vand.u32 %v216, 127
      %vm218 = vcmp.lt.s32.totalorder %v217, 17
      %v219 = vsel %vm218, %v213, %v215
      %v220 = vsel %vm218, %v215, %v213
      %v222 = vperm.slane %v197, 0
      %v223 = vperm.slane %v197, 1
      %v226 = vmul.f32 %v220, %v222
      %v227 = vmul.f32 %v219, %v223
      %vm228 = vcmask 23552
      %v230 = vsel %vm228, %v179, 0
      %v233 = vsel %vm228, %v180, 0
      %vm235 = vcmask 1042432
      %v237 = vsel %vm235, %v226, 0
      %v240 = vsel %vm235, %v227, 0
      %242 = vmatpush.msra.mxu0 0.0
      %243 = vmatpush.msra.mxu0 0.0
      %244 = vmatpush.msra.mxu0 0.0
      %245 = vmatpush.msra.mxu0 0.0
      %246 = vmatpush.msra.mxu0 0.0
      %247 = vmatpush.msra.mxu0 0.0
      %248 = vmatpush.msra.mxu0 0.0
      %249 = vmatpush.msra.mxu0 0.0
      %250 = vmatpush.msra.mxu0 0.0
      %251 = vmatpush.msra.mxu0 0.0
      %252 = vmatpush.msra.mxu0 0.0
      %253 = vmatpush.msra.mxu0 0.0
      %254 = vmatpush.msra.mxu0 0.0
      %255 = vmatpush.msra.mxu0 0.0
      %256 = vmatpush.msra.mxu0 0.0
      %257 = vmatpush.msra.mxu0 %v237
      %258 = vmatmul.f32.gmra.mxu0 %v230
      %v259 = vpop.f32.mrf.mxu0
      %v260 = vadd.f32 0.0, %v259
      %261 = vmatmul.f32.gmra.mxu0 %v233
      %v262 = vpop.f32.mrf.mxu0
      %v263 = vadd.f32 0.0, %v262
      %264 = vdwg.mxu0
      %265 = vmatpush.msra.mxu0 0.0
      %266 = vmatpush.msra.mxu0 0.0
      %267 = vmatpush.msra.mxu0 0.0
      %268 = vmatpush.msra.mxu0 0.0
      %269 = vmatpush.msra.mxu0 0.0
      %270 = vmatpush.msra.mxu0 0.0
      %271 = vmatpush.msra.mxu0 0.0
      %272 = vmatpush.msra.mxu0 0.0
      %273 = vmatpush.msra.mxu0 0.0
      %274 = vmatpush.msra.mxu0 0.0
      %275 = vmatpush.msra.mxu0 0.0
      %276 = vmatpush.msra.mxu0 0.0
      %277 = vmatpush.msra.mxu0 0.0
      %278 = vmatpush.msra.mxu0 0.0
      %279 = vmatpush.msra.mxu0 0.0
      %280 = vmatpush.msra.mxu0 %v240
      %281 = vmatmul.f32.gmra.mxu0 %v230
      %v282 = vpop.f32.mrf.mxu0
      %v283 = vadd.f32 0.0, %v282
      %284 = vmatmul.f32.gmra.mxu0 %v233
      %v285 = vpop.f32.mrf.mxu0
      %v286 = vadd.f32 0.0, %v285
      %287 = vdwg.mxu0
      %288 = vst [vmem:[#allocation1] ss:$2 sm:$0xff] %v205
      %v289 = vld.sshfl [vmem:[#allocation1] sm:$0xff pattern:$0x75316420]
      %v290 = vld.sshfl [vmem:[#allocation1 + $0x8] sm:$0xff pattern:$0x75316420]
      %v292 = vsel %vm228, %v187, 0
      %v295 = vsel %vm228, %v188, 0
      %v297 = vsel %vm235, %v289, 0
      %v299 = vsel %vm235, %v290, 0
      %301 = vmatpush.msra.mxu0 0.0
      %302 = vmatpush.msra.mxu0 0.0
      %303 = vmatpush.msra.mxu0 0.0
      %304 = vmatpush.msra.mxu0 0.0
      %305 = vmatpush.msra.mxu0 0.0
      %306 = vmatpush.msra.mxu0 0.0
      %307 = vmatpush.msra.mxu0 0.0
      %308 = vmatpush.msra.mxu0 0.0
      %309 = vmatpush.msra.mxu0 0.0
      %310 = vmatpush.msra.mxu0 0.0
      %311 = vmatpush.msra.mxu0 0.0
      %312 = vmatpush.msra.mxu0 0.0
      %313 = vmatpush.msra.mxu0 0.0
      %314 = vmatpush.msra.mxu0 0.0
      %315 = vmatpush.msra.mxu0 0.0
      %316 = vmatpush.msra.mxu0 %v297
      %317 = vmatmul.f32.gmra.mxu0 %v292
      %v318 = vpop.f32.mrf.mxu0
      %v319 = vadd.f32 %v260, %v318
      %320 = vmatmul.f32.gmra.mxu0 %v295
      %v321 = vpop.f32.mrf.mxu0
      %v322 = vadd.f32 %v263, %v321
      %323 = vdwg.mxu0
      %324 = vmatpush.msra.mxu0 0.0
      %325 = vmatpush.msra.mxu0 0.0
      %326 = vmatpush.msra.mxu0 0.0
      %327 = vmatpush.msra.mxu0 0.0
      %328 = vmatpush.msra.mxu0 0.0
      %329 = vmatpush.msra.mxu0 0.0
      %330 = vmatpush.msra.mxu0 0.0
      %331 = vmatpush.msra.mxu0 0.0
      %332 = vmatpush.msra.mxu0 0.0
      %333 = vmatpush.msra.mxu0 0.0
      %334 = vmatpush.msra.mxu0 0.0
      %335 = vmatpush.msra.mxu0 0.0
      %336 = vmatpush.msra.mxu0 0.0
      %337 = vmatpush.msra.mxu0 0.0
      %338 = vmatpush.msra.mxu0 0.0
      %339 = vmatpush.msra.mxu0 %v299
      %340 = vmatmul.f32.gmra.mxu0 %v292
      %v341 = vpop.f32.mrf.mxu0
      %v342 = vadd.f32 %v283, %v341
      %343 = vmatmul.f32.gmra.mxu0 %v295
      %v344 = vpop.f32.mrf.mxu0
      %v345 = vadd.f32 %v286, %v344
      %346 = vdwg.mxu0
      %347 = vst [vmem:[#allocation1] ss:$2 sm:$0xff] %v205
      %v348 = vld.sshfl [vmem:[#allocation1] sm:$0xff pattern:$0x75316420]
      %v349 = vld.sshfl [vmem:[#allocation1 + $0x8] sm:$0xff pattern:$0x75316420]
      %352 = vrot.lane.b32.xlu0 %v348, 16
      %v353 = vpop.permute.xlu0 %352
      %354 = vrot.lane.b32.xlu0 %v349, 16
      %v355 = vpop.permute.xlu0 %354
      %vm356 = vcmp.lt.s32.totalorder %v217, 16
      %v357 = vsel %vm356, %v353, %v355
      %v358 = vsel %vm356, %v355, %v353
      %v360 = vperm.slane %v198, 0
      %v361 = vperm.slane %v198, 1
      %v364 = vmul.f32 %v358, %v360
      %v365 = vmul.f32 %v357, %v361
      %v367 = vsel %vm228, %v181, 0
      %v370 = vsel %vm228, %v182, 0
      %v373 = vsel %vm235, %v364, 0
      %v376 = vsel %vm235, %v365, 0
      %378 = vmatpush.msra.mxu0 0.0
      %379 = vmatpush.msra.mxu0 0.0
      %380 = vmatpush.msra.mxu0 0.0
      %381 = vmatpush.msra.mxu0 0.0
      %382 = vmatpush.msra.mxu0 0.0
      %383 = vmatpush.msra.mxu0 0.0
      %384 = vmatpush.msra.mxu0 0.0
      %385 = vmatpush.msra.mxu0 0.0
      %386 = vmatpush.msra.mxu0 0.0
      %387 = vmatpush.msra.mxu0 0.0
      %388 = vmatpush.msra.mxu0 0.0
      %389 = vmatpush.msra.mxu0 0.0
      %390 = vmatpush.msra.mxu0 0.0
      %391 = vmatpush.msra.mxu0 0.0
      %392 = vmatpush.msra.mxu0 0.0
      %393 = vmatpush.msra.mxu0 %v373
      %394 = vmatmul.f32.gmra.mxu0 %v367
      %v395 = vpop.f32.mrf.mxu0
      %v396 = vadd.f32 0.0, %v395
      %397 = vmatmul.f32.gmra.mxu0 %v370
      %v398 = vpop.f32.mrf.mxu0
      %v399 = vadd.f32 0.0, %v398
      %400 = vdwg.mxu0
      %401 = vmatpush.msra.mxu0 0.0
      %402 = vmatpush.msra.mxu0 0.0
      %403 = vmatpush.msra.mxu0 0.0
      %404 = vmatpush.msra.mxu0 0.0
      %405 = vmatpush.msra.mxu0 0.0
      %406 = vmatpush.msra.mxu0 0.0
      %407 = vmatpush.msra.mxu0 0.0
      %408 = vmatpush.msra.mxu0 0.0
      %409 = vmatpush.msra.mxu0 0.0
      %410 = vmatpush.msra.mxu0 0.0
      %411 = vmatpush.msra.mxu0 0.0
      %412 = vmatpush.msra.mxu0 0.0
      %413 = vmatpush.msra.mxu0 0.0
      %414 = vmatpush.msra.mxu0 0.0
      %415 = vmatpush.msra.mxu0 0.0
      %416 = vmatpush.msra.mxu0 %v376
      %417 = vmatmul.f32.gmra.mxu0 %v367
      %v418 = vpop.f32.mrf.mxu0
      %v419 = vadd.f32 0.0, %v418
      %420 = vmatmul.f32.gmra.mxu0 %v370
      %v421 = vpop.f32.mrf.mxu0
      %v422 = vadd.f32 0.0, %v421
      %423 = vdwg.mxu0
      %v424 = vadd.f32 %v319, %v396
      %v425 = vadd.f32 %v342, %v419
      %v426 = vadd.f32 %v322, %v399
      %v427 = vadd.f32 %v345, %v422
      %428 = vst [vmem:[#allocation1] ss:$2 sm:$0xff] %v205
      %v429 = vld.sshfl [vmem:[#allocation1] sm:$0xff pattern:$0x75316420]
      %v430 = vld.sshfl [vmem:[#allocation1 + $0x8] sm:$0xff pattern:$0x75316420]
      %433 = vrot.lane.b32.xlu0 %v429, 15
      %v434 = vpop.permute.xlu0 %433
      %435 = vrot.lane.b32.xlu0 %v430, 15
      %v436 = vpop.permute.xlu0 %435
      %vm437 = vcmp.lt.s32.totalorder %v217, 15
      %v438 = vsel %vm437, %v434, %v436
      %v439 = vsel %vm437, %v436, %v434
      %v441 = vperm.slane %v199, 0
      %v442 = vperm.slane %v199, 1
      %v445 = vmul.f32 %v439, %v441
      %v446 = vmul.f32 %v438, %v442
      %v448 = vsel %vm228, %v183, 0
      %v451 = vsel %vm228, %v184, 0
      %v454 = vsel %vm235, %v445, 0
      %v457 = vsel %vm235, %v446, 0
      %459 = vmatpush.msra.mxu0 0.0
      %460 = vmatpush.msra.mxu0 0.0
      %461 = vmatpush.msra.mxu0 0.0
      %462 = vmatpush.msra.mxu0 0.0
      %463 = vmatpush.msra.mxu0 0.0
      %464 = vmatpush.msra.mxu0 0.0
      %465 = vmatpush.msra.mxu0 0.0
      %466 = vmatpush.msra.mxu0 0.0
      %467 = vmatpush.msra.mxu0 0.0
      %468 = vmatpush.msra.mxu0 0.0
      %469 = vmatpush.msra.mxu0 0.0
      %470 = vmatpush.msra.mxu0 0.0
      %471 = vmatpush.msra.mxu0 0.0
      %472 = vmatpush.msra.mxu0 0.0
      %473 = vmatpush.msra.mxu0 0.0
      %474 = vmatpush.msra.mxu0 %v454
      %475 = vmatmul.f32.gmra.mxu0 %v448
      %v476 = vpop.f32.mrf.mxu0
      %v477 = vadd.f32 0.0, %v476
      %478 = vmatmul.f32.gmra.mxu0 %v451
      %v479 = vpop.f32.mrf.mxu0
      %v480 = vadd.f32 0.0, %v479
      %481 = vdwg.mxu0
      %482 = vmatpush.msra.mxu0 0.0
      %483 = vmatpush.msra.mxu0 0.0
      %484 = vmatpush.msra.mxu0 0.0
      %485 = vmatpush.msra.mxu0 0.0
      %486 = vmatpush.msra.mxu0 0.0
      %487 = vmatpush.msra.mxu0 0.0
      %488 = vmatpush.msra.mxu0 0.0
      %489 = vmatpush.msra.mxu0 0.0
      %490 = vmatpush.msra.mxu0 0.0
      %491 = vmatpush.msra.mxu0 0.0
      %492 = vmatpush.msra.mxu0 0.0
      %493 = vmatpush.msra.mxu0 0.0
      %494 = vmatpush.msra.mxu0 0.0
      %495 = vmatpush.msra.mxu0 0.0
      %496 = vmatpush.msra.mxu0 0.0
      %497 = vmatpush.msra.mxu0 %v457
      %498 = vmatmul.f32.gmra.mxu0 %v448
      %v499 = vpop.f32.mrf.mxu0
      %v500 = vadd.f32 0.0, %v499
      %501 = vmatmul.f32.gmra.mxu0 %v451
      %v502 = vpop.f32.mrf.mxu0
      %v503 = vadd.f32 0.0, %v502
      %504 = vdwg.mxu0
      %v505 = vadd.f32 %v424, %v477
      %v506 = vadd.f32 %v425, %v500
      %v507 = vadd.f32 %v426, %v480
      %v508 = vadd.f32 %v427, %v503
      %509 = vst [vmem:[#allocation1] ss:$2 sm:$0xff] %v205
      %v510 = vld.sshfl [vmem:[#allocation1] sm:$0xff pattern:$0x75316420]
      %v511 = vld.sshfl [vmem:[#allocation1 + $0x8] sm:$0xff pattern:$0x75316420]
      %514 = vrot.lane.b32.xlu0 %v510, 1
      %v515 = vpop.permute.xlu0 %514
      %516 = vrot.lane.b32.xlu0 %v511, 1
      %v517 = vpop.permute.xlu0 %516
      %vm518 = vcmp.lt.s32.totalorder %v217, 1
      %v519 = vsel %vm518, %v515, %v517
      %v520 = vsel %vm518, %v517, %v515
      %v522 = vperm.slane %v200, 0
      %v523 = vperm.slane %v200, 1
      %v526 = vmul.f32 %v520, %v522
      %v527 = vmul.f32 %v519, %v523
      %v529 = vsel %vm228, %v185, 0
      %v532 = vsel %vm228, %v186, 0
      %v535 = vsel %vm235, %v526, 0
      %v538 = vsel %vm235, %v527, 0
      %540 = vmatpush.msra.mxu0 0.0
      %541 = vmatpush.msra.mxu0 0.0
      %542 = vmatpush.msra.mxu0 0.0
      %543 = vmatpush.msra.mxu0 0.0
      %544 = vmatpush.msra.mxu0 0.0
      %545 = vmatpush.msra.mxu0 0.0
      %546 = vmatpush.msra.mxu0 0.0
      %547 = vmatpush.msra.mxu0 0.0
      %548 = vmatpush.msra.mxu0 0.0
      %549 = vmatpush.msra.mxu0 0.0
      %550 = vmatpush.msra.mxu0 0.0
      %551 = vmatpush.msra.mxu0 0.0
      %552 = vmatpush.msra.mxu0 0.0
      %553 = vmatpush.msra.mxu0 0.0
      %554 = vmatpush.msra.mxu0 0.0
      %555 = vmatpush.msra.mxu0 %v535
      %556 = vmatmul.f32.gmra.mxu0 %v529
      %v557 = vpop.f32.mrf.mxu0
      %v558 = vadd.f32 0.0, %v557
      %559 = vmatmul.f32.gmra.mxu0 %v532
      %v560 = vpop.f32.mrf.mxu0
      %v561 = vadd.f32 0.0, %v560
      %562 = vdwg.mxu0
      %563 = vmatpush.msra.mxu0 0.0
      %564 = vmatpush.msra.mxu0 0.0
      %565 = vmatpush.msra.mxu0 0.0
      %566 = vmatpush.msra.mxu0 0.0
      %567 = vmatpush.msra.mxu0 0.0
      %568 = vmatpush.msra.mxu0 0.0
      %569 = vmatpush.msra.mxu0 0.0
      %570 = vmatpush.msra.mxu0 0.0
      %571 = vmatpush.msra.mxu0 0.0
      %572 = vmatpush.msra.mxu0 0.0
      %573 = vmatpush.msra.mxu0 0.0
      %574 = vmatpush.msra.mxu0 0.0
      %575 = vmatpush.msra.mxu0 0.0
      %576 = vmatpush.msra.mxu0 0.0
      %577 = vmatpush.msra.mxu0 0.0
      %578 = vmatpush.msra.mxu0 %v538
      %579 = vmatmul.f32.gmra.mxu0 %v529
      %v580 = vpop.f32.mrf.mxu0
      %v581 = vadd.f32 0.0, %v580
      %582 = vmatmul.f32.gmra.mxu0 %v532
      %v583 = vpop.f32.mrf.mxu0
      %v584 = vadd.f32 0.0, %v583
      %585 = vdwg.mxu0
      %v586 = vadd.f32 %v505, %v558
      %v587 = vadd.f32 %v506, %v581
      %v588 = vadd.f32 %v507, %v561
      %v589 = vadd.f32 %v508, %v584
      %590 = vst [vmem:[#allocation1] ss:$2 sm:$0xff] %v205
      %v591 = vld.sshfl [vmem:[#allocation1] sm:$0xff pattern:$0x75316420]
      %v592 = vld.sshfl [vmem:[#allocation1 + $0x8] sm:$0xff pattern:$0x75316420]
      %595 = vrot.lane.b32.xlu0 %v591, 127
      %v596 = vpop.permute.xlu0 %595
      %597 = vrot.lane.b32.xlu0 %v592, 127
      %v598 = vpop.permute.xlu0 %597
      %vm599 = vcmp.lt.s32.totalorder %v217, 127
      %v600 = vsel %vm599, %v596, %v598
      %v601 = vsel %vm599, %v598, %v596
      %v603 = vperm.slane %v201, 0
      %v604 = vperm.slane %v201, 1
      %v607 = vmul.f32 %v600, %v603
      %v608 = vmul.f32 %v601, %v604
      %v610 = vsel %vm228, %v189, 0
      %v613 = vsel %vm228, %v190, 0
      %v616 = vsel %vm235, %v607, 0
      %v619 = vsel %vm235, %v608, 0
      %621 = vmatpush.msra.mxu0 0.0
      %622 = vmatpush.msra.mxu0 0.0
      %623 = vmatpush.msra.mxu0 0.0
      %624 = vmatpush.msra.mxu0 0.0
      %625 = vmatpush.msra.mxu0 0.0
      %626 = vmatpush.msra.mxu0 0.0
      %627 = vmatpush.msra.mxu0 0.0
      %628 = vmatpush.msra.mxu0 0.0
      %629 = vmatpush.msra.mxu0 0.0
      %630 = vmatpush.msra.mxu0 0.0
      %631 = vmatpush.msra.mxu0 0.0
      %632 = vmatpush.msra.mxu0 0.0
      %633 = vmatpush.msra.mxu0 0.0
      %634 = vmatpush.msra.mxu0 0.0
      %635 = vmatpush.msra.mxu0 0.0
      %636 = vmatpush.msra.mxu0 %v616
      %637 = vmatmul.f32.gmra.mxu0 %v610
      %v638 = vpop.f32.mrf.mxu0
      %v639 = vadd.f32 0.0, %v638
      %640 = vmatmul.f32.gmra.mxu0 %v613
      %v641 = vpop.f32.mrf.mxu0
      %v642 = vadd.f32 0.0, %v641
      %643 = vdwg.mxu0
      %644 = vmatpush.msra.mxu0 0.0
      %645 = vmatpush.msra.mxu0 0.0
      %646 = vmatpush.msra.mxu0 0.0
      %647 = vmatpush.msra.mxu0 0.0
      %648 = vmatpush.msra.mxu0 0.0
      %649 = vmatpush.msra.mxu0 0.0
      %650 = vmatpush.msra.mxu0 0.0
      %651 = vmatpush.msra.mxu0 0.0
      %652 = vmatpush.msra.mxu0 0.0
      %653 = vmatpush.msra.mxu0 0.0
      %654 = vmatpush.msra.mxu0 0.0
      %655 = vmatpush.msra.mxu0 0.0
      %656 = vmatpush.msra.mxu0 0.0
      %657 = vmatpush.msra.mxu0 0.0
      %658 = vmatpush.msra.mxu0 0.0
      %659 = vmatpush.msra.mxu0 %v619
      %660 = vmatmul.f32.gmra.mxu0 %v610
      %v661 = vpop.f32.mrf.mxu0
      %v662 = vadd.f32 0.0, %v661
      %663 = vmatmul.f32.gmra.mxu0 %v613
      %v664 = vpop.f32.mrf.mxu0
      %v665 = vadd.f32 0.0, %v664
      %666 = vdwg.mxu0
      %v667 = vadd.f32 %v586, %v639
      %v668 = vadd.f32 %v587, %v662
      %v669 = vadd.f32 %v588, %v642
      %v670 = vadd.f32 %v589, %v665
      %671 = vst [vmem:[#allocation1] ss:$2 sm:$0xff] %v205
      %v672 = vld.sshfl [vmem:[#allocation1] sm:$0xff pattern:$0x75316420]
      %v673 = vld.sshfl [vmem:[#allocation1 + $0x8] sm:$0xff pattern:$0x75316420]
      %676 = vrot.lane.b32.xlu0 %v672, 113
      %v677 = vpop.permute.xlu0 %676
      %678 = vrot.lane.b32.xlu0 %v673, 113
      %v679 = vpop.permute.xlu0 %678
      %vm680 = vcmp.lt.s32.totalorder %v217, 113
      %v681 = vsel %vm680, %v677, %v679
      %v682 = vsel %vm680, %v679, %v677
      %v684 = vperm.slane %v202, 0
      %v685 = vperm.slane %v202, 1
      %v688 = vmul.f32 %v681, %v684
      %v689 = vmul.f32 %v682, %v685
      %v691 = vsel %vm228, %v191, 0
      %v694 = vsel %vm228, %v192, 0
      %v697 = vsel %vm235, %v688, 0
      %v700 = vsel %vm235, %v689, 0
      %702 = vmatpush.msra.mxu0 0.0
      %703 = vmatpush.msra.mxu0 0.0
      %704 = vmatpush.msra.mxu0 0.0
      %705 = vmatpush.msra.mxu0 0.0
      %706 = vmatpush.msra.mxu0 0.0
      %707 = vmatpush.msra.mxu0 0.0
      %708 = vmatpush.msra.mxu0 0.0
      %709 = vmatpush.msra.mxu0 0.0
      %710 = vmatpush.msra.mxu0 0.0
      %711 = vmatpush.msra.mxu0 0.0
      %712 = vmatpush.msra.mxu0 0.0
      %713 = vmatpush.msra.mxu0 0.0
      %714 = vmatpush.msra.mxu0 0.0
      %715 = vmatpush.msra.mxu0 0.0
      %716 = vmatpush.msra.mxu0 0.0
      %717 = vmatpush.msra.mxu0 %v697
      %718 = vmatmul.f32.gmra.mxu0 %v691
      %v719 = vpop.f32.mrf.mxu0
      %v720 = vadd.f32 0.0, %v719
      %721 = vmatmul.f32.gmra.mxu0 %v694
      %v722 = vpop.f32.mrf.mxu0
      %v723 = vadd.f32 0.0, %v722
      %724 = vdwg.mxu0
      %725 = vmatpush.msra.mxu0 0.0
      %726 = vmatpush.msra.mxu0 0.0
      %727 = vmatpush.msra.mxu0 0.0
      %728 = vmatpush.msra.mxu0 0.0
      %729 = vmatpush.msra.mxu0 0.0
      %730 = vmatpush.msra.mxu0 0.0
      %731 = vmatpush.msra.mxu0 0.0
      %732 = vmatpush.msra.mxu0 0.0
      %733 = vmatpush.msra.mxu0 0.0
      %734 = vmatpush.msra.mxu0 0.0
      %735 = vmatpush.msra.mxu0 0.0
      %736 = vmatpush.msra.mxu0 0.0
      %737 = vmatpush.msra.mxu0 0.0
      %738 = vmatpush.msra.mxu0 0.0
      %739 = vmatpush.msra.mxu0 0.0
      %740 = vmatpush.msra.mxu0 %v700
      %741 = vmatmul.f32.gmra.mxu0 %v691
      %v742 = vpop.f32.mrf.mxu0
      %v743 = vadd.f32 0.0, %v742
      %744 = vmatmul.f32.gmra.mxu0 %v694
      %v745 = vpop.f32.mrf.mxu0
      %v746 = vadd.f32 0.0, %v745
      %747 = vdwg.mxu0
      %v748 = vadd.f32 %v667, %v720
      %v749 = vadd.f32 %v668, %v743
      %v750 = vadd.f32 %v669, %v723
      %v751 = vadd.f32 %v670, %v746
      %752 = vst [vmem:[#allocation1] ss:$2 sm:$0xff] %v205
      %v753 = vld.sshfl [vmem:[#allocation1] sm:$0xff pattern:$0x75316420]
      %v754 = vld.sshfl [vmem:[#allocation1 + $0x8] sm:$0xff pattern:$0x75316420]
      %757 = vrot.lane.b32.xlu0 %v753, 112
      %v758 = vpop.permute.xlu0 %757
      %759 = vrot.lane.b32.xlu0 %v754, 112
      %v760 = vpop.permute.xlu0 %759
      %vm761 = vcmp.lt.s32.totalorder %v217, 112
      %v762 = vsel %vm761, %v758, %v760
      %v763 = vsel %vm761, %v760, %v758
      %v765 = vperm.slane %v203, 0
      %v766 = vperm.slane %v203, 1
      %v769 = vmul.f32 %v762, %v765
      %v770 = vmul.f32 %v763, %v766
      %v772 = vsel %vm228, %v193, 0
      %v775 = vsel %vm228, %v194, 0
      %v778 = vsel %vm235, %v769, 0
      %v781 = vsel %vm235, %v770, 0
      %783 = vmatpush.msra.mxu0 0.0
      %784 = vmatpush.msra.mxu0 0.0
      %785 = vmatpush.msra.mxu0 0.0
      %786 = vmatpush.msra.mxu0 0.0
      %787 = vmatpush.msra.mxu0 0.0
      %788 = vmatpush.msra.mxu0 0.0
      %789 = vmatpush.msra.mxu0 0.0
      %790 = vmatpush.msra.mxu0 0.0
      %791 = vmatpush.msra.mxu0 0.0
      %792 = vmatpush.msra.mxu0 0.0
      %793 = vmatpush.msra.mxu0 0.0
      %794 = vmatpush.msra.mxu0 0.0
      %795 = vmatpush.msra.mxu0 0.0
      %796 = vmatpush.msra.mxu0 0.0
      %797 = vmatpush.msra.mxu0 0.0
      %798 = vmatpush.msra.mxu0 %v778
      %799 = vmatmul.f32.gmra.mxu0 %v772
      %v800 = vpop.f32.mrf.mxu0
      %v801 = vadd.f32 0.0, %v800
      %802 = vmatmul.f32.gmra.mxu0 %v775
      %v803 = vpop.f32.mrf.mxu0
      %v804 = vadd.f32 0.0, %v803
      %805 = vdwg.mxu0
      %806 = vmatpush.msra.mxu0 0.0
      %807 = vmatpush.msra.mxu0 0.0
      %808 = vmatpush.msra.mxu0 0.0
      %809 = vmatpush.msra.mxu0 0.0
      %810 = vmatpush.msra.mxu0 0.0
      %811 = vmatpush.msra.mxu0 0.0
      %812 = vmatpush.msra.mxu0 0.0
      %813 = vmatpush.msra.mxu0 0.0
      %814 = vmatpush.msra.mxu0 0.0
      %815 = vmatpush.msra.mxu0 0.0
      %816 = vmatpush.msra.mxu0 0.0
      %817 = vmatpush.msra.mxu0 0.0
      %818 = vmatpush.msra.mxu0 0.0
      %819 = vmatpush.msra.mxu0 0.0
      %820 = vmatpush.msra.mxu0 0.0
      %821 = vmatpush.msra.mxu0 %v781
      %822 = vmatmul.f32.gmra.mxu0 %v772
      %v823 = vpop.f32.mrf.mxu0
      %v824 = vadd.f32 0.0, %v823
      %825 = vmatmul.f32.gmra.mxu0 %v775
      %v826 = vpop.f32.mrf.mxu0
      %v827 = vadd.f32 0.0, %v826
      %828 = vdwg.mxu0
      %v829 = vadd.f32 %v748, %v801
      %v830 = vadd.f32 %v749, %v824
      %v831 = vadd.f32 %v750, %v804
      %v832 = vadd.f32 %v751, %v827
      %833 = vst [vmem:[#allocation1] ss:$2 sm:$0xff] %v205
      %v834 = vld.sshfl [vmem:[#allocation1] sm:$0xff pattern:$0x75316420]
      %v835 = vld.sshfl [vmem:[#allocation1 + $0x8] sm:$0xff pattern:$0x75316420]
      %838 = vrot.lane.b32.xlu0 %v834, 111
      %v839 = vpop.permute.xlu0 %838
      %840 = vrot.lane.b32.xlu0 %v835, 111
      %v841 = vpop.permute.xlu0 %840
      %vm842 = vcmp.lt.s32.totalorder %v217, 111
      %v843 = vsel %vm842, %v839, %v841
      %v844 = vsel %vm842, %v841, %v839
      %v846 = vperm.slane %v204, 0
      %v847 = vperm.slane %v204, 1
      %v850 = vmul.f32 %v843, %v846
      %v851 = vmul.f32 %v844, %v847
      %v853 = vsel %vm228, %v195, 0
      %v856 = vsel %vm228, %v196, 0
      %v859 = vsel %vm235, %v850, 0
      %v862 = vsel %vm235, %v851, 0
      %864 = vmatpush.msra.mxu0 0.0
      %865 = vmatpush.msra.mxu0 0.0
      %866 = vmatpush.msra.mxu0 0.0
      %867 = vmatpush.msra.mxu0 0.0
      %868 = vmatpush.msra.mxu0 0.0
      %869 = vmatpush.msra.mxu0 0.0
      %870 = vmatpush.msra.mxu0 0.0
      %871 = vmatpush.msra.mxu0 0.0
      %872 = vmatpush.msra.mxu0 0.0
      %873 = vmatpush.msra.mxu0 0.0
      %874 = vmatpush.msra.mxu0 0.0
      %875 = vmatpush.msra.mxu0 0.0
      %876 = vmatpush.msra.mxu0 0.0
      %877 = vmatpush.msra.mxu0 0.0
      %878 = vmatpush.msra.mxu0 0.0
      %879 = vmatpush.msra.mxu0 %v859
      %880 = vmatmul.f32.gmra.mxu0 %v853
      %v881 = vpop.f32.mrf.mxu0
      %v882 = vadd.f32 0.0, %v881
      %883 = vmatmul.f32.gmra.mxu0 %v856
      %v884 = vpop.f32.mrf.mxu0
      %v885 = vadd.f32 0.0, %v884
      %886 = vdwg.mxu0
      %887 = vmatpush.msra.mxu0 0.0
      %888 = vmatpush.msra.mxu0 0.0
      %889 = vmatpush.msra.mxu0 0.0
      %890 = vmatpush.msra.mxu0 0.0
      %891 = vmatpush.msra.mxu0 0.0
      %892 = vmatpush.msra.mxu0 0.0
      %893 = vmatpush.msra.mxu0 0.0
      %894 = vmatpush.msra.mxu0 0.0
      %895 = vmatpush.msra.mxu0 0.0
      %896 = vmatpush.msra.mxu0 0.0
      %897 = vmatpush.msra.mxu0 0.0
      %898 = vmatpush.msra.mxu0 0.0
      %899 = vmatpush.msra.mxu0 0.0
      %900 = vmatpush.msra.mxu0 0.0
      %901 = vmatpush.msra.mxu0 0.0
      %902 = vmatpush.msra.mxu0 %v862
      %903 = vmatmul.f32.gmra.mxu0 %v853
      %v904 = vpop.f32.mrf.mxu0
      %v905 = vadd.f32 0.0, %v904
      %906 = vmatmul.f32.gmra.mxu0 %v856
      %v907 = vpop.f32.mrf.mxu0
      %v908 = vadd.f32 0.0, %v907
      %909 = vdwg.mxu0
      %v910 = vadd.f32 %v829, %v882
      %v911 = vadd.f32 %v830, %v905
      %v912 = vadd.f32 %v831, %v885
      %v913 = vadd.f32 %v832, %v908
      %vm914 = vcmp.ge.f32.partialorder %v910, 0.0
      %vm915 = vcmp.ge.f32.partialorder %v911, 0.0
      %vm916 = vcmp.ge.f32.partialorder %v912, 0.0
      %vm917 = vcmp.ge.f32.partialorder %v913, 0.0
      %v918 = vmul.f32 %v910, 0.01
      %v919 = vmul.f32 %v911, 0.01
      %v920 = vmul.f32 %v912, 0.01
      %v921 = vmul.f32 %v913, 0.01
      %v922 = vsel %vm914, %v910, %v918
      %v923 = vsel %vm915, %v911, %v919
      %v924 = vsel %vm916, %v912, %v920
      %v925 = vsel %vm917, %v913, %v921
      %s926 = scalar_lea.vmem %s170, 8
      %v927 = vld [vmem:[%s926] sm:$0x77]
      %929 = vst [vmem:[#allocation1] ss:$2 sm:$0xff] %v927
      %v930 = vld.sshfl [vmem:[#allocation1] sm:$0xff pattern:$0x75316420]
      %v931 = vld.sshfl [vmem:[#allocation1 + $0x8] sm:$0xff pattern:$0x75316420]
      %934 = vrot.lane.b32.xlu0 %v930, 17
      %v935 = vpop.permute.xlu0 %934
      %936 = vrot.lane.b32.xlu0 %v931, 17
      %v937 = vpop.permute.xlu0 %936
      %v938 = vsel %vm218, %v935, %v937
      %v939 = vsel %vm218, %v937, %v935
      %v940 = vmul.f32 %v939, %v222
      %v941 = vmul.f32 %v938, %v223
      %v943 = vsel %vm235, %v940, 0
      %v946 = vsel %vm235, %v941, 0
      %948 = vmatpush.msra.mxu0 0.0
      %949 = vmatpush.msra.mxu0 0.0
      %950 = vmatpush.msra.mxu0 0.0
      %951 = vmatpush.msra.mxu0 0.0
      %952 = vmatpush.msra.mxu0 0.0
      %953 = vmatpush.msra.mxu0 0.0
      %954 = vmatpush.msra.mxu0 0.0
      %955 = vmatpush.msra.mxu0 0.0
      %956 = vmatpush.msra.mxu0 0.0
      %957 = vmatpush.msra.mxu0 0.0
      %958 = vmatpush.msra.mxu0 0.0
      %959 = vmatpush.msra.mxu0 0.0
      %960 = vmatpush.msra.mxu0 0.0
      %961 = vmatpush.msra.mxu0 0.0
      %962 = vmatpush.msra.mxu0 0.0
      %963 = vmatpush.msra.mxu0 %v943
      %964 = vmatmul.f32.gmra.mxu0 %v230
      %v965 = vpop.f32.mrf.mxu0
      %v966 = vadd.f32 0.0, %v965
      %967 = vmatmul.f32.gmra.mxu0 %v233
      %v968 = vpop.f32.mrf.mxu0
      %v969 = vadd.f32 0.0, %v968
      %970 = vdwg.mxu0
      %971 = vmatpush.msra.mxu0 0.0
      %972 = vmatpush.msra.mxu0 0.0
      %973 = vmatpush.msra.mxu0 0.0
      %974 = vmatpush.msra.mxu0 0.0
      %975 = vmatpush.msra.mxu0 0.0
      %976 = vmatpush.msra.mxu0 0.0
      %977 = vmatpush.msra.mxu0 0.0
      %978 = vmatpush.msra.mxu0 0.0
      %979 = vmatpush.msra.mxu0 0.0
      %980 = vmatpush.msra.mxu0 0.0
      %981 = vmatpush.msra.mxu0 0.0
      %982 = vmatpush.msra.mxu0 0.0
      %983 = vmatpush.msra.mxu0 0.0
      %984 = vmatpush.msra.mxu0 0.0
      %985 = vmatpush.msra.mxu0 0.0
      %986 = vmatpush.msra.mxu0 %v946
      %987 = vmatmul.f32.gmra.mxu0 %v230
      %v988 = vpop.f32.mrf.mxu0
      %v989 = vadd.f32 0.0, %v988
      %990 = vmatmul.f32.gmra.mxu0 %v233
      %v991 = vpop.f32.mrf.mxu0
      %v992 = vadd.f32 0.0, %v991
      %993 = vdwg.mxu0
      %994 = vst [vmem:[#allocation1] ss:$2 sm:$0xff] %v927
      %v995 = vld.sshfl [vmem:[#allocation1] sm:$0xff pattern:$0x75316420]
      %v996 = vld.sshfl [vmem:[#allocation1 + $0x8] sm:$0xff pattern:$0x75316420]
      %v997 = vsel %vm235, %v995, 0
      %v999 = vsel %vm235, %v996, 0
      %1001 = vmatpush.msra.mxu0 0.0
      %1002 = vmatpush.msra.mxu0 0.0
      %1003 = vmatpush.msra.mxu0 0.0
      %1004 = vmatpush.msra.mxu0 0.0
      %1005 = vmatpush.msra.mxu0 0.0
      %1006 = vmatpush.msra.mxu0 0.0
      %1007 = vmatpush.msra.mxu0 0.0
      %1008 = vmatpush.msra.mxu0 0.0
      %1009 = vmatpush.msra.mxu0 0.0
      %1010 = vmatpush.msra.mxu0 0.0
      %1011 = vmatpush.msra.mxu0 0.0
      %1012 = vmatpush.msra.mxu0 0.0
      %1013 = vmatpush.msra.mxu0 0.0
      %1014 = vmatpush.msra.mxu0 0.0
      %1015 = vmatpush.msra.mxu0 0.0
      %1016 = vmatpush.msra.mxu0 %v997
      %1017 = vmatmul.f32.gmra.mxu0 %v292
      %v1018 = vpop.f32.mrf.mxu0
      %v1019 = vadd.f32 %v966, %v1018
      %1020 = vmatmul.f32.gmra.mxu0 %v295
      %v1021 = vpop.f32.mrf.mxu0
      %v1022 = vadd.f32 %v969, %v1021
      %1023 = vdwg.mxu0
      %1024 = vmatpush.msra.mxu0 0.0
      %1025 = vmatpush.msra.mxu0 0.0
      %1026 = vmatpush.msra.mxu0 0.0
      %1027 = vmatpush.msra.mxu0 0.0
      %1028 = vmatpush.msra.mxu0 0.0
      %1029 = vmatpush.msra.mxu0 0.0
      %1030 = vmatpush.msra.mxu0 0.0
      %1031 = vmatpush.msra.mxu0 0.0
      %1032 = vmatpush.msra.mxu0 0.0
      %1033 = vmatpush.msra.mxu0 0.0
      %1034 = vmatpush.msra.mxu0 0.0
      %1035 = vmatpush.msra.mxu0 0.0
      %1036 = vmatpush.msra.mxu0 0.0
      %1037 = vmatpush.msra.mxu0 0.0
      %1038 = vmatpush.msra.mxu0 0.0
      %1039 = vmatpush.msra.mxu0 %v999
      %1040 = vmatmul.f32.gmra.mxu0 %v292
      %v1041 = vpop.f32.mrf.mxu0
      %v1042 = vadd.f32 %v989, %v1041
      %1043 = vmatmul.f32.gmra.mxu0 %v295
      %v1044 = vpop.f32.mrf.mxu0
      %v1045 = vadd.f32 %v992, %v1044
      %1046 = vdwg.mxu0
      %1047 = vst [vmem:[#allocation1] ss:$2 sm:$0xff] %v927
      %v1048 = vld.sshfl [vmem:[#allocation1] sm:$0xff pattern:$0x75316420]
      %v1049 = vld.sshfl [vmem:[#allocation1 + $0x8] sm:$0xff pattern:$0x75316420]
      %1052 = vrot.lane.b32.xlu0 %v1048, 16
      %v1053 = vpop.permute.xlu0 %1052
      %1054 = vrot.lane.b32.xlu0 %v1049, 16
      %v1055 = vpop.permute.xlu0 %1054
      %v1056 = vsel %vm356, %v1053, %v1055
      %v1057 = vsel %vm356, %v1055, %v1053
      %v1058 = vmul.f32 %v1057, %v360
      %v1059 = vmul.f32 %v1056, %v361
      %v1061 = vsel %vm235, %v1058, 0
      %v1064 = vsel %vm235, %v1059, 0
      %1066 = vmatpush.msra.mxu0 0.0
      %1067 = vmatpush.msra.mxu0 0.0
      %1068 = vmatpush.msra.mxu0 0.0
      %1069 = vmatpush.msra.mxu0 0.0
      %1070 = vmatpush.msra.mxu0 0.0
      %1071 = vmatpush.msra.mxu0 0.0
      %1072 = vmatpush.msra.mxu0 0.0
      %1073 = vmatpush.msra.mxu0 0.0
      %1074 = vmatpush.msra.mxu0 0.0
      %1075 = vmatpush.msra.mxu0 0.0
      %1076 = vmatpush.msra.mxu0 0.0
      %1077 = vmatpush.msra.mxu0 0.0
      %1078 = vmatpush.msra.mxu0 0.0
      %1079 = vmatpush.msra.mxu0 0.0
      %1080 = vmatpush.msra.mxu0 0.0
      %1081 = vmatpush.msra.mxu0 %v1061
      %1082 = vmatmul.f32.gmra.mxu0 %v367
      %v1083 = vpop.f32.mrf.mxu0
      %v1084 = vadd.f32 0.0, %v1083
      %1085 = vmatmul.f32.gmra.mxu0 %v370
      %v1086 = vpop.f32.mrf.mxu0
      %v1087 = vadd.f32 0.0, %v1086
      %1088 = vdwg.mxu0
      %1089 = vmatpush.msra.mxu0 0.0
      %1090 = vmatpush.msra.mxu0 0.0
      %1091 = vmatpush.msra.mxu0 0.0
      %1092 = vmatpush.msra.mxu0 0.0
      %1093 = vmatpush.msra.mxu0 0.0
      %1094 = vmatpush.msra.mxu0 0.0
      %1095 = vmatpush.msra.mxu0 0.0
      %1096 = vmatpush.msra.mxu0 0.0
      %1097 = vmatpush.msra.mxu0 0.0
      %1098 = vmatpush.msra.mxu0 0.0
      %1099 = vmatpush.msra.mxu0 0.0
      %1100 = vmatpush.msra.mxu0 0.0
      %1101 = vmatpush.msra.mxu0 0.0
      %1102 = vmatpush.msra.mxu0 0.0
      %1103 = vmatpush.msra.mxu0 0.0
      %1104 = vmatpush.msra.mxu0 %v1064
      %1105 = vmatmul.f32.gmra.mxu0 %v367
      %v1106 = vpop.f32.mrf.mxu0
      %v1107 = vadd.f32 0.0, %v1106
      %1108 = vmatmul.f32.gmra.mxu0 %v370
      %v1109 = vpop.f32.mrf.mxu0
      %v1110 = vadd.f32 0.0, %v1109
      %1111 = vdwg.mxu0
      %v1112 = vadd.f32 %v1019, %v1084
      %v1113 = vadd.f32 %v1042, %v1107
      %v1114 = vadd.f32 %v1022, %v1087
      %v1115 = vadd.f32 %v1045, %v1110
      %1116 = vst [vmem:[#allocation1] ss:$2 sm:$0xff] %v927
      %v1117 = vld.sshfl [vmem:[#allocation1] sm:$0xff pattern:$0x75316420]
      %v1118 = vld.sshfl [vmem:[#allocation1 + $0x8] sm:$0xff pattern:$0x75316420]
      %1121 = vrot.lane.b32.xlu0 %v1117, 15
      %v1122 = vpop.permute.xlu0 %1121
      %1123 = vrot.lane.b32.xlu0 %v1118, 15
      %v1124 = vpop.permute.xlu0 %1123
      %v1125 = vsel %vm437, %v1122, %v1124
      %v1126 = vsel %vm437, %v1124, %v1122
      %v1127 = vmul.f32 %v1126, %v441
      %v1128 = vmul.f32 %v1125, %v442
      %v1130 = vsel %vm235, %v1127, 0
      %v1133 = vsel %vm235, %v1128, 0
      %1135 = vmatpush.msra.mxu0 0.0
      %1136 = vmatpush.msra.mxu0 0.0
      %1137 = vmatpush.msra.mxu0 0.0
      %1138 = vmatpush.msra.mxu0 0.0
      %1139 = vmatpush.msra.mxu0 0.0
      %1140 = vmatpush.msra.mxu0 0.0
      %1141 = vmatpush.msra.mxu0 0.0
      %1142 = vmatpush.msra.mxu0 0.0
      %1143 = vmatpush.msra.mxu0 0.0
      %1144 = vmatpush.msra.mxu0 0.0
      %1145 = vmatpush.msra.mxu0 0.0
      %1146 = vmatpush.msra.mxu0 0.0
      %1147 = vmatpush.msra.mxu0 0.0
      %1148 = vmatpush.msra.mxu0 0.0
      %1149 = vmatpush.msra.mxu0 0.0
      %1150 = vmatpush.msra.mxu0 %v1130
      %1151 = vmatmul.f32.gmra.mxu0 %v448
      %v1152 = vpop.f32.mrf.mxu0
      %v1153 = vadd.f32 0.0, %v1152
      %1154 = vmatmul.f32.gmra.mxu0 %v451
      %v1155 = vpop.f32.mrf.mxu0
      %v1156 = vadd.f32 0.0, %v1155
      %1157 = vdwg.mxu0
      %1158 = vmatpush.msra.mxu0 0.0
      %1159 = vmatpush.msra.mxu0 0.0
      %1160 = vmatpush.msra.mxu0 0.0
      %1161 = vmatpush.msra.mxu0 0.0
      %1162 = vmatpush.msra.mxu0 0.0
      %1163 = vmatpush.msra.mxu0 0.0
      %1164 = vmatpush.msra.mxu0 0.0
      %1165 = vmatpush.msra.mxu0 0.0
      %1166 = vmatpush.msra.mxu0 0.0
      %1167 = vmatpush.msra.mxu0 0.0
      %1168 = vmatpush.msra.mxu0 0.0
      %1169 = vmatpush.msra.mxu0 0.0
      %1170 = vmatpush.msra.mxu0 0.0
      %1171 = vmatpush.msra.mxu0 0.0
      %1172 = vmatpush.msra.mxu0 0.0
      %1173 = vmatpush.msra.mxu0 %v1133
      %1174 = vmatmul.f32.gmra.mxu0 %v448
      %v1175 = vpop.f32.mrf.mxu0
      %v1176 = vadd.f32 0.0, %v1175
      %1177 = vmatmul.f32.gmra.mxu0 %v451
      %v1178 = vpop.f32.mrf.mxu0
      %v1179 = vadd.f32 0.0, %v1178
      %1180 = vdwg.mxu0
      %v1181 = vadd.f32 %v1112, %v1153
      %v1182 = vadd.f32 %v1113, %v1176
      %v1183 = vadd.f32 %v1114, %v1156
      %v1184 = vadd.f32 %v1115, %v1179
      %1185 = vst [vmem:[#allocation1] ss:$2 sm:$0xff] %v927
      %v1186 = vld.sshfl [vmem:[#allocation1] sm:$0xff pattern:$0x75316420]
      %v1187 = vld.sshfl [vmem:[#allocation1 + $0x8] sm:$0xff pattern:$0x75316420]
      %1190 = vrot.lane.b32.xlu0 %v1186, 1
      %v1191 = vpop.permute.xlu0 %1190
      %1192 = vrot.lane.b32.xlu0 %v1187, 1
      %v1193 = vpop.permute.xlu0 %1192
      %v1194 = vsel %vm518, %v1191, %v1193
      %v1195 = vsel %vm518, %v1193, %v1191
      %v1196 = vmul.f32 %v1195, %v522
      %v1197 = vmul.f32 %v1194, %v523
      %v1199 = vsel %vm235, %v1196, 0
      %v1202 = vsel %vm235, %v1197, 0
      %1204 = vmatpush.msra.mxu0 0.0
      %1205 = vmatpush.msra.mxu0 0.0
      %1206 = vmatpush.msra.mxu0 0.0
      %1207 = vmatpush.msra.mxu0 0.0
      %1208 = vmatpush.msra.mxu0 0.0
      %1209 = vmatpush.msra.mxu0 0.0
      %1210 = vmatpush.msra.mxu0 0.0
      %1211 = vmatpush.msra.mxu0 0.0
      %1212 = vmatpush.msra.mxu0 0.0
      %1213 = vmatpush.msra.mxu0 0.0
      %1214 = vmatpush.msra.mxu0 0.0
      %1215 = vmatpush.msra.mxu0 0.0
      %1216 = vmatpush.msra.mxu0 0.0
      %1217 = vmatpush.msra.mxu0 0.0
      %1218 = vmatpush.msra.mxu0 0.0
      %1219 = vmatpush.msra.mxu0 %v1199
      %1220 = vmatmul.f32.gmra.mxu0 %v529
      %v1221 = vpop.f32.mrf.mxu0
      %v1222 = vadd.f32 0.0, %v1221
      %1223 = vmatmul.f32.gmra.mxu0 %v532
      %v1224 = vpop.f32.mrf.mxu0
      %v1225 = vadd.f32 0.0, %v1224
      %1226 = vdwg.mxu0
      %1227 = vmatpush.msra.mxu0 0.0
      %1228 = vmatpush.msra.mxu0 0.0
      %1229 = vmatpush.msra.mxu0 0.0
      %1230 = vmatpush.msra.mxu0 0.0
      %1231 = vmatpush.msra.mxu0 0.0
      %1232 = vmatpush.msra.mxu0 0.0
      %1233 = vmatpush.msra.mxu0 0.0
      %1234 = vmatpush.msra.mxu0 0.0
      %1235 = vmatpush.msra.mxu0 0.0
      %1236 = vmatpush.msra.mxu0 0.0
      %1237 = vmatpush.msra.mxu0 0.0
      %1238 = vmatpush.msra.mxu0 0.0
      %1239 = vmatpush.msra.mxu0 0.0
      %1240 = vmatpush.msra.mxu0 0.0
      %1241 = vmatpush.msra.mxu0 0.0
      %1242 = vmatpush.msra.mxu0 %v1202
      %1243 = vmatmul.f32.gmra.mxu0 %v529
      %v1244 = vpop.f32.mrf.mxu0
      %v1245 = vadd.f32 0.0, %v1244
      %1246 = vmatmul.f32.gmra.mxu0 %v532
      %v1247 = vpop.f32.mrf.mxu0
      %v1248 = vadd.f32 0.0, %v1247
      %1249 = vdwg.mxu0
      %v1250 = vadd.f32 %v1181, %v1222
      %v1251 = vadd.f32 %v1182, %v1245
      %v1252 = vadd.f32 %v1183, %v1225
      %v1253 = vadd.f32 %v1184, %v1248
      %1254 = vst [vmem:[#allocation1] ss:$2 sm:$0xff] %v927
      %v1255 = vld.sshfl [vmem:[#allocation1] sm:$0xff pattern:$0x75316420]
      %v1256 = vld.sshfl [vmem:[#allocation1 + $0x8] sm:$0xff pattern:$0x75316420]
      %1259 = vrot.lane.b32.xlu0 %v1255, 127
      %v1260 = vpop.permute.xlu0 %1259
      %1261 = vrot.lane.b32.xlu0 %v1256, 127
      %v1262 = vpop.permute.xlu0 %1261
      %v1263 = vsel %vm599, %v1260, %v1262
      %v1264 = vsel %vm599, %v1262, %v1260
      %v1265 = vmul.f32 %v1263, %v603
      %v1266 = vmul.f32 %v1264, %v604
      %v1268 = vsel %vm235, %v1265, 0
      %v1271 = vsel %vm235, %v1266, 0
      %1273 = vmatpush.msra.mxu0 0.0
      %1274 = vmatpush.msra.mxu0 0.0
      %1275 = vmatpush.msra.mxu0 0.0
      %1276 = vmatpush.msra.mxu0 0.0
      %1277 = vmatpush.msra.mxu0 0.0
      %1278 = vmatpush.msra.mxu0 0.0
      %1279 = vmatpush.msra.mxu0 0.0
      %1280 = vmatpush.msra.mxu0 0.0
      %1281 = vmatpush.msra.mxu0 0.0
      %1282 = vmatpush.msra.mxu0 0.0
      %1283 = vmatpush.msra.mxu0 0.0
      %1284 = vmatpush.msra.mxu0 0.0
      %1285 = vmatpush.msra.mxu0 0.0
      %1286 = vmatpush.msra.mxu0 0.0
      %1287 = vmatpush.msra.mxu0 0.0
      %1288 = vmatpush.msra.mxu0 %v1268
      %1289 = vmatmul.f32.gmra.mxu0 %v610
      %v1290 = vpop.f32.mrf.mxu0
      %v1291 = vadd.f32 0.0, %v1290
      %1292 = vmatmul.f32.gmra.mxu0 %v613
      %v1293 = vpop.f32.mrf.mxu0
      %v1294 = vadd.f32 0.0, %v1293
      %1295 = vdwg.mxu0
      %1296 = vmatpush.msra.mxu0 0.0
      %1297 = vmatpush.msra.mxu0 0.0
      %1298 = vmatpush.msra.mxu0 0.0
      %1299 = vmatpush.msra.mxu0 0.0
      %1300 = vmatpush.msra.mxu0 0.0
      %1301 = vmatpush.msra.mxu0 0.0
      %1302 = vmatpush.msra.mxu0 0.0
      %1303 = vmatpush.msra.mxu0 0.0
      %1304 = vmatpush.msra.mxu0 0.0
      %1305 = vmatpush.msra.mxu0 0.0
      %1306 = vmatpush.msra.mxu0 0.0
      %1307 = vmatpush.msra.mxu0 0.0
      %1308 = vmatpush.msra.mxu0 0.0
      %1309 = vmatpush.msra.mxu0 0.0
      %1310 = vmatpush.msra.mxu0 0.0
      %1311 = vmatpush.msra.mxu0 %v1271
      %1312 = vmatmul.f32.gmra.mxu0 %v610
      %v1313 = vpop.f32.mrf.mxu0
      %v1314 = vadd.f32 0.0, %v1313
      %1315 = vmatmul.f32.gmra.mxu0 %v613
      %v1316 = vpop.f32.mrf.mxu0
      %v1317 = vadd.f32 0.0, %v1316
      %1318 = vdwg.mxu0
      %v1319 = vadd.f32 %v1250, %v1291
      %v1320 = vadd.f32 %v1251, %v1314
      %v1321 = vadd.f32 %v1252, %v1294
      %v1322 = vadd.f32 %v1253, %v1317
      %1323 = vst [vmem:[#allocation1] ss:$2 sm:$0xff] %v927
      %v1324 = vld.sshfl [vmem:[#allocation1] sm:$0xff pattern:$0x75316420]
      %v1325 = vld.sshfl [vmem:[#allocation1 + $0x8] sm:$0xff pattern:$0x75316420]
      %1328 = vrot.lane.b32.xlu0 %v1324, 113
      %v1329 = vpop.permute.xlu0 %1328
      %1330 = vrot.lane.b32.xlu0 %v1325, 113
      %v1331 = vpop.permute.xlu0 %1330
      %v1332 = vsel %vm680, %v1329, %v1331
      %v1333 = vsel %vm680, %v1331, %v1329
      %v1334 = vmul.f32 %v1332, %v684
      %v1335 = vmul.f32 %v1333, %v685
      %v1337 = vsel %vm235, %v1334, 0
      %v1340 = vsel %vm235, %v1335, 0
      %1342 = vmatpush.msra.mxu0 0.0
      %1343 = vmatpush.msra.mxu0 0.0
      %1344 = vmatpush.msra.mxu0 0.0
      %1345 = vmatpush.msra.mxu0 0.0
      %1346 = vmatpush.msra.mxu0 0.0
      %1347 = vmatpush.msra.mxu0 0.0
      %1348 = vmatpush.msra.mxu0 0.0
      %1349 = vmatpush.msra.mxu0 0.0
      %1350 = vmatpush.msra.mxu0 0.0
      %1351 = vmatpush.msra.mxu0 0.0
      %1352 = vmatpush.msra.mxu0 0.0
      %1353 = vmatpush.msra.mxu0 0.0
      %1354 = vmatpush.msra.mxu0 0.0
      %1355 = vmatpush.msra.mxu0 0.0
      %1356 = vmatpush.msra.mxu0 0.0
      %1357 = vmatpush.msra.mxu0 %v1337
      %1358 = vmatmul.f32.gmra.mxu0 %v691
      %v1359 = vpop.f32.mrf.mxu0
      %v1360 = vadd.f32 0.0, %v1359
      %1361 = vmatmul.f32.gmra.mxu0 %v694
      %v1362 = vpop.f32.mrf.mxu0
      %v1363 = vadd.f32 0.0, %v1362
      %1364 = vdwg.mxu0
      %1365 = vmatpush.msra.mxu0 0.0
      %1366 = vmatpush.msra.mxu0 0.0
      %1367 = vmatpush.msra.mxu0 0.0
      %1368 = vmatpush.msra.mxu0 0.0
      %1369 = vmatpush.msra.mxu0 0.0
      %1370 = vmatpush.msra.mxu0 0.0
      %1371 = vmatpush.msra.mxu0 0.0
      %1372 = vmatpush.msra.mxu0 0.0
      %1373 = vmatpush.msra.mxu0 0.0
      %1374 = vmatpush.msra.mxu0 0.0
      %1375 = vmatpush.msra.mxu0 0.0
      %1376 = vmatpush.msra.mxu0 0.0
      %1377 = vmatpush.msra.mxu0 0.0
      %1378 = vmatpush.msra.mxu0 0.0
      %1379 = vmatpush.msra.mxu0 0.0
      %1380 = vmatpush.msra.mxu0 %v1340
      %1381 = vmatmul.f32.gmra.mxu0 %v691
      %v1382 = vpop.f32.mrf.mxu0
      %v1383 = vadd.f32 0.0, %v1382
      %1384 = vmatmul.f32.gmra.mxu0 %v694
      %v1385 = vpop.f32.mrf.mxu0
      %v1386 = vadd.f32 0.0, %v1385
      %1387 = vdwg.mxu0
      %v1388 = vadd.f32 %v1319, %v1360
      %v1389 = vadd.f32 %v1320, %v1383
      %v1390 = vadd.f32 %v1321, %v1363
      %v1391 = vadd.f32 %v1322, %v1386
      %1392 = vst [vmem:[#allocation1] ss:$2 sm:$0xff] %v927
      %v1393 = vld.sshfl [vmem:[#allocation1] sm:$0xff pattern:$0x75316420]
      %v1394 = vld.sshfl [vmem:[#allocation1 + $0x8] sm:$0xff pattern:$0x75316420]
      %1397 = vrot.lane.b32.xlu0 %v1393, 112
      %v1398 = vpop.permute.xlu0 %1397
      %1399 = vrot.lane.b32.xlu0 %v1394, 112
      %v1400 = vpop.permute.xlu0 %1399
      %v1401 = vsel %vm761, %v1398, %v1400
      %v1402 = vsel %vm761, %v1400, %v1398
      %v1403 = vmul.f32 %v1401, %v765
      %v1404 = vmul.f32 %v1402, %v766
      %v1406 = vsel %vm235, %v1403, 0
      %v1409 = vsel %vm235, %v1404, 0
      %1411 = vmatpush.msra.mxu0 0.0
      %1412 = vmatpush.msra.mxu0 0.0
      %1413 = vmatpush.msra.mxu0 0.0
      %1414 = vmatpush.msra.mxu0 0.0
      %1415 = vmatpush.msra.mxu0 0.0
      %1416 = vmatpush.msra.mxu0 0.0
      %1417 = vmatpush.msra.mxu0 0.0
      %1418 = vmatpush.msra.mxu0 0.0
      %1419 = vmatpush.msra.mxu0 0.0
      %1420 = vmatpush.msra.mxu0 0.0
      %1421 = vmatpush.msra.mxu0 0.0
      %1422 = vmatpush.msra.mxu0 0.0
      %1423 = vmatpush.msra.mxu0 0.0
      %1424 = vmatpush.msra.mxu0 0.0
      %1425 = vmatpush.msra.mxu0 0.0
      %1426 = vmatpush.msra.mxu0 %v1406
      %1427 = vmatmul.f32.gmra.mxu0 %v772
      %v1428 = vpop.f32.mrf.mxu0
      %v1429 = vadd.f32 0.0, %v1428
      %1430 = vmatmul.f32.gmra.mxu0 %v775
      %v1431 = vpop.f32.mrf.mxu0
      %v1432 = vadd.f32 0.0, %v1431
      %1433 = vdwg.mxu0
      %1434 = vmatpush.msra.mxu0 0.0
      %1435 = vmatpush.msra.mxu0 0.0
      %1436 = vmatpush.msra.mxu0 0.0
      %1437 = vmatpush.msra.mxu0 0.0
      %1438 = vmatpush.msra.mxu0 0.0
      %1439 = vmatpush.msra.mxu0 0.0
      %1440 = vmatpush.msra.mxu0 0.0
      %1441 = vmatpush.msra.mxu0 0.0
      %1442 = vmatpush.msra.mxu0 0.0
      %1443 = vmatpush.msra.mxu0 0.0
      %1444 = vmatpush.msra.mxu0 0.0
      %1445 = vmatpush.msra.mxu0 0.0
      %1446 = vmatpush.msra.mxu0 0.0
      %1447 = vmatpush.msra.mxu0 0.0
      %1448 = vmatpush.msra.mxu0 0.0
      %1449 = vmatpush.msra.mxu0 %v1409
      %1450 = vmatmul.f32.gmra.mxu0 %v772
      %v1451 = vpop.f32.mrf.mxu0
      %v1452 = vadd.f32 0.0, %v1451
      %1453 = vmatmul.f32.gmra.mxu0 %v775
      %v1454 = vpop.f32.mrf.mxu0
      %v1455 = vadd.f32 0.0, %v1454
      %1456 = vdwg.mxu0
      %v1457 = vadd.f32 %v1388, %v1429
      %v1458 = vadd.f32 %v1389, %v1452
      %v1459 = vadd.f32 %v1390, %v1432
      %v1460 = vadd.f32 %v1391, %v1455
      %1461 = vst [vmem:[#allocation1] ss:$2 sm:$0xff] %v927
      %v1462 = vld.sshfl [vmem:[#allocation1] sm:$0xff pattern:$0x75316420]
      %v1463 = vld.sshfl [vmem:[#allocation1 + $0x8] sm:$0xff pattern:$0x75316420]
      %1466 = vrot.lane.b32.xlu0 %v1462, 111
      %v1467 = vpop.permute.xlu0 %1466
      %1468 = vrot.lane.b32.xlu0 %v1463, 111
      %v1469 = vpop.permute.xlu0 %1468
      %v1470 = vsel %vm842, %v1467, %v1469
      %v1471 = vsel %vm842, %v1469, %v1467
      %v1472 = vmul.f32 %v1470, %v846
      %v1473 = vmul.f32 %v1471, %v847
      %v1475 = vsel %vm235, %v1472, 0
      %v1478 = vsel %vm235, %v1473, 0
      %1480 = vmatpush.msra.mxu0 0.0
      %1481 = vmatpush.msra.mxu0 0.0
      %1482 = vmatpush.msra.mxu0 0.0
      %1483 = vmatpush.msra.mxu0 0.0
      %1484 = vmatpush.msra.mxu0 0.0
      %1485 = vmatpush.msra.mxu0 0.0
      %1486 = vmatpush.msra.mxu0 0.0
      %1487 = vmatpush.msra.mxu0 0.0
      %1488 = vmatpush.msra.mxu0 0.0
      %1489 = vmatpush.msra.mxu0 0.0
      %1490 = vmatpush.msra.mxu0 0.0
      %1491 = vmatpush.msra.mxu0 0.0
      %1492 = vmatpush.msra.mxu0 0.0
      %1493 = vmatpush.msra.mxu0 0.0
      %1494 = vmatpush.msra.mxu0 0.0
      %1495 = vmatpush.msra.mxu0 %v1475
      %1496 = vmatmul.f32.gmra.mxu0 %v853
      %v1497 = vpop.f32.mrf.mxu0
      %v1498 = vadd.f32 0.0, %v1497
      %1499 = vmatmul.f32.gmra.mxu0 %v856
      %v1500 = vpop.f32.mrf.mxu0
      %v1501 = vadd.f32 0.0, %v1500
      %1502 = vdwg.mxu0
      %1503 = vmatpush.msra.mxu0 0.0
      %1504 = vmatpush.msra.mxu0 0.0
      %1505 = vmatpush.msra.mxu0 0.0
      %1506 = vmatpush.msra.mxu0 0.0
      %1507 = vmatpush.msra.mxu0 0.0
      %1508 = vmatpush.msra.mxu0 0.0
      %1509 = vmatpush.msra.mxu0 0.0
      %1510 = vmatpush.msra.mxu0 0.0
      %1511 = vmatpush.msra.mxu0 0.0
      %1512 = vmatpush.msra.mxu0 0.0
      %1513 = vmatpush.msra.mxu0 0.0
      %1514 = vmatpush.msra.mxu0 0.0
      %1515 = vmatpush.msra.mxu0 0.0
      %1516 = vmatpush.msra.mxu0 0.0
      %1517 = vmatpush.msra.mxu0 0.0
      %1518 = vmatpush.msra.mxu0 %v1478
      %1519 = vmatmul.f32.gmra.mxu0 %v853
      %v1520 = vpop.f32.mrf.mxu0
      %v1521 = vadd.f32 0.0, %v1520
      %1522 = vmatmul.f32.gmra.mxu0 %v856
      %v1523 = vpop.f32.mrf.mxu0
      %v1524 = vadd.f32 0.0, %v1523
      %1525 = vdwg.mxu0
      %v1526 = vadd.f32 %v1457, %v1498
      %v1527 = vadd.f32 %v1458, %v1521
      %v1528 = vadd.f32 %v1459, %v1501
      %v1529 = vadd.f32 %v1460, %v1524
      %vm1530 = vcmp.ge.f32.partialorder %v1526, 0.0
      %vm1531 = vcmp.ge.f32.partialorder %v1527, 0.0
      %vm1532 = vcmp.ge.f32.partialorder %v1528, 0.0
      %vm1533 = vcmp.ge.f32.partialorder %v1529, 0.0
      %v1534 = vmul.f32 %v1526, 0.01
      %v1535 = vmul.f32 %v1527, 0.01
      %v1536 = vmul.f32 %v1528, 0.01
      %v1537 = vmul.f32 %v1529, 0.01
      %v1538 = vsel %vm1530, %v1526, %v1534
      %v1539 = vsel %vm1531, %v1527, %v1535
      %v1540 = vsel %vm1532, %v1528, %v1536
      %v1541 = vsel %vm1533, %v1529, %v1537
      %v1542 = vmax.f32 %v922, %v1538
      %v1543 = vmax.f32 %v923, %v1539
      %v1544 = vmax.f32 %v924, %v1540
      %v1545 = vmax.f32 %v925, %v1541
      %s1546 = scalar_lea.vmem %s170, 16
      %v1547 = vld [vmem:[%s1546] sm:$0x77]
      %1549 = vst [vmem:[#allocation1] ss:$2 sm:$0xff] %v1547
      %v1550 = vld.sshfl [vmem:[#allocation1] sm:$0xff pattern:$0x75316420]
      %v1551 = vld.sshfl [vmem:[#allocation1 + $0x8] sm:$0xff pattern:$0x75316420]
      %1554 = vrot.lane.b32.xlu0 %v1550, 17
      %v1555 = vpop.permute.xlu0 %1554
      %1556 = vrot.lane.b32.xlu0 %v1551, 17
      %v1557 = vpop.permute.xlu0 %1556
      %v1558 = vsel %vm218, %v1555, %v1557
      %v1559 = vsel %vm218, %v1557, %v1555
      %v1560 = vmul.f32 %v1559, %v222
      %v1561 = vmul.f32 %v1558, %v223
      %v1563 = vsel %vm235, %v1560, 0
      %v1566 = vsel %vm235, %v1561, 0
      %1568 = vmatpush.msra.mxu0 0.0
      %1569 = vmatpush.msra.mxu0 0.0
      %1570 = vmatpush.msra.mxu0 0.0
      %1571 = vmatpush.msra.mxu0 0.0
      %1572 = vmatpush.msra.mxu0 0.0
      %1573 = vmatpush.msra.mxu0 0.0
      %1574 = vmatpush.msra.mxu0 0.0
      %1575 = vmatpush.msra.mxu0 0.0
      %1576 = vmatpush.msra.mxu0 0.0
      %1577 = vmatpush.msra.mxu0 0.0
      %1578 = vmatpush.msra.mxu0 0.0
      %1579 = vmatpush.msra.mxu0 0.0
      %1580 = vmatpush.msra.mxu0 0.0
      %1581 = vmatpush.msra.mxu0 0.0
      %1582 = vmatpush.msra.mxu0 0.0
      %1583 = vmatpush.msra.mxu0 %v1563
      %1584 = vmatmul.f32.gmra.mxu0 %v230
      %v1585 = vpop.f32.mrf.mxu0
      %v1586 = vadd.f32 0.0, %v1585
      %1587 = vmatmul.f32.gmra.mxu0 %v233
      %v1588 = vpop.f32.mrf.mxu0
      %v1589 = vadd.f32 0.0, %v1588
      %1590 = vdwg.mxu0
      %1591 = vmatpush.msra.mxu0 0.0
      %1592 = vmatpush.msra.mxu0 0.0
      %1593 = vmatpush.msra.mxu0 0.0
      %1594 = vmatpush.msra.mxu0 0.0
      %1595 = vmatpush.msra.mxu0 0.0
      %1596 = vmatpush.msra.mxu0 0.0
      %1597 = vmatpush.msra.mxu0 0.0
      %1598 = vmatpush.msra.mxu0 0.0
      %1599 = vmatpush.msra.mxu0 0.0
      %1600 = vmatpush.msra.mxu0 0.0
      %1601 = vmatpush.msra.mxu0 0.0
      %1602 = vmatpush.msra.mxu0 0.0
      %1603 = vmatpush.msra.mxu0 0.0
      %1604 = vmatpush.msra.mxu0 0.0
      %1605 = vmatpush.msra.mxu0 0.0
      %1606 = vmatpush.msra.mxu0 %v1566
      %1607 = vmatmul.f32.gmra.mxu0 %v230
      %v1608 = vpop.f32.mrf.mxu0
      %v1609 = vadd.f32 0.0, %v1608
      %1610 = vmatmul.f32.gmra.mxu0 %v233
      %v1611 = vpop.f32.mrf.mxu0
      %v1612 = vadd.f32 0.0, %v1611
      %1613 = vdwg.mxu0
      %1614 = vst [vmem:[#allocation1] ss:$2 sm:$0xff] %v1547
      %v1615 = vld.sshfl [vmem:[#allocation1] sm:$0xff pattern:$0x75316420]
      %v1616 = vld.sshfl [vmem:[#allocation1 + $0x8] sm:$0xff pattern:$0x75316420]
      %v1617 = vsel %vm235, %v1615, 0
      %v1619 = vsel %vm235, %v1616, 0
      %1621 = vmatpush.msra.mxu0 0.0
      %1622 = vmatpush.msra.mxu0 0.0
      %1623 = vmatpush.msra.mxu0 0.0
      %1624 = vmatpush.msra.mxu0 0.0
      %1625 = vmatpush.msra.mxu0 0.0
      %1626 = vmatpush.msra.mxu0 0.0
      %1627 = vmatpush.msra.mxu0 0.0
      %1628 = vmatpush.msra.mxu0 0.0
      %1629 = vmatpush.msra.mxu0 0.0
      %1630 = vmatpush.msra.mxu0 0.0
      %1631 = vmatpush.msra.mxu0 0.0
      %1632 = vmatpush.msra.mxu0 0.0
      %1633 = vmatpush.msra.mxu0 0.0
      %1634 = vmatpush.msra.mxu0 0.0
      %1635 = vmatpush.msra.mxu0 0.0
      %1636 = vmatpush.msra.mxu0 %v1617
      %1637 = vmatmul.f32.gmra.mxu0 %v292
      %v1638 = vpop.f32.mrf.mxu0
      %v1639 = vadd.f32 %v1586, %v1638
      %1640 = vmatmul.f32.gmra.mxu0 %v295
      %v1641 = vpop.f32.mrf.mxu0
      %v1642 = vadd.f32 %v1589, %v1641
      %1643 = vdwg.mxu0
      %1644 = vmatpush.msra.mxu0 0.0
      %1645 = vmatpush.msra.mxu0 0.0
      %1646 = vmatpush.msra.mxu0 0.0
      %1647 = vmatpush.msra.mxu0 0.0
      %1648 = vmatpush.msra.mxu0 0.0
      %1649 = vmatpush.msra.mxu0 0.0
      %1650 = vmatpush.msra.mxu0 0.0
      %1651 = vmatpush.msra.mxu0 0.0
      %1652 = vmatpush.msra.mxu0 0.0
      %1653 = vmatpush.msra.mxu0 0.0
      %1654 = vmatpush.msra.mxu0 0.0
      %1655 = vmatpush.msra.mxu0 0.0
      %1656 = vmatpush.msra.mxu0 0.0
      %1657 = vmatpush.msra.mxu0 0.0
      %1658 = vmatpush.msra.mxu0 0.0
      %1659 = vmatpush.msra.mxu0 %v1619
      %1660 = vmatmul.f32.gmra.mxu0 %v292
      %v1661 = vpop.f32.mrf.mxu0
      %v1662 = vadd.f32 %v1609, %v1661
      %1663 = vmatmul.f32.gmra.mxu0 %v295
      %v1664 = vpop.f32.mrf.mxu0
      %v1665 = vadd.f32 %v1612, %v1664
      %1666 = vdwg.mxu0
      %1667 = vst [vmem:[#allocation1] ss:$2 sm:$0xff] %v1547
      %v1668 = vld.sshfl [vmem:[#allocation1] sm:$0xff pattern:$0x75316420]
      %v1669 = vld.sshfl [vmem:[#allocation1 + $0x8] sm:$0xff pattern:$0x75316420]
      %1672 = vrot.lane.b32.xlu0 %v1668, 16
      %v1673 = vpop.permute.xlu0 %1672
      %1674 = vrot.lane.b32.xlu0 %v1669, 16
      %v1675 = vpop.permute.xlu0 %1674
      %v1676 = vsel %vm356, %v1673, %v1675
      %v1677 = vsel %vm356, %v1675, %v1673
      %v1678 = vmul.f32 %v1677, %v360
      %v1679 = vmul.f32 %v1676, %v361
      %v1681 = vsel %vm235, %v1678, 0
      %v1684 = vsel %vm235, %v1679, 0
      %1686 = vmatpush.msra.mxu0 0.0
      %1687 = vmatpush.msra.mxu0 0.0
      %1688 = vmatpush.msra.mxu0 0.0
      %1689 = vmatpush.msra.mxu0 0.0
      %1690 = vmatpush.msra.mxu0 0.0
      %1691 = vmatpush.msra.mxu0 0.0
      %1692 = vmatpush.msra.mxu0 0.0
      %1693 = vmatpush.msra.mxu0 0.0
      %1694 = vmatpush.msra.mxu0 0.0
      %1695 = vmatpush.msra.mxu0 0.0
      %1696 = vmatpush.msra.mxu0 0.0
      %1697 = vmatpush.msra.mxu0 0.0
      %1698 = vmatpush.msra.mxu0 0.0
      %1699 = vmatpush.msra.mxu0 0.0
      %1700 = vmatpush.msra.mxu0 0.0
      %1701 = vmatpush.msra.mxu0 %v1681
      %1702 = vmatmul.f32.gmra.mxu0 %v367
      %v1703 = vpop.f32.mrf.mxu0
      %v1704 = vadd.f32 0.0, %v1703
      %1705 = vmatmul.f32.gmra.mxu0 %v370
      %v1706 = vpop.f32.mrf.mxu0
      %v1707 = vadd.f32 0.0, %v1706
      %1708 = vdwg.mxu0
      %1709 = vmatpush.msra.mxu0 0.0
      %1710 = vmatpush.msra.mxu0 0.0
      %1711 = vmatpush.msra.mxu0 0.0
      %1712 = vmatpush.msra.mxu0 0.0
      %1713 = vmatpush.msra.mxu0 0.0
      %1714 = vmatpush.msra.mxu0 0.0
      %1715 = vmatpush.msra.mxu0 0.0
      %1716 = vmatpush.msra.mxu0 0.0
      %1717 = vmatpush.msra.mxu0 0.0
      %1718 = vmatpush.msra.mxu0 0.0
      %1719 = vmatpush.msra.mxu0 0.0
      %1720 = vmatpush.msra.mxu0 0.0
      %1721 = vmatpush.msra.mxu0 0.0
      %1722 = vmatpush.msra.mxu0 0.0
      %1723 = vmatpush.msra.mxu0 0.0
      %1724 = vmatpush.msra.mxu0 %v1684
      %1725 = vmatmul.f32.gmra.mxu0 %v367
      %v1726 = vpop.f32.mrf.mxu0
      %v1727 = vadd.f32 0.0, %v1726
      %1728 = vmatmul.f32.gmra.mxu0 %v370
      %v1729 = vpop.f32.mrf.mxu0
      %v1730 = vadd.f32 0.0, %v1729
      %1731 = vdwg.mxu0
      %v1732 = vadd.f32 %v1639, %v1704
      %v1733 = vadd.f32 %v1662, %v1727
      %v1734 = vadd.f32 %v1642, %v1707
      %v1735 = vadd.f32 %v1665, %v1730
      %1736 = vst [vmem:[#allocation1] ss:$2 sm:$0xff] %v1547
      %v1737 = vld.sshfl [vmem:[#allocation1] sm:$0xff pattern:$0x75316420]
      %v1738 = vld.sshfl [vmem:[#allocation1 + $0x8] sm:$0xff pattern:$0x75316420]
      %1741 = vrot.lane.b32.xlu0 %v1737, 15
      %v1742 = vpop.permute.xlu0 %1741
      %1743 = vrot.lane.b32.xlu0 %v1738, 15
      %v1744 = vpop.permute.xlu0 %1743
      %v1745 = vsel %vm437, %v1742, %v1744
      %v1746 = vsel %vm437, %v1744, %v1742
      %v1747 = vmul.f32 %v1746, %v441
      %v1748 = vmul.f32 %v1745, %v442
      %v1750 = vsel %vm235, %v1747, 0
      %v1753 = vsel %vm235, %v1748, 0
      %1755 = vmatpush.msra.mxu0 0.0
      %1756 = vmatpush.msra.mxu0 0.0
      %1757 = vmatpush.msra.mxu0 0.0
      %1758 = vmatpush.msra.mxu0 0.0
      %1759 = vmatpush.msra.mxu0 0.0
      %1760 = vmatpush.msra.mxu0 0.0
      %1761 = vmatpush.msra.mxu0 0.0
      %1762 = vmatpush.msra.mxu0 0.0
      %1763 = vmatpush.msra.mxu0 0.0
      %1764 = vmatpush.msra.mxu0 0.0
      %1765 = vmatpush.msra.mxu0 0.0
      %1766 = vmatpush.msra.mxu0 0.0
      %1767 = vmatpush.msra.mxu0 0.0
      %1768 = vmatpush.msra.mxu0 0.0
      %1769 = vmatpush.msra.mxu0 0.0
      %1770 = vmatpush.msra.mxu0 %v1750
      %1771 = vmatmul.f32.gmra.mxu0 %v448
      %v1772 = vpop.f32.mrf.mxu0
      %v1773 = vadd.f32 0.0, %v1772
      %1774 = vmatmul.f32.gmra.mxu0 %v451
      %v1775 = vpop.f32.mrf.mxu0
      %v1776 = vadd.f32 0.0, %v1775
      %1777 = vdwg.mxu0
      %1778 = vmatpush.msra.mxu0 0.0
      %1779 = vmatpush.msra.mxu0 0.0
      %1780 = vmatpush.msra.mxu0 0.0
      %1781 = vmatpush.msra.mxu0 0.0
      %1782 = vmatpush.msra.mxu0 0.0
      %1783 = vmatpush.msra.mxu0 0.0
      %1784 = vmatpush.msra.mxu0 0.0
      %1785 = vmatpush.msra.mxu0 0.0
      %1786 = vmatpush.msra.mxu0 0.0
      %1787 = vmatpush.msra.mxu0 0.0
      %1788 = vmatpush.msra.mxu0 0.0
      %1789 = vmatpush.msra.mxu0 0.0
      %1790 = vmatpush.msra.mxu0 0.0
      %1791 = vmatpush.msra.mxu0 0.0
      %1792 = vmatpush.msra.mxu0 0.0
      %1793 = vmatpush.msra.mxu0 %v1753
      %1794 = vmatmul.f32.gmra.mxu0 %v448
      %v1795 = vpop.f32.mrf.mxu0
      %v1796 = vadd.f32 0.0, %v1795
      %1797 = vmatmul.f32.gmra.mxu0 %v451
      %v1798 = vpop.f32.mrf.mxu0
      %v1799 = vadd.f32 0.0, %v1798
      %1800 = vdwg.mxu0
      %v1801 = vadd.f32 %v1732, %v1773
      %v1802 = vadd.f32 %v1733, %v1796
      %v1803 = vadd.f32 %v1734, %v1776
      %v1804 = vadd.f32 %v1735, %v1799
      %1805 = vst [vmem:[#allocation1] ss:$2 sm:$0xff] %v1547
      %v1806 = vld.sshfl [vmem:[#allocation1] sm:$0xff pattern:$0x75316420]
      %v1807 = vld.sshfl [vmem:[#allocation1 + $0x8] sm:$0xff pattern:$0x75316420]
      %1810 = vrot.lane.b32.xlu0 %v1806, 1
      %v1811 = vpop.permute.xlu0 %1810
      %1812 = vrot.lane.b32.xlu0 %v1807, 1
      %v1813 = vpop.permute.xlu0 %1812
      %v1814 = vsel %vm518, %v1811, %v1813
      %v1815 = vsel %vm518, %v1813, %v1811
      %v1816 = vmul.f32 %v1815, %v522
      %v1817 = vmul.f32 %v1814, %v523
      %v1819 = vsel %vm235, %v1816, 0
      %v1822 = vsel %vm235, %v1817, 0
      %1824 = vmatpush.msra.mxu0 0.0
      %1825 = vmatpush.msra.mxu0 0.0
      %1826 = vmatpush.msra.mxu0 0.0
      %1827 = vmatpush.msra.mxu0 0.0
      %1828 = vmatpush.msra.mxu0 0.0
      %1829 = vmatpush.msra.mxu0 0.0
      %1830 = vmatpush.msra.mxu0 0.0
      %1831 = vmatpush.msra.mxu0 0.0
      %1832 = vmatpush.msra.mxu0 0.0
      %1833 = vmatpush.msra.mxu0 0.0
      %1834 = vmatpush.msra.mxu0 0.0
      %1835 = vmatpush.msra.mxu0 0.0
      %1836 = vmatpush.msra.mxu0 0.0
      %1837 = vmatpush.msra.mxu0 0.0
      %1838 = vmatpush.msra.mxu0 0.0
      %1839 = vmatpush.msra.mxu0 %v1819
      %1840 = vmatmul.f32.gmra.mxu0 %v529
      %v1841 = vpop.f32.mrf.mxu0
      %v1842 = vadd.f32 0.0, %v1841
      %1843 = vmatmul.f32.gmra.mxu0 %v532
      %v1844 = vpop.f32.mrf.mxu0
      %v1845 = vadd.f32 0.0, %v1844
      %1846 = vdwg.mxu0
      %1847 = vmatpush.msra.mxu0 0.0
      %1848 = vmatpush.msra.mxu0 0.0
      %1849 = vmatpush.msra.mxu0 0.0
      %1850 = vmatpush.msra.mxu0 0.0
      %1851 = vmatpush.msra.mxu0 0.0
      %1852 = vmatpush.msra.mxu0 0.0
      %1853 = vmatpush.msra.mxu0 0.0
      %1854 = vmatpush.msra.mxu0 0.0
      %1855 = vmatpush.msra.mxu0 0.0
      %1856 = vmatpush.msra.mxu0 0.0
      %1857 = vmatpush.msra.mxu0 0.0
      %1858 = vmatpush.msra.mxu0 0.0
      %1859 = vmatpush.msra.mxu0 0.0
      %1860 = vmatpush.msra.mxu0 0.0
      %1861 = vmatpush.msra.mxu0 0.0
      %1862 = vmatpush.msra.mxu0 %v1822
      %1863 = vmatmul.f32.gmra.mxu0 %v529
      %v1864 = vpop.f32.mrf.mxu0
      %v1865 = vadd.f32 0.0, %v1864
      %1866 = vmatmul.f32.gmra.mxu0 %v532
      %v1867 = vpop.f32.mrf.mxu0
      %v1868 = vadd.f32 0.0, %v1867
      %1869 = vdwg.mxu0
      %v1870 = vadd.f32 %v1801, %v1842
      %v1871 = vadd.f32 %v1802, %v1865
      %v1872 = vadd.f32 %v1803, %v1845
      %v1873 = vadd.f32 %v1804, %v1868
      %1874 = vst [vmem:[#allocation1] ss:$2 sm:$0xff] %v1547
      %v1875 = vld.sshfl [vmem:[#allocation1] sm:$0xff pattern:$0x75316420]
      %v1876 = vld.sshfl [vmem:[#allocation1 + $0x8] sm:$0xff pattern:$0x75316420]
      %1879 = vrot.lane.b32.xlu0 %v1875, 127
      %v1880 = vpop.permute.xlu0 %1879
      %1881 = vrot.lane.b32.xlu0 %v1876, 127
      %v1882 = vpop.permute.xlu0 %1881
      %v1883 = vsel %vm599, %v1880, %v1882
      %v1884 = vsel %vm599, %v1882, %v1880
      %v1885 = vmul.f32 %v1883, %v603
      %v1886 = vmul.f32 %v1884, %v604
      %v1888 = vsel %vm235, %v1885, 0
      %v1891 = vsel %vm235, %v1886, 0
      %1893 = vmatpush.msra.mxu0 0.0
      %1894 = vmatpush.msra.mxu0 0.0
      %1895 = vmatpush.msra.mxu0 0.0
      %1896 = vmatpush.msra.mxu0 0.0
      %1897 = vmatpush.msra.mxu0 0.0
      %1898 = vmatpush.msra.mxu0 0.0
      %1899 = vmatpush.msra.mxu0 0.0
      %1900 = vmatpush.msra.mxu0 0.0
      %1901 = vmatpush.msra.mxu0 0.0
      %1902 = vmatpush.msra.mxu0 0.0
      %1903 = vmatpush.msra.mxu0 0.0
      %1904 = vmatpush.msra.mxu0 0.0
      %1905 = vmatpush.msra.mxu0 0.0
      %1906 = vmatpush.msra.mxu0 0.0
      %1907 = vmatpush.msra.mxu0 0.0
      %1908 = vmatpush.msra.mxu0 %v1888
      %1909 = vmatmul.f32.gmra.mxu0 %v610
      %v1910 = vpop.f32.mrf.mxu0
      %v1911 = vadd.f32 0.0, %v1910
      %1912 = vmatmul.f32.gmra.mxu0 %v613
      %v1913 = vpop.f32.mrf.mxu0
      %v1914 = vadd.f32 0.0, %v1913
      %1915 = vdwg.mxu0
      %1916 = vmatpush.msra.mxu0 0.0
      %1917 = vmatpush.msra.mxu0 0.0
      %1918 = vmatpush.msra.mxu0 0.0
      %1919 = vmatpush.msra.mxu0 0.0
      %1920 = vmatpush.msra.mxu0 0.0
      %1921 = vmatpush.msra.mxu0 0.0
      %1922 = vmatpush.msra.mxu0 0.0
      %1923 = vmatpush.msra.mxu0 0.0
      %1924 = vmatpush.msra.mxu0 0.0
      %1925 = vmatpush.msra.mxu0 0.0
      %1926 = vmatpush.msra.mxu0 0.0
      %1927 = vmatpush.msra.mxu0 0.0
      %1928 = vmatpush.msra.mxu0 0.0
      %1929 = vmatpush.msra.mxu0 0.0
      %1930 = vmatpush.msra.mxu0 0.0
      %1931 = vmatpush.msra.mxu0 %v1891
      %1932 = vmatmul.f32.gmra.mxu0 %v610
      %v1933 = vpop.f32.mrf.mxu0
      %v1934 = vadd.f32 0.0, %v1933
      %1935 = vmatmul.f32.gmra.mxu0 %v613
      %v1936 = vpop.f32.mrf.mxu0
      %v1937 = vadd.f32 0.0, %v1936
      %1938 = vdwg.mxu0
      %v1939 = vadd.f32 %v1870, %v1911
      %v1940 = vadd.f32 %v1871, %v1934
      %v1941 = vadd.f32 %v1872, %v1914
      %v1942 = vadd.f32 %v1873, %v1937
      %1943 = vst [vmem:[#allocation1] ss:$2 sm:$0xff] %v1547
      %v1944 = vld.sshfl [vmem:[#allocation1] sm:$0xff pattern:$0x75316420]
      %v1945 = vld.sshfl [vmem:[#allocation1 + $0x8] sm:$0xff pattern:$0x75316420]
      %1948 = vrot.lane.b32.xlu0 %v1944, 113
      %v1949 = vpop.permute.xlu0 %1948
      %1950 = vrot.lane.b32.xlu0 %v1945, 113
      %v1951 = vpop.permute.xlu0 %1950
      %v1952 = vsel %vm680, %v1949, %v1951
      %v1953 = vsel %vm680, %v1951, %v1949
      %v1954 = vmul.f32 %v1952, %v684
      %v1955 = vmul.f32 %v1953, %v685
      %v1957 = vsel %vm235, %v1954, 0
      %v1960 = vsel %vm235, %v1955, 0
      %1962 = vmatpush.msra.mxu0 0.0
      %1963 = vmatpush.msra.mxu0 0.0
      %1964 = vmatpush.msra.mxu0 0.0
      %1965 = vmatpush.msra.mxu0 0.0
      %1966 = vmatpush.msra.mxu0 0.0
      %1967 = vmatpush.msra.mxu0 0.0
      %1968 = vmatpush.msra.mxu0 0.0
      %1969 = vmatpush.msra.mxu0 0.0
      %1970 = vmatpush.msra.mxu0 0.0
      %1971 = vmatpush.msra.mxu0 0.0
      %1972 = vmatpush.msra.mxu0 0.0
      %1973 = vmatpush.msra.mxu0 0.0
      %1974 = vmatpush.msra.mxu0 0.0
      %1975 = vmatpush.msra.mxu0 0.0
      %1976 = vmatpush.msra.mxu0 0.0
      %1977 = vmatpush.msra.mxu0 %v1957
      %1978 = vmatmul.f32.gmra.mxu0 %v691
      %v1979 = vpop.f32.mrf.mxu0
      %v1980 = vadd.f32 0.0, %v1979
      %1981 = vmatmul.f32.gmra.mxu0 %v694
      %v1982 = vpop.f32.mrf.mxu0
      %v1983 = vadd.f32 0.0, %v1982
      %1984 = vdwg.mxu0
      %1985 = vmatpush.msra.mxu0 0.0
      %1986 = vmatpush.msra.mxu0 0.0
      %1987 = vmatpush.msra.mxu0 0.0
      %1988 = vmatpush.msra.mxu0 0.0
      %1989 = vmatpush.msra.mxu0 0.0
      %1990 = vmatpush.msra.mxu0 0.0
      %1991 = vmatpush.msra.mxu0 0.0
      %1992 = vmatpush.msra.mxu0 0.0
      %1993 = vmatpush.msra.mxu0 0.0
      %1994 = vmatpush.msra.mxu0 0.0
      %1995 = vmatpush.msra.mxu0 0.0
      %1996 = vmatpush.msra.mxu0 0.0
      %1997 = vmatpush.msra.mxu0 0.0
      %1998 = vmatpush.msra.mxu0 0.0
      %1999 = vmatpush.msra.mxu0 0.0
      %2000 = vmatpush.msra.mxu0 %v1960
      %2001 = vmatmul.f32.gmra.mxu0 %v691
      %v2002 = vpop.f32.mrf.mxu0
      %v2003 = vadd.f32 0.0, %v2002
      %2004 = vmatmul.f32.gmra.mxu0 %v694
      %v2005 = vpop.f32.mrf.mxu0
      %v2006 = vadd.f32 0.0, %v2005
      %2007 = vdwg.mxu0
      %v2008 = vadd.f32 %v1939, %v1980
      %v2009 = vadd.f32 %v1940, %v2003
      %v2010 = vadd.f32 %v1941, %v1983
      %v2011 = vadd.f32 %v1942, %v2006
      %2012 = vst [vmem:[#allocation1] ss:$2 sm:$0xff] %v1547
      %v2013 = vld.sshfl [vmem:[#allocation1] sm:$0xff pattern:$0x75316420]
      %v2014 = vld.sshfl [vmem:[#allocation1 + $0x8] sm:$0xff pattern:$0x75316420]
      %2017 = vrot.lane.b32.xlu0 %v2013, 112
      %v2018 = vpop.permute.xlu0 %2017
      %2019 = vrot.lane.b32.xlu0 %v2014, 112
      %v2020 = vpop.permute.xlu0 %2019
      %v2021 = vsel %vm761, %v2018, %v2020
      %v2022 = vsel %vm761, %v2020, %v2018
      %v2023 = vmul.f32 %v2021, %v765
      %v2024 = vmul.f32 %v2022, %v766
      %v2026 = vsel %vm235, %v2023, 0
      %v2029 = vsel %vm235, %v2024, 0
      %2031 = vmatpush.msra.mxu0 0.0
      %2032 = vmatpush.msra.mxu0 0.0
      %2033 = vmatpush.msra.mxu0 0.0
      %2034 = vmatpush.msra.mxu0 0.0
      %2035 = vmatpush.msra.mxu0 0.0
      %2036 = vmatpush.msra.mxu0 0.0
      %2037 = vmatpush.msra.mxu0 0.0
      %2038 = vmatpush.msra.mxu0 0.0
      %2039 = vmatpush.msra.mxu0 0.0
      %2040 = vmatpush.msra.mxu0 0.0
      %2041 = vmatpush.msra.mxu0 0.0
      %2042 = vmatpush.msra.mxu0 0.0
      %2043 = vmatpush.msra.mxu0 0.0
      %2044 = vmatpush.msra.mxu0 0.0
      %2045 = vmatpush.msra.mxu0 0.0
      %2046 = vmatpush.msra.mxu0 %v2026
      %2047 = vmatmul.f32.gmra.mxu0 %v772
      %v2048 = vpop.f32.mrf.mxu0
      %v2049 = vadd.f32 0.0, %v2048
      %2050 = vmatmul.f32.gmra.mxu0 %v775
      %v2051 = vpop.f32.mrf.mxu0
      %v2052 = vadd.f32 0.0, %v2051
      %2053 = vdwg.mxu0
      %2054 = vmatpush.msra.mxu0 0.0
      %2055 = vmatpush.msra.mxu0 0.0
      %2056 = vmatpush.msra.mxu0 0.0
      %2057 = vmatpush.msra.mxu0 0.0
      %2058 = vmatpush.msra.mxu0 0.0
      %2059 = vmatpush.msra.mxu0 0.0
      %2060 = vmatpush.msra.mxu0 0.0
      %2061 = vmatpush.msra.mxu0 0.0
      %2062 = vmatpush.msra.mxu0 0.0
      %2063 = vmatpush.msra.mxu0 0.0
      %2064 = vmatpush.msra.mxu0 0.0
      %2065 = vmatpush.msra.mxu0 0.0
      %2066 = vmatpush.msra.mxu0 0.0
      %2067 = vmatpush.msra.mxu0 0.0
      %2068 = vmatpush.msra.mxu0 0.0
      %2069 = vmatpush.msra.mxu0 %v2029
      %2070 = vmatmul.f32.gmra.mxu0 %v772
      %v2071 = vpop.f32.mrf.mxu0
      %v2072 = vadd.f32 0.0, %v2071
      %2073 = vmatmul.f32.gmra.mxu0 %v775
      %v2074 = vpop.f32.mrf.mxu0
      %v2075 = vadd.f32 0.0, %v2074
      %2076 = vdwg.mxu0
      %v2077 = vadd.f32 %v2008, %v2049
      %v2078 = vadd.f32 %v2009, %v2072
      %v2079 = vadd.f32 %v2010, %v2052
      %v2080 = vadd.f32 %v2011, %v2075
      %2081 = vst [vmem:[#allocation1] ss:$2 sm:$0xff] %v1547
      %v2082 = vld.sshfl [vmem:[#allocation1] sm:$0xff pattern:$0x75316420]
      %v2083 = vld.sshfl [vmem:[#allocation1 + $0x8] sm:$0xff pattern:$0x75316420]
      %2086 = vrot.lane.b32.xlu0 %v2082, 111
      %v2087 = vpop.permute.xlu0 %2086
      %2088 = vrot.lane.b32.xlu0 %v2083, 111
      %v2089 = vpop.permute.xlu0 %2088
      %v2090 = vsel %vm842, %v2087, %v2089
      %v2091 = vsel %vm842, %v2089, %v2087
      %v2092 = vmul.f32 %v2090, %v846
      %v2093 = vmul.f32 %v2091, %v847
      %v2095 = vsel %vm235, %v2092, 0
      %v2098 = vsel %vm235, %v2093, 0
      %2100 = vmatpush.msra.mxu0 0.0
      %2101 = vmatpush.msra.mxu0 0.0
      %2102 = vmatpush.msra.mxu0 0.0
      %2103 = vmatpush.msra.mxu0 0.0
      %2104 = vmatpush.msra.mxu0 0.0
      %2105 = vmatpush.msra.mxu0 0.0
      %2106 = vmatpush.msra.mxu0 0.0
      %2107 = vmatpush.msra.mxu0 0.0
      %2108 = vmatpush.msra.mxu0 0.0
      %2109 = vmatpush.msra.mxu0 0.0
      %2110 = vmatpush.msra.mxu0 0.0
      %2111 = vmatpush.msra.mxu0 0.0
      %2112 = vmatpush.msra.mxu0 0.0
      %2113 = vmatpush.msra.mxu0 0.0
      %2114 = vmatpush.msra.mxu0 0.0
      %2115 = vmatpush.msra.mxu0 %v2095
      %2116 = vmatmul.f32.gmra.mxu0 %v853
      %v2117 = vpop.f32.mrf.mxu0
      %v2118 = vadd.f32 0.0, %v2117
      %2119 = vmatmul.f32.gmra.mxu0 %v856
      %v2120 = vpop.f32.mrf.mxu0
      %v2121 = vadd.f32 0.0, %v2120
      %2122 = vdwg.mxu0
      %2123 = vmatpush.msra.mxu0 0.0
      %2124 = vmatpush.msra.mxu0 0.0
      %2125 = vmatpush.msra.mxu0 0.0
      %2126 = vmatpush.msra.mxu0 0.0
      %2127 = vmatpush.msra.mxu0 0.0
      %2128 = vmatpush.msra.mxu0 0.0
      %2129 = vmatpush.msra.mxu0 0.0
      %2130 = vmatpush.msra.mxu0 0.0
      %2131 = vmatpush.msra.mxu0 0.0
      %2132 = vmatpush.msra.mxu0 0.0
      %2133 = vmatpush.msra.mxu0 0.0
      %2134 = vmatpush.msra.mxu0 0.0
      %2135 = vmatpush.msra.mxu0 0.0
      %2136 = vmatpush.msra.mxu0 0.0
      %2137 = vmatpush.msra.mxu0 0.0
      %2138 = vmatpush.msra.mxu0 %v2098
      %2139 = vmatmul.f32.gmra.mxu0 %v853
      %v2140 = vpop.f32.mrf.mxu0
      %v2141 = vadd.f32 0.0, %v2140
      %2142 = vmatmul.f32.gmra.mxu0 %v856
      %v2143 = vpop.f32.mrf.mxu0
      %v2144 = vadd.f32 0.0, %v2143
      %2145 = vdwg.mxu0
      %v2146 = vadd.f32 %v2077, %v2118
      %v2147 = vadd.f32 %v2078, %v2141
      %v2148 = vadd.f32 %v2079, %v2121
      %v2149 = vadd.f32 %v2080, %v2144
      %vm2150 = vcmp.ge.f32.partialorder %v2146, 0.0
      %vm2151 = vcmp.ge.f32.partialorder %v2147, 0.0
      %vm2152 = vcmp.ge.f32.partialorder %v2148, 0.0
      %vm2153 = vcmp.ge.f32.partialorder %v2149, 0.0
      %v2154 = vmul.f32 %v2146, 0.01
      %v2155 = vmul.f32 %v2147, 0.01
      %v2156 = vmul.f32 %v2148, 0.01
      %v2157 = vmul.f32 %v2149, 0.01
      %v2158 = vsel %vm2150, %v2146, %v2154
      %v2159 = vsel %vm2151, %v2147, %v2155
      %v2160 = vsel %vm2152, %v2148, %v2156
      %v2161 = vsel %vm2153, %v2149, %v2157
      %v2162 = vmax.f32 %v1542, %v2158
      %v2163 = vmax.f32 %v1543, %v2159
      %v2164 = vmax.f32 %v1544, %v2160
      %v2165 = vmax.f32 %v1545, %v2161
      %2166 = vst [vmem:[%s177] sm:$0xff] %v2162
      %2167 = vst [vmem:[%s177 + $0x8] sm:$0xff] %v2163
      %2168 = vst [vmem:[%s177 + $0x10] sm:$0xff] %v2164
      %2169 = vst [vmem:[%s177 + $0x18] sm:$0xff] %v2165
      %s2170 = scalar_lea.vmem %s170, 24
      %v2171 = vld [vmem:[%s2170] sm:$0x77]
      %2173 = vst [vmem:[#allocation1] ss:$2 sm:$0xff] %v2171
      %v2174 = vld.sshfl [vmem:[#allocation1] sm:$0xff pattern:$0x75316420]
      %v2175 = vld.sshfl [vmem:[#allocation1 + $0x8] sm:$0xff pattern:$0x75316420]
      %2178 = vrot.lane.b32.xlu0 %v2174, 17
      %v2179 = vpop.permute.xlu0 %2178
      %2180 = vrot.lane.b32.xlu0 %v2175, 17
      %v2181 = vpop.permute.xlu0 %2180
      %v2182 = vsel %vm218, %v2179, %v2181
      %v2183 = vsel %vm218, %v2181, %v2179
      %v2184 = vmul.f32 %v2183, %v222
      %v2185 = vmul.f32 %v2182, %v223
      %v2187 = vsel %vm235, %v2184, 0
      %v2190 = vsel %vm235, %v2185, 0
      %2192 = vmatpush.msra.mxu0 0.0
      %2193 = vmatpush.msra.mxu0 0.0
      %2194 = vmatpush.msra.mxu0 0.0
      %2195 = vmatpush.msra.mxu0 0.0
      %2196 = vmatpush.msra.mxu0 0.0
      %2197 = vmatpush.msra.mxu0 0.0
      %2198 = vmatpush.msra.mxu0 0.0
      %2199 = vmatpush.msra.mxu0 0.0
      %2200 = vmatpush.msra.mxu0 0.0
      %2201 = vmatpush.msra.mxu0 0.0
      %2202 = vmatpush.msra.mxu0 0.0
      %2203 = vmatpush.msra.mxu0 0.0
      %2204 = vmatpush.msra.mxu0 0.0
      %2205 = vmatpush.msra.mxu0 0.0
      %2206 = vmatpush.msra.mxu0 0.0
      %2207 = vmatpush.msra.mxu0 %v2187
      %2208 = vmatmul.f32.gmra.mxu0 %v230
      %v2209 = vpop.f32.mrf.mxu0
      %v2210 = vadd.f32 0.0, %v2209
      %2211 = vmatmul.f32.gmra.mxu0 %v233
      %v2212 = vpop.f32.mrf.mxu0
      %v2213 = vadd.f32 0.0, %v2212
      %2214 = vdwg.mxu0
      %2215 = vmatpush.msra.mxu0 0.0
      %2216 = vmatpush.msra.mxu0 0.0
      %2217 = vmatpush.msra.mxu0 0.0
      %2218 = vmatpush.msra.mxu0 0.0
      %2219 = vmatpush.msra.mxu0 0.0
      %2220 = vmatpush.msra.mxu0 0.0
      %2221 = vmatpush.msra.mxu0 0.0
      %2222 = vmatpush.msra.mxu0 0.0
      %2223 = vmatpush.msra.mxu0 0.0
      %2224 = vmatpush.msra.mxu0 0.0
      %2225 = vmatpush.msra.mxu0 0.0
      %2226 = vmatpush.msra.mxu0 0.0
      %2227 = vmatpush.msra.mxu0 0.0
      %2228 = vmatpush.msra.mxu0 0.0
      %2229 = vmatpush.msra.mxu0 0.0
      %2230 = vmatpush.msra.mxu0 %v2190
      %2231 = vmatmul.f32.gmra.mxu0 %v230
      %v2232 = vpop.f32.mrf.mxu0
      %v2233 = vadd.f32 0.0, %v2232
      %2234 = vmatmul.f32.gmra.mxu0 %v233
      %v2235 = vpop.f32.mrf.mxu0
      %v2236 = vadd.f32 0.0, %v2235
      %2237 = vdwg.mxu0
      %2238 = vst [vmem:[#allocation1] ss:$2 sm:$0xff] %v2171
      %v2239 = vld.sshfl [vmem:[#allocation1] sm:$0xff pattern:$0x75316420]
      %v2240 = vld.sshfl [vmem:[#allocation1 + $0x8] sm:$0xff pattern:$0x75316420]
      %v2241 = vsel %vm235, %v2239, 0
      %v2243 = vsel %vm235, %v2240, 0
      %2245 = vmatpush.msra.mxu0 0.0
      %2246 = vmatpush.msra.mxu0 0.0
      %2247 = vmatpush.msra.mxu0 0.0
      %2248 = vmatpush.msra.mxu0 0.0
      %2249 = vmatpush.msra.mxu0 0.0
      %2250 = vmatpush.msra.mxu0 0.0
      %2251 = vmatpush.msra.mxu0 0.0
      %2252 = vmatpush.msra.mxu0 0.0
      %2253 = vmatpush.msra.mxu0 0.0
      %2254 = vmatpush.msra.mxu0 0.0
      %2255 = vmatpush.msra.mxu0 0.0
      %2256 = vmatpush.msra.mxu0 0.0
      %2257 = vmatpush.msra.mxu0 0.0
      %2258 = vmatpush.msra.mxu0 0.0
      %2259 = vmatpush.msra.mxu0 0.0
      %2260 = vmatpush.msra.mxu0 %v2241
      %2261 = vmatmul.f32.gmra.mxu0 %v292
      %v2262 = vpop.f32.mrf.mxu0
      %v2263 = vadd.f32 %v2210, %v2262
      %2264 = vmatmul.f32.gmra.mxu0 %v295
      %v2265 = vpop.f32.mrf.mxu0
      %v2266 = vadd.f32 %v2213, %v2265
      %2267 = vdwg.mxu0
      %2268 = vmatpush.msra.mxu0 0.0
      %2269 = vmatpush.msra.mxu0 0.0
      %2270 = vmatpush.msra.mxu0 0.0
      %2271 = vmatpush.msra.mxu0 0.0
      %2272 = vmatpush.msra.mxu0 0.0
      %2273 = vmatpush.msra.mxu0 0.0
      %2274 = vmatpush.msra.mxu0 0.0
      %2275 = vmatpush.msra.mxu0 0.0
      %2276 = vmatpush.msra.mxu0 0.0
      %2277 = vmatpush.msra.mxu0 0.0
      %2278 = vmatpush.msra.mxu0 0.0
      %2279 = vmatpush.msra.mxu0 0.0
      %2280 = vmatpush.msra.mxu0 0.0
      %2281 = vmatpush.msra.mxu0 0.0
      %2282 = vmatpush.msra.mxu0 0.0
      %2283 = vmatpush.msra.mxu0 %v2243
      %2284 = vmatmul.f32.gmra.mxu0 %v292
      %v2285 = vpop.f32.mrf.mxu0
      %v2286 = vadd.f32 %v2233, %v2285
      %2287 = vmatmul.f32.gmra.mxu0 %v295
      %v2288 = vpop.f32.mrf.mxu0
      %v2289 = vadd.f32 %v2236, %v2288
      %2290 = vdwg.mxu0
      %2291 = vst [vmem:[#allocation1] ss:$2 sm:$0xff] %v2171
      %v2292 = vld.sshfl [vmem:[#allocation1] sm:$0xff pattern:$0x75316420]
      %v2293 = vld.sshfl [vmem:[#allocation1 + $0x8] sm:$0xff pattern:$0x75316420]
      %2296 = vrot.lane.b32.xlu0 %v2292, 16
      %v2297 = vpop.permute.xlu0 %2296
      %2298 = vrot.lane.b32.xlu0 %v2293, 16
      %v2299 = vpop.permute.xlu0 %2298
      %v2300 = vsel %vm356, %v2297, %v2299
      %v2301 = vsel %vm356, %v2299, %v2297
      %v2302 = vmul.f32 %v2301, %v360
      %v2303 = vmul.f32 %v2300, %v361
      %v2305 = vsel %vm235, %v2302, 0
      %v2308 = vsel %vm235, %v2303, 0
      %2310 = vmatpush.msra.mxu0 0.0
      %2311 = vmatpush.msra.mxu0 0.0
      %2312 = vmatpush.msra.mxu0 0.0
      %2313 = vmatpush.msra.mxu0 0.0
      %2314 = vmatpush.msra.mxu0 0.0
      %2315 = vmatpush.msra.mxu0 0.0
      %2316 = vmatpush.msra.mxu0 0.0
      %2317 = vmatpush.msra.mxu0 0.0
      %2318 = vmatpush.msra.mxu0 0.0
      %2319 = vmatpush.msra.mxu0 0.0
      %2320 = vmatpush.msra.mxu0 0.0
      %2321 = vmatpush.msra.mxu0 0.0
      %2322 = vmatpush.msra.mxu0 0.0
      %2323 = vmatpush.msra.mxu0 0.0
      %2324 = vmatpush.msra.mxu0 0.0
      %2325 = vmatpush.msra.mxu0 %v2305
      %2326 = vmatmul.f32.gmra.mxu0 %v367
      %v2327 = vpop.f32.mrf.mxu0
      %v2328 = vadd.f32 0.0, %v2327
      %2329 = vmatmul.f32.gmra.mxu0 %v370
      %v2330 = vpop.f32.mrf.mxu0
      %v2331 = vadd.f32 0.0, %v2330
      %2332 = vdwg.mxu0
      %2333 = vmatpush.msra.mxu0 0.0
      %2334 = vmatpush.msra.mxu0 0.0
      %2335 = vmatpush.msra.mxu0 0.0
      %2336 = vmatpush.msra.mxu0 0.0
      %2337 = vmatpush.msra.mxu0 0.0
      %2338 = vmatpush.msra.mxu0 0.0
      %2339 = vmatpush.msra.mxu0 0.0
      %2340 = vmatpush.msra.mxu0 0.0
      %2341 = vmatpush.msra.mxu0 0.0
      %2342 = vmatpush.msra.mxu0 0.0
      %2343 = vmatpush.msra.mxu0 0.0
      %2344 = vmatpush.msra.mxu0 0.0
      %2345 = vmatpush.msra.mxu0 0.0
      %2346 = vmatpush.msra.mxu0 0.0
      %2347 = vmatpush.msra.mxu0 0.0
      %2348 = vmatpush.msra.mxu0 %v2308
      %2349 = vmatmul.f32.gmra.mxu0 %v367
      %v2350 = vpop.f32.mrf.mxu0
      %v2351 = vadd.f32 0.0, %v2350
      %2352 = vmatmul.f32.gmra.mxu0 %v370
      %v2353 = vpop.f32.mrf.mxu0
      %v2354 = vadd.f32 0.0, %v2353
      %2355 = vdwg.mxu0
      %v2356 = vadd.f32 %v2263, %v2328
      %v2357 = vadd.f32 %v2286, %v2351
      %v2358 = vadd.f32 %v2266, %v2331
      %v2359 = vadd.f32 %v2289, %v2354
      %2360 = vst [vmem:[#allocation1] ss:$2 sm:$0xff] %v2171
      %v2361 = vld.sshfl [vmem:[#allocation1] sm:$0xff pattern:$0x75316420]
      %v2362 = vld.sshfl [vmem:[#allocation1 + $0x8] sm:$0xff pattern:$0x75316420]
      %2365 = vrot.lane.b32.xlu0 %v2361, 15
      %v2366 = vpop.permute.xlu0 %2365
      %2367 = vrot.lane.b32.xlu0 %v2362, 15
      %v2368 = vpop.permute.xlu0 %2367
      %v2369 = vsel %vm437, %v2366, %v2368
      %v2370 = vsel %vm437, %v2368, %v2366
      %v2371 = vmul.f32 %v2370, %v441
      %v2372 = vmul.f32 %v2369, %v442
      %v2374 = vsel %vm235, %v2371, 0
      %v2377 = vsel %vm235, %v2372, 0
      %2379 = vmatpush.msra.mxu0 0.0
      %2380 = vmatpush.msra.mxu0 0.0
      %2381 = vmatpush.msra.mxu0 0.0
      %2382 = vmatpush.msra.mxu0 0.0
      %2383 = vmatpush.msra.mxu0 0.0
      %2384 = vmatpush.msra.mxu0 0.0
      %2385 = vmatpush.msra.mxu0 0.0
      %2386 = vmatpush.msra.mxu0 0.0
      %2387 = vmatpush.msra.mxu0 0.0
      %2388 = vmatpush.msra.mxu0 0.0
      %2389 = vmatpush.msra.mxu0 0.0
      %2390 = vmatpush.msra.mxu0 0.0
      %2391 = vmatpush.msra.mxu0 0.0
      %2392 = vmatpush.msra.mxu0 0.0
      %2393 = vmatpush.msra.mxu0 0.0
      %2394 = vmatpush.msra.mxu0 %v2374
      %2395 = vmatmul.f32.gmra.mxu0 %v448
      %v2396 = vpop.f32.mrf.mxu0
      %v2397 = vadd.f32 0.0, %v2396
      %2398 = vmatmul.f32.gmra.mxu0 %v451
      %v2399 = vpop.f32.mrf.mxu0
      %v2400 = vadd.f32 0.0, %v2399
      %2401 = vdwg.mxu0
      %2402 = vmatpush.msra.mxu0 0.0
      %2403 = vmatpush.msra.mxu0 0.0
      %2404 = vmatpush.msra.mxu0 0.0
      %2405 = vmatpush.msra.mxu0 0.0
      %2406 = vmatpush.msra.mxu0 0.0
      %2407 = vmatpush.msra.mxu0 0.0
      %2408 = vmatpush.msra.mxu0 0.0
      %2409 = vmatpush.msra.mxu0 0.0
      %2410 = vmatpush.msra.mxu0 0.0
      %2411 = vmatpush.msra.mxu0 0.0
      %2412 = vmatpush.msra.mxu0 0.0
      %2413 = vmatpush.msra.mxu0 0.0
      %2414 = vmatpush.msra.mxu0 0.0
      %2415 = vmatpush.msra.mxu0 0.0
      %2416 = vmatpush.msra.mxu0 0.0
      %2417 = vmatpush.msra.mxu0 %v2377
      %2418 = vmatmul.f32.gmra.mxu0 %v448
      %v2419 = vpop.f32.mrf.mxu0
      %v2420 = vadd.f32 0.0, %v2419
      %2421 = vmatmul.f32.gmra.mxu0 %v451
      %v2422 = vpop.f32.mrf.mxu0
      %v2423 = vadd.f32 0.0, %v2422
      %2424 = vdwg.mxu0
      %v2425 = vadd.f32 %v2356, %v2397
      %v2426 = vadd.f32 %v2357, %v2420
      %v2427 = vadd.f32 %v2358, %v2400
      %v2428 = vadd.f32 %v2359, %v2423
      %2429 = vst [vmem:[#allocation1] ss:$2 sm:$0xff] %v2171
      %v2430 = vld.sshfl [vmem:[#allocation1] sm:$0xff pattern:$0x75316420]
      %v2431 = vld.sshfl [vmem:[#allocation1 + $0x8] sm:$0xff pattern:$0x75316420]
      %2434 = vrot.lane.b32.xlu0 %v2430, 1
      %v2435 = vpop.permute.xlu0 %2434
      %2436 = vrot.lane.b32.xlu0 %v2431, 1
      %v2437 = vpop.permute.xlu0 %2436
      %v2438 = vsel %vm518, %v2435, %v2437
      %v2439 = vsel %vm518, %v2437, %v2435
      %v2440 = vmul.f32 %v2439, %v522
      %v2441 = vmul.f32 %v2438, %v523
      %v2443 = vsel %vm235, %v2440, 0
      %v2446 = vsel %vm235, %v2441, 0
      %2448 = vmatpush.msra.mxu0 0.0
      %2449 = vmatpush.msra.mxu0 0.0
      %2450 = vmatpush.msra.mxu0 0.0
      %2451 = vmatpush.msra.mxu0 0.0
      %2452 = vmatpush.msra.mxu0 0.0
      %2453 = vmatpush.msra.mxu0 0.0
      %2454 = vmatpush.msra.mxu0 0.0
      %2455 = vmatpush.msra.mxu0 0.0
      %2456 = vmatpush.msra.mxu0 0.0
      %2457 = vmatpush.msra.mxu0 0.0
      %2458 = vmatpush.msra.mxu0 0.0
      %2459 = vmatpush.msra.mxu0 0.0
      %2460 = vmatpush.msra.mxu0 0.0
      %2461 = vmatpush.msra.mxu0 0.0
      %2462 = vmatpush.msra.mxu0 0.0
      %2463 = vmatpush.msra.mxu0 %v2443
      %2464 = vmatmul.f32.gmra.mxu0 %v529
      %v2465 = vpop.f32.mrf.mxu0
      %v2466 = vadd.f32 0.0, %v2465
      %2467 = vmatmul.f32.gmra.mxu0 %v532
      %v2468 = vpop.f32.mrf.mxu0
      %v2469 = vadd.f32 0.0, %v2468
      %2470 = vdwg.mxu0
      %2471 = vmatpush.msra.mxu0 0.0
      %2472 = vmatpush.msra.mxu0 0.0
      %2473 = vmatpush.msra.mxu0 0.0
      %2474 = vmatpush.msra.mxu0 0.0
      %2475 = vmatpush.msra.mxu0 0.0
      %2476 = vmatpush.msra.mxu0 0.0
      %2477 = vmatpush.msra.mxu0 0.0
      %2478 = vmatpush.msra.mxu0 0.0
      %2479 = vmatpush.msra.mxu0 0.0
      %2480 = vmatpush.msra.mxu0 0.0
      %2481 = vmatpush.msra.mxu0 0.0
      %2482 = vmatpush.msra.mxu0 0.0
      %2483 = vmatpush.msra.mxu0 0.0
      %2484 = vmatpush.msra.mxu0 0.0
      %2485 = vmatpush.msra.mxu0 0.0
      %2486 = vmatpush.msra.mxu0 %v2446
      %2487 = vmatmul.f32.gmra.mxu0 %v529
      %v2488 = vpop.f32.mrf.mxu0
      %v2489 = vadd.f32 0.0, %v2488
      %2490 = vmatmul.f32.gmra.mxu0 %v532
      %v2491 = vpop.f32.mrf.mxu0
      %v2492 = vadd.f32 0.0, %v2491
      %2493 = vdwg.mxu0
      %v2494 = vadd.f32 %v2425, %v2466
      %v2495 = vadd.f32 %v2426, %v2489
      %v2496 = vadd.f32 %v2427, %v2469
      %v2497 = vadd.f32 %v2428, %v2492
      %2498 = vst [vmem:[#allocation1] ss:$2 sm:$0xff] %v2171
      %v2499 = vld.sshfl [vmem:[#allocation1] sm:$0xff pattern:$0x75316420]
      %v2500 = vld.sshfl [vmem:[#allocation1 + $0x8] sm:$0xff pattern:$0x75316420]
      %2503 = vrot.lane.b32.xlu0 %v2499, 127
      %v2504 = vpop.permute.xlu0 %2503
      %2505 = vrot.lane.b32.xlu0 %v2500, 127
      %v2506 = vpop.permute.xlu0 %2505
      %v2507 = vsel %vm599, %v2504, %v2506
      %v2508 = vsel %vm599, %v2506, %v2504
      %v2509 = vmul.f32 %v2507, %v603
      %v2510 = vmul.f32 %v2508, %v604
      %v2512 = vsel %vm235, %v2509, 0
      %v2515 = vsel %vm235, %v2510, 0
      %2517 = vmatpush.msra.mxu0 0.0
      %2518 = vmatpush.msra.mxu0 0.0
      %2519 = vmatpush.msra.mxu0 0.0
      %2520 = vmatpush.msra.mxu0 0.0
      %2521 = vmatpush.msra.mxu0 0.0
      %2522 = vmatpush.msra.mxu0 0.0
      %2523 = vmatpush.msra.mxu0 0.0
      %2524 = vmatpush.msra.mxu0 0.0
      %2525 = vmatpush.msra.mxu0 0.0
      %2526 = vmatpush.msra.mxu0 0.0
      %2527 = vmatpush.msra.mxu0 0.0
      %2528 = vmatpush.msra.mxu0 0.0
      %2529 = vmatpush.msra.mxu0 0.0
      %2530 = vmatpush.msra.mxu0 0.0
      %2531 = vmatpush.msra.mxu0 0.0
      %2532 = vmatpush.msra.mxu0 %v2512
      %2533 = vmatmul.f32.gmra.mxu0 %v610
      %v2534 = vpop.f32.mrf.mxu0
      %v2535 = vadd.f32 0.0, %v2534
      %2536 = vmatmul.f32.gmra.mxu0 %v613
      %v2537 = vpop.f32.mrf.mxu0
      %v2538 = vadd.f32 0.0, %v2537
      %2539 = vdwg.mxu0
      %2540 = vmatpush.msra.mxu0 0.0
      %2541 = vmatpush.msra.mxu0 0.0
      %2542 = vmatpush.msra.mxu0 0.0
      %2543 = vmatpush.msra.mxu0 0.0
      %2544 = vmatpush.msra.mxu0 0.0
      %2545 = vmatpush.msra.mxu0 0.0
      %2546 = vmatpush.msra.mxu0 0.0
      %2547 = vmatpush.msra.mxu0 0.0
      %2548 = vmatpush.msra.mxu0 0.0
      %2549 = vmatpush.msra.mxu0 0.0
      %2550 = vmatpush.msra.mxu0 0.0
      %2551 = vmatpush.msra.mxu0 0.0
      %2552 = vmatpush.msra.mxu0 0.0
      %2553 = vmatpush.msra.mxu0 0.0
      %2554 = vmatpush.msra.mxu0 0.0
      %2555 = vmatpush.msra.mxu0 %v2515
      %2556 = vmatmul.f32.gmra.mxu0 %v610
      %v2557 = vpop.f32.mrf.mxu0
      %v2558 = vadd.f32 0.0, %v2557
      %2559 = vmatmul.f32.gmra.mxu0 %v613
      %v2560 = vpop.f32.mrf.mxu0
      %v2561 = vadd.f32 0.0, %v2560
      %2562 = vdwg.mxu0
      %v2563 = vadd.f32 %v2494, %v2535
      %v2564 = vadd.f32 %v2495, %v2558
      %v2565 = vadd.f32 %v2496, %v2538
      %v2566 = vadd.f32 %v2497, %v2561
      %2567 = vst [vmem:[#allocation1] ss:$2 sm:$0xff] %v2171
      %v2568 = vld.sshfl [vmem:[#allocation1] sm:$0xff pattern:$0x75316420]
      %v2569 = vld.sshfl [vmem:[#allocation1 + $0x8] sm:$0xff pattern:$0x75316420]
      %2572 = vrot.lane.b32.xlu0 %v2568, 113
      %v2573 = vpop.permute.xlu0 %2572
      %2574 = vrot.lane.b32.xlu0 %v2569, 113
      %v2575 = vpop.permute.xlu0 %2574
      %v2576 = vsel %vm680, %v2573, %v2575
      %v2577 = vsel %vm680, %v2575, %v2573
      %v2578 = vmul.f32 %v2576, %v684
      %v2579 = vmul.f32 %v2577, %v685
      %v2581 = vsel %vm235, %v2578, 0
      %v2584 = vsel %vm235, %v2579, 0
      %2586 = vmatpush.msra.mxu0 0.0
      %2587 = vmatpush.msra.mxu0 0.0
      %2588 = vmatpush.msra.mxu0 0.0
      %2589 = vmatpush.msra.mxu0 0.0
      %2590 = vmatpush.msra.mxu0 0.0
      %2591 = vmatpush.msra.mxu0 0.0
      %2592 = vmatpush.msra.mxu0 0.0
      %2593 = vmatpush.msra.mxu0 0.0
      %2594 = vmatpush.msra.mxu0 0.0
      %2595 = vmatpush.msra.mxu0 0.0
      %2596 = vmatpush.msra.mxu0 0.0
      %2597 = vmatpush.msra.mxu0 0.0
      %2598 = vmatpush.msra.mxu0 0.0
      %2599 = vmatpush.msra.mxu0 0.0
      %2600 = vmatpush.msra.mxu0 0.0
      %2601 = vmatpush.msra.mxu0 %v2581
      %2602 = vmatmul.f32.gmra.mxu0 %v691
      %v2603 = vpop.f32.mrf.mxu0
      %v2604 = vadd.f32 0.0, %v2603
      %2605 = vmatmul.f32.gmra.mxu0 %v694
      %v2606 = vpop.f32.mrf.mxu0
      %v2607 = vadd.f32 0.0, %v2606
      %2608 = vdwg.mxu0
      %2609 = vmatpush.msra.mxu0 0.0
      %2610 = vmatpush.msra.mxu0 0.0
      %2611 = vmatpush.msra.mxu0 0.0
      %2612 = vmatpush.msra.mxu0 0.0
      %2613 = vmatpush.msra.mxu0 0.0
      %2614 = vmatpush.msra.mxu0 0.0
      %2615 = vmatpush.msra.mxu0 0.0
      %2616 = vmatpush.msra.mxu0 0.0
      %2617 = vmatpush.msra.mxu0 0.0
      %2618 = vmatpush.msra.mxu0 0.0
      %2619 = vmatpush.msra.mxu0 0.0
      %2620 = vmatpush.msra.mxu0 0.0
      %2621 = vmatpush.msra.mxu0 0.0
      %2622 = vmatpush.msra.mxu0 0.0
      %2623 = vmatpush.msra.mxu0 0.0
      %2624 = vmatpush.msra.mxu0 %v2584
      %2625 = vmatmul.f32.gmra.mxu0 %v691
      %v2626 = vpop.f32.mrf.mxu0
      %v2627 = vadd.f32 0.0, %v2626
      %2628 = vmatmul.f32.gmra.mxu0 %v694
      %v2629 = vpop.f32.mrf.mxu0
      %v2630 = vadd.f32 0.0, %v2629
      %2631 = vdwg.mxu0
      %v2632 = vadd.f32 %v2563, %v2604
      %v2633 = vadd.f32 %v2564, %v2627
      %v2634 = vadd.f32 %v2565, %v2607
      %v2635 = vadd.f32 %v2566, %v2630
      %2636 = vst [vmem:[#allocation1] ss:$2 sm:$0xff] %v2171
      %v2637 = vld.sshfl [vmem:[#allocation1] sm:$0xff pattern:$0x75316420]
      %v2638 = vld.sshfl [vmem:[#allocation1 + $0x8] sm:$0xff pattern:$0x75316420]
      %2641 = vrot.lane.b32.xlu0 %v2637, 112
      %v2642 = vpop.permute.xlu0 %2641
      %2643 = vrot.lane.b32.xlu0 %v2638, 112
      %v2644 = vpop.permute.xlu0 %2643
      %v2645 = vsel %vm761, %v2642, %v2644
      %v2646 = vsel %vm761, %v2644, %v2642
      %v2647 = vmul.f32 %v2645, %v765
      %v2648 = vmul.f32 %v2646, %v766
      %v2650 = vsel %vm235, %v2647, 0
      %v2653 = vsel %vm235, %v2648, 0
      %2655 = vmatpush.msra.mxu0 0.0
      %2656 = vmatpush.msra.mxu0 0.0
      %2657 = vmatpush.msra.mxu0 0.0
      %2658 = vmatpush.msra.mxu0 0.0
      %2659 = vmatpush.msra.mxu0 0.0
      %2660 = vmatpush.msra.mxu0 0.0
      %2661 = vmatpush.msra.mxu0 0.0
      %2662 = vmatpush.msra.mxu0 0.0
      %2663 = vmatpush.msra.mxu0 0.0
      %2664 = vmatpush.msra.mxu0 0.0
      %2665 = vmatpush.msra.mxu0 0.0
      %2666 = vmatpush.msra.mxu0 0.0
      %2667 = vmatpush.msra.mxu0 0.0
      %2668 = vmatpush.msra.mxu0 0.0
      %2669 = vmatpush.msra.mxu0 0.0
      %2670 = vmatpush.msra.mxu0 %v2650
      %2671 = vmatmul.f32.gmra.mxu0 %v772
      %v2672 = vpop.f32.mrf.mxu0
      %v2673 = vadd.f32 0.0, %v2672
      %2674 = vmatmul.f32.gmra.mxu0 %v775
      %v2675 = vpop.f32.mrf.mxu0
      %v2676 = vadd.f32 0.0, %v2675
      %2677 = vdwg.mxu0
      %2678 = vmatpush.msra.mxu0 0.0
      %2679 = vmatpush.msra.mxu0 0.0
      %2680 = vmatpush.msra.mxu0 0.0
      %2681 = vmatpush.msra.mxu0 0.0
      %2682 = vmatpush.msra.mxu0 0.0
      %2683 = vmatpush.msra.mxu0 0.0
      %2684 = vmatpush.msra.mxu0 0.0
      %2685 = vmatpush.msra.mxu0 0.0
      %2686 = vmatpush.msra.mxu0 0.0
      %2687 = vmatpush.msra.mxu0 0.0
      %2688 = vmatpush.msra.mxu0 0.0
      %2689 = vmatpush.msra.mxu0 0.0
      %2690 = vmatpush.msra.mxu0 0.0
      %2691 = vmatpush.msra.mxu0 0.0
      %2692 = vmatpush.msra.mxu0 0.0
      %2693 = vmatpush.msra.mxu0 %v2653
      %2694 = vmatmul.f32.gmra.mxu0 %v772
      %v2695 = vpop.f32.mrf.mxu0
      %v2696 = vadd.f32 0.0, %v2695
      %2697 = vmatmul.f32.gmra.mxu0 %v775
      %v2698 = vpop.f32.mrf.mxu0
      %v2699 = vadd.f32 0.0, %v2698
      %2700 = vdwg.mxu0
      %v2701 = vadd.f32 %v2632, %v2673
      %v2702 = vadd.f32 %v2633, %v2696
      %v2703 = vadd.f32 %v2634, %v2676
      %v2704 = vadd.f32 %v2635, %v2699
      %2705 = vst [vmem:[#allocation1] ss:$2 sm:$0xff] %v2171
      %v2706 = vld.sshfl [vmem:[#allocation1] sm:$0xff pattern:$0x75316420]
      %v2707 = vld.sshfl [vmem:[#allocation1 + $0x8] sm:$0xff pattern:$0x75316420]
      %2710 = vrot.lane.b32.xlu0 %v2706, 111
      %v2711 = vpop.permute.xlu0 %2710
      %2712 = vrot.lane.b32.xlu0 %v2707, 111
      %v2713 = vpop.permute.xlu0 %2712
      %v2714 = vsel %vm842, %v2711, %v2713
      %v2715 = vsel %vm842, %v2713, %v2711
      %v2716 = vmul.f32 %v2714, %v846
      %v2717 = vmul.f32 %v2715, %v847
      %v2719 = vsel %vm235, %v2716, 0
      %v2722 = vsel %vm235, %v2717, 0
      %2724 = vmatpush.msra.mxu0 0.0
      %2725 = vmatpush.msra.mxu0 0.0
      %2726 = vmatpush.msra.mxu0 0.0
      %2727 = vmatpush.msra.mxu0 0.0
      %2728 = vmatpush.msra.mxu0 0.0
      %2729 = vmatpush.msra.mxu0 0.0
      %2730 = vmatpush.msra.mxu0 0.0
      %2731 = vmatpush.msra.mxu0 0.0
      %2732 = vmatpush.msra.mxu0 0.0
      %2733 = vmatpush.msra.mxu0 0.0
      %2734 = vmatpush.msra.mxu0 0.0
      %2735 = vmatpush.msra.mxu0 0.0
      %2736 = vmatpush.msra.mxu0 0.0
      %2737 = vmatpush.msra.mxu0 0.0
      %2738 = vmatpush.msra.mxu0 0.0
      %2739 = vmatpush.msra.mxu0 %v2719
      %2740 = vmatmul.f32.gmra.mxu0 %v853
      %v2741 = vpop.f32.mrf.mxu0
      %v2742 = vadd.f32 0.0, %v2741
      %2743 = vmatmul.f32.gmra.mxu0 %v856
      %v2744 = vpop.f32.mrf.mxu0
      %v2745 = vadd.f32 0.0, %v2744
      %2746 = vdwg.mxu0
      %2747 = vmatpush.msra.mxu0 0.0
      %2748 = vmatpush.msra.mxu0 0.0
      %2749 = vmatpush.msra.mxu0 0.0
      %2750 = vmatpush.msra.mxu0 0.0
      %2751 = vmatpush.msra.mxu0 0.0
      %2752 = vmatpush.msra.mxu0 0.0
      %2753 = vmatpush.msra.mxu0 0.0
      %2754 = vmatpush.msra.mxu0 0.0
      %2755 = vmatpush.msra.mxu0 0.0
      %2756 = vmatpush.msra.mxu0 0.0
      %2757 = vmatpush.msra.mxu0 0.0
      %2758 = vmatpush.msra.mxu0 0.0
      %2759 = vmatpush.msra.mxu0 0.0
      %2760 = vmatpush.msra.mxu0 0.0
      %2761 = vmatpush.msra.mxu0 0.0
      %2762 = vmatpush.msra.mxu0 %v2722
      %2763 = vmatmul.f32.gmra.mxu0 %v853
      %v2764 = vpop.f32.mrf.mxu0
      %v2765 = vadd.f32 0.0, %v2764
      %2766 = vmatmul.f32.gmra.mxu0 %v856
      %v2767 = vpop.f32.mrf.mxu0
      %v2768 = vadd.f32 0.0, %v2767
      %2769 = vdwg.mxu0
      %v2770 = vadd.f32 %v2701, %v2742
      %v2771 = vadd.f32 %v2702, %v2765
      %v2772 = vadd.f32 %v2703, %v2745
      %v2773 = vadd.f32 %v2704, %v2768
      %vm2774 = vcmp.ge.f32.partialorder %v2770, 0.0
      %vm2775 = vcmp.ge.f32.partialorder %v2771, 0.0
      %vm2776 = vcmp.ge.f32.partialorder %v2772, 0.0
      %vm2777 = vcmp.ge.f32.partialorder %v2773, 0.0
      %v2778 = vmul.f32 %v2770, 0.01
      %v2779 = vmul.f32 %v2771, 0.01
      %v2780 = vmul.f32 %v2772, 0.01
      %v2781 = vmul.f32 %v2773, 0.01
      %v2782 = vsel %vm2774, %v2770, %v2778
      %v2783 = vsel %vm2775, %v2771, %v2779
      %v2784 = vsel %vm2776, %v2772, %v2780
      %v2785 = vsel %vm2777, %v2773, %v2781
      %s2786 = scalar_lea.vmem %s170, 32
      %v2787 = vld [vmem:[%s2786] sm:$0x77]
      %2789 = vst [vmem:[#allocation1] ss:$2 sm:$0xff] %v2787
      %v2790 = vld.sshfl [vmem:[#allocation1] sm:$0xff pattern:$0x75316420]
      %v2791 = vld.sshfl [vmem:[#allocation1 + $0x8] sm:$0xff pattern:$0x75316420]
      %2794 = vrot.lane.b32.xlu0 %v2790, 17
      %v2795 = vpop.permute.xlu0 %2794
      %2796 = vrot.lane.b32.xlu0 %v2791, 17
      %v2797 = vpop.permute.xlu0 %2796
      %v2798 = vsel %vm218, %v2795, %v2797
      %v2799 = vsel %vm218, %v2797, %v2795
      %v2800 = vmul.f32 %v2799, %v222
      %v2801 = vmul.f32 %v2798, %v223
      %v2803 = vsel %vm235, %v2800, 0
      %v2806 = vsel %vm235, %v2801, 0
      %2808 = vmatpush.msra.mxu0 0.0
      %2809 = vmatpush.msra.mxu0 0.0
      %2810 = vmatpush.msra.mxu0 0.0
      %2811 = vmatpush.msra.mxu0 0.0
      %2812 = vmatpush.msra.mxu0 0.0
      %2813 = vmatpush.msra.mxu0 0.0
      %2814 = vmatpush.msra.mxu0 0.0
      %2815 = vmatpush.msra.mxu0 0.0
      %2816 = vmatpush.msra.mxu0 0.0
      %2817 = vmatpush.msra.mxu0 0.0
      %2818 = vmatpush.msra.mxu0 0.0
      %2819 = vmatpush.msra.mxu0 0.0
      %2820 = vmatpush.msra.mxu0 0.0
      %2821 = vmatpush.msra.mxu0 0.0
      %2822 = vmatpush.msra.mxu0 0.0
      %2823 = vmatpush.msra.mxu0 %v2803
      %2824 = vmatmul.f32.gmra.mxu0 %v230
      %v2825 = vpop.f32.mrf.mxu0
      %v2826 = vadd.f32 0.0, %v2825
      %2827 = vmatmul.f32.gmra.mxu0 %v233
      %v2828 = vpop.f32.mrf.mxu0
      %v2829 = vadd.f32 0.0, %v2828
      %2830 = vdwg.mxu0
      %2831 = vmatpush.msra.mxu0 0.0
      %2832 = vmatpush.msra.mxu0 0.0
      %2833 = vmatpush.msra.mxu0 0.0
      %2834 = vmatpush.msra.mxu0 0.0
      %2835 = vmatpush.msra.mxu0 0.0
      %2836 = vmatpush.msra.mxu0 0.0
      %2837 = vmatpush.msra.mxu0 0.0
      %2838 = vmatpush.msra.mxu0 0.0
      %2839 = vmatpush.msra.mxu0 0.0
      %2840 = vmatpush.msra.mxu0 0.0
      %2841 = vmatpush.msra.mxu0 0.0
      %2842 = vmatpush.msra.mxu0 0.0
      %2843 = vmatpush.msra.mxu0 0.0
      %2844 = vmatpush.msra.mxu0 0.0
      %2845 = vmatpush.msra.mxu0 0.0
      %2846 = vmatpush.msra.mxu0 %v2806
      %2847 = vmatmul.f32.gmra.mxu0 %v230
      %v2848 = vpop.f32.mrf.mxu0
      %v2849 = vadd.f32 0.0, %v2848
      %2850 = vmatmul.f32.gmra.mxu0 %v233
      %v2851 = vpop.f32.mrf.mxu0
      %v2852 = vadd.f32 0.0, %v2851
      %2853 = vdwg.mxu0
      %2854 = vst [vmem:[#allocation1] ss:$2 sm:$0xff] %v2787
      %v2855 = vld.sshfl [vmem:[#allocation1] sm:$0xff pattern:$0x75316420]
      %v2856 = vld.sshfl [vmem:[#allocation1 + $0x8] sm:$0xff pattern:$0x75316420]
      %v2857 = vsel %vm235, %v2855, 0
      %v2859 = vsel %vm235, %v2856, 0
      %2861 = vmatpush.msra.mxu0 0.0
      %2862 = vmatpush.msra.mxu0 0.0
      %2863 = vmatpush.msra.mxu0 0.0
      %2864 = vmatpush.msra.mxu0 0.0
      %2865 = vmatpush.msra.mxu0 0.0
      %2866 = vmatpush.msra.mxu0 0.0
      %2867 = vmatpush.msra.mxu0 0.0
      %2868 = vmatpush.msra.mxu0 0.0
      %2869 = vmatpush.msra.mxu0 0.0
      %2870 = vmatpush.msra.mxu0 0.0
      %2871 = vmatpush.msra.mxu0 0.0
      %2872 = vmatpush.msra.mxu0 0.0
      %2873 = vmatpush.msra.mxu0 0.0
      %2874 = vmatpush.msra.mxu0 0.0
      %2875 = vmatpush.msra.mxu0 0.0
      %2876 = vmatpush.msra.mxu0 %v2857
      %2877 = vmatmul.f32.gmra.mxu0 %v292
      %v2878 = vpop.f32.mrf.mxu0
      %v2879 = vadd.f32 %v2826, %v2878
      %2880 = vmatmul.f32.gmra.mxu0 %v295
      %v2881 = vpop.f32.mrf.mxu0
      %v2882 = vadd.f32 %v2829, %v2881
      %2883 = vdwg.mxu0
      %2884 = vmatpush.msra.mxu0 0.0
      %2885 = vmatpush.msra.mxu0 0.0
      %2886 = vmatpush.msra.mxu0 0.0
      %2887 = vmatpush.msra.mxu0 0.0
      %2888 = vmatpush.msra.mxu0 0.0
      %2889 = vmatpush.msra.mxu0 0.0
      %2890 = vmatpush.msra.mxu0 0.0
      %2891 = vmatpush.msra.mxu0 0.0
      %2892 = vmatpush.msra.mxu0 0.0
      %2893 = vmatpush.msra.mxu0 0.0
      %2894 = vmatpush.msra.mxu0 0.0
      %2895 = vmatpush.msra.mxu0 0.0
      %2896 = vmatpush.msra.mxu0 0.0
      %2897 = vmatpush.msra.mxu0 0.0
      %2898 = vmatpush.msra.mxu0 0.0
      %2899 = vmatpush.msra.mxu0 %v2859
      %2900 = vmatmul.f32.gmra.mxu0 %v292
      %v2901 = vpop.f32.mrf.mxu0
      %v2902 = vadd.f32 %v2849, %v2901
      %2903 = vmatmul.f32.gmra.mxu0 %v295
      %v2904 = vpop.f32.mrf.mxu0
      %v2905 = vadd.f32 %v2852, %v2904
      %2906 = vdwg.mxu0
      %2907 = vst [vmem:[#allocation1] ss:$2 sm:$0xff] %v2787
      %v2908 = vld.sshfl [vmem:[#allocation1] sm:$0xff pattern:$0x75316420]
      %v2909 = vld.sshfl [vmem:[#allocation1 + $0x8] sm:$0xff pattern:$0x75316420]
      %2912 = vrot.lane.b32.xlu0 %v2908, 16
      %v2913 = vpop.permute.xlu0 %2912
      %2914 = vrot.lane.b32.xlu0 %v2909, 16
      %v2915 = vpop.permute.xlu0 %2914
      %v2916 = vsel %vm356, %v2913, %v2915
      %v2917 = vsel %vm356, %v2915, %v2913
      %v2918 = vmul.f32 %v2917, %v360
      %v2919 = vmul.f32 %v2916, %v361
      %v2921 = vsel %vm235, %v2918, 0
      %v2924 = vsel %vm235, %v2919, 0
      %2926 = vmatpush.msra.mxu0 0.0
      %2927 = vmatpush.msra.mxu0 0.0
      %2928 = vmatpush.msra.mxu0 0.0
      %2929 = vmatpush.msra.mxu0 0.0
      %2930 = vmatpush.msra.mxu0 0.0
      %2931 = vmatpush.msra.mxu0 0.0
      %2932 = vmatpush.msra.mxu0 0.0
      %2933 = vmatpush.msra.mxu0 0.0
      %2934 = vmatpush.msra.mxu0 0.0
      %2935 = vmatpush.msra.mxu0 0.0
      %2936 = vmatpush.msra.mxu0 0.0
      %2937 = vmatpush.msra.mxu0 0.0
      %2938 = vmatpush.msra.mxu0 0.0
      %2939 = vmatpush.msra.mxu0 0.0
      %2940 = vmatpush.msra.mxu0 0.0
      %2941 = vmatpush.msra.mxu0 %v2921
      %2942 = vmatmul.f32.gmra.mxu0 %v367
      %v2943 = vpop.f32.mrf.mxu0
      %v2944 = vadd.f32 0.0, %v2943
      %2945 = vmatmul.f32.gmra.mxu0 %v370
      %v2946 = vpop.f32.mrf.mxu0
      %v2947 = vadd.f32 0.0, %v2946
      %2948 = vdwg.mxu0
      %2949 = vmatpush.msra.mxu0 0.0
      %2950 = vmatpush.msra.mxu0 0.0
      %2951 = vmatpush.msra.mxu0 0.0
      %2952 = vmatpush.msra.mxu0 0.0
      %2953 = vmatpush.msra.mxu0 0.0
      %2954 = vmatpush.msra.mxu0 0.0
      %2955 = vmatpush.msra.mxu0 0.0
      %2956 = vmatpush.msra.mxu0 0.0
      %2957 = vmatpush.msra.mxu0 0.0
      %2958 = vmatpush.msra.mxu0 0.0
      %2959 = vmatpush.msra.mxu0 0.0
      %2960 = vmatpush.msra.mxu0 0.0
      %2961 = vmatpush.msra.mxu0 0.0
      %2962 = vmatpush.msra.mxu0 0.0
      %2963 = vmatpush.msra.mxu0 0.0
      %2964 = vmatpush.msra.mxu0 %v2924
      %2965 = vmatmul.f32.gmra.mxu0 %v367
      %v2966 = vpop.f32.mrf.mxu0
      %v2967 = vadd.f32 0.0, %v2966
      %2968 = vmatmul.f32.gmra.mxu0 %v370
      %v2969 = vpop.f32.mrf.mxu0
      %v2970 = vadd.f32 0.0, %v2969
      %2971 = vdwg.mxu0
      %v2972 = vadd.f32 %v2879, %v2944
      %v2973 = vadd.f32 %v2902, %v2967
      %v2974 = vadd.f32 %v2882, %v2947
      %v2975 = vadd.f32 %v2905, %v2970
      %2976 = vst [vmem:[#allocation1] ss:$2 sm:$0xff] %v2787
      %v2977 = vld.sshfl [vmem:[#allocation1] sm:$0xff pattern:$0x75316420]
      %v2978 = vld.sshfl [vmem:[#allocation1 + $0x8] sm:$0xff pattern:$0x75316420]
      %2981 = vrot.lane.b32.xlu0 %v2977, 15
      %v2982 = vpop.permute.xlu0 %2981
      %2983 = vrot.lane.b32.xlu0 %v2978, 15
      %v2984 = vpop.permute.xlu0 %2983
      %v2985 = vsel %vm437, %v2982, %v2984
      %v2986 = vsel %vm437, %v2984, %v2982
      %v2987 = vmul.f32 %v2986, %v441
      %v2988 = vmul.f32 %v2985, %v442
      %v2990 = vsel %vm235, %v2987, 0
      %v2993 = vsel %vm235, %v2988, 0
      %2995 = vmatpush.msra.mxu0 0.0
      %2996 = vmatpush.msra.mxu0 0.0
      %2997 = vmatpush.msra.mxu0 0.0
      %2998 = vmatpush.msra.mxu0 0.0
      %2999 = vmatpush.msra.mxu0 0.0
      %3000 = vmatpush.msra.mxu0 0.0
      %3001 = vmatpush.msra.mxu0 0.0
      %3002 = vmatpush.msra.mxu0 0.0
      %3003 = vmatpush.msra.mxu0 0.0
      %3004 = vmatpush.msra.mxu0 0.0
      %3005 = vmatpush.msra.mxu0 0.0
      %3006 = vmatpush.msra.mxu0 0.0
      %3007 = vmatpush.msra.mxu0 0.0
      %3008 = vmatpush.msra.mxu0 0.0
      %3009 = vmatpush.msra.mxu0 0.0
      %3010 = vmatpush.msra.mxu0 %v2990
      %3011 = vmatmul.f32.gmra.mxu0 %v448
      %v3012 = vpop.f32.mrf.mxu0
      %v3013 = vadd.f32 0.0, %v3012
      %3014 = vmatmul.f32.gmra.mxu0 %v451
      %v3015 = vpop.f32.mrf.mxu0
      %v3016 = vadd.f32 0.0, %v3015
      %3017 = vdwg.mxu0
      %3018 = vmatpush.msra.mxu0 0.0
      %3019 = vmatpush.msra.mxu0 0.0
      %3020 = vmatpush.msra.mxu0 0.0
      %3021 = vmatpush.msra.mxu0 0.0
      %3022 = vmatpush.msra.mxu0 0.0
      %3023 = vmatpush.msra.mxu0 0.0
      %3024 = vmatpush.msra.mxu0 0.0
      %3025 = vmatpush.msra.mxu0 0.0
      %3026 = vmatpush.msra.mxu0 0.0
      %3027 = vmatpush.msra.mxu0 0.0
      %3028 = vmatpush.msra.mxu0 0.0
      %3029 = vmatpush.msra.mxu0 0.0
      %3030 = vmatpush.msra.mxu0 0.0
      %3031 = vmatpush.msra.mxu0 0.0
      %3032 = vmatpush.msra.mxu0 0.0
      %3033 = vmatpush.msra.mxu0 %v2993
      %3034 = vmatmul.f32.gmra.mxu0 %v448
      %v3035 = vpop.f32.mrf.mxu0
      %v3036 = vadd.f32 0.0, %v3035
      %3037 = vmatmul.f32.gmra.mxu0 %v451
      %v3038 = vpop.f32.mrf.mxu0
      %v3039 = vadd.f32 0.0, %v3038
      %3040 = vdwg.mxu0
      %v3041 = vadd.f32 %v2972, %v3013
      %v3042 = vadd.f32 %v2973, %v3036
      %v3043 = vadd.f32 %v2974, %v3016
      %v3044 = vadd.f32 %v2975, %v3039
      %3045 = vst [vmem:[#allocation1] ss:$2 sm:$0xff] %v2787
      %v3046 = vld.sshfl [vmem:[#allocation1] sm:$0xff pattern:$0x75316420]
      %v3047 = vld.sshfl [vmem:[#allocation1 + $0x8] sm:$0xff pattern:$0x75316420]
      %3050 = vrot.lane.b32.xlu0 %v3046, 1
      %v3051 = vpop.permute.xlu0 %3050
      %3052 = vrot.lane.b32.xlu0 %v3047, 1
      %v3053 = vpop.permute.xlu0 %3052
      %v3054 = vsel %vm518, %v3051, %v3053
      %v3055 = vsel %vm518, %v3053, %v3051
      %v3056 = vmul.f32 %v3055, %v522
      %v3057 = vmul.f32 %v3054, %v523
      %v3059 = vsel %vm235, %v3056, 0
      %v3062 = vsel %vm235, %v3057, 0
      %3064 = vmatpush.msra.mxu0 0.0
      %3065 = vmatpush.msra.mxu0 0.0
      %3066 = vmatpush.msra.mxu0 0.0
      %3067 = vmatpush.msra.mxu0 0.0
      %3068 = vmatpush.msra.mxu0 0.0
      %3069 = vmatpush.msra.mxu0 0.0
      %3070 = vmatpush.msra.mxu0 0.0
      %3071 = vmatpush.msra.mxu0 0.0
      %3072 = vmatpush.msra.mxu0 0.0
      %3073 = vmatpush.msra.mxu0 0.0
      %3074 = vmatpush.msra.mxu0 0.0
      %3075 = vmatpush.msra.mxu0 0.0
      %3076 = vmatpush.msra.mxu0 0.0
      %3077 = vmatpush.msra.mxu0 0.0
      %3078 = vmatpush.msra.mxu0 0.0
      %3079 = vmatpush.msra.mxu0 %v3059
      %3080 = vmatmul.f32.gmra.mxu0 %v529
      %v3081 = vpop.f32.mrf.mxu0
      %v3082 = vadd.f32 0.0, %v3081
      %3083 = vmatmul.f32.gmra.mxu0 %v532
      %v3084 = vpop.f32.mrf.mxu0
      %v3085 = vadd.f32 0.0, %v3084
      %3086 = vdwg.mxu0
      %3087 = vmatpush.msra.mxu0 0.0
      %3088 = vmatpush.msra.mxu0 0.0
      %3089 = vmatpush.msra.mxu0 0.0
      %3090 = vmatpush.msra.mxu0 0.0
      %3091 = vmatpush.msra.mxu0 0.0
      %3092 = vmatpush.msra.mxu0 0.0
      %3093 = vmatpush.msra.mxu0 0.0
      %3094 = vmatpush.msra.mxu0 0.0
      %3095 = vmatpush.msra.mxu0 0.0
      %3096 = vmatpush.msra.mxu0 0.0
      %3097 = vmatpush.msra.mxu0 0.0
      %3098 = vmatpush.msra.mxu0 0.0
      %3099 = vmatpush.msra.mxu0 0.0
      %3100 = vmatpush.msra.mxu0 0.0
      %3101 = vmatpush.msra.mxu0 0.0
      %3102 = vmatpush.msra.mxu0 %v3062
      %3103 = vmatmul.f32.gmra.mxu0 %v529
      %v3104 = vpop.f32.mrf.mxu0
      %v3105 = vadd.f32 0.0, %v3104
      %3106 = vmatmul.f32.gmra.mxu0 %v532
      %v3107 = vpop.f32.mrf.mxu0
      %v3108 = vadd.f32 0.0, %v3107
      %3109 = vdwg.mxu0
      %v3110 = vadd.f32 %v3041, %v3082
      %v3111 = vadd.f32 %v3042, %v3105
      %v3112 = vadd.f32 %v3043, %v3085
      %v3113 = vadd.f32 %v3044, %v3108
      %3114 = vst [vmem:[#allocation1] ss:$2 sm:$0xff] %v2787
      %v3115 = vld.sshfl [vmem:[#allocation1] sm:$0xff pattern:$0x75316420]
      %v3116 = vld.sshfl [vmem:[#allocation1 + $0x8] sm:$0xff pattern:$0x75316420]
      %3119 = vrot.lane.b32.xlu0 %v3115, 127
      %v3120 = vpop.permute.xlu0 %3119
      %3121 = vrot.lane.b32.xlu0 %v3116, 127
      %v3122 = vpop.permute.xlu0 %3121
      %v3123 = vsel %vm599, %v3120, %v3122
      %v3124 = vsel %vm599, %v3122, %v3120
      %v3125 = vmul.f32 %v3123, %v603
      %v3126 = vmul.f32 %v3124, %v604
      %v3128 = vsel %vm235, %v3125, 0
      %v3131 = vsel %vm235, %v3126, 0
      %3133 = vmatpush.msra.mxu0 0.0
      %3134 = vmatpush.msra.mxu0 0.0
      %3135 = vmatpush.msra.mxu0 0.0
      %3136 = vmatpush.msra.mxu0 0.0
      %3137 = vmatpush.msra.mxu0 0.0
      %3138 = vmatpush.msra.mxu0 0.0
      %3139 = vmatpush.msra.mxu0 0.0
      %3140 = vmatpush.msra.mxu0 0.0
      %3141 = vmatpush.msra.mxu0 0.0
      %3142 = vmatpush.msra.mxu0 0.0
      %3143 = vmatpush.msra.mxu0 0.0
      %3144 = vmatpush.msra.mxu0 0.0
      %3145 = vmatpush.msra.mxu0 0.0
      %3146 = vmatpush.msra.mxu0 0.0
      %3147 = vmatpush.msra.mxu0 0.0
      %3148 = vmatpush.msra.mxu0 %v3128
      %3149 = vmatmul.f32.gmra.mxu0 %v610
      %v3150 = vpop.f32.mrf.mxu0
      %v3151 = vadd.f32 0.0, %v3150
      %3152 = vmatmul.f32.gmra.mxu0 %v613
      %v3153 = vpop.f32.mrf.mxu0
      %v3154 = vadd.f32 0.0, %v3153
      %3155 = vdwg.mxu0
      %3156 = vmatpush.msra.mxu0 0.0
      %3157 = vmatpush.msra.mxu0 0.0
      %3158 = vmatpush.msra.mxu0 0.0
      %3159 = vmatpush.msra.mxu0 0.0
      %3160 = vmatpush.msra.mxu0 0.0
      %3161 = vmatpush.msra.mxu0 0.0
      %3162 = vmatpush.msra.mxu0 0.0
      %3163 = vmatpush.msra.mxu0 0.0
      %3164 = vmatpush.msra.mxu0 0.0
      %3165 = vmatpush.msra.mxu0 0.0
      %3166 = vmatpush.msra.mxu0 0.0
      %3167 = vmatpush.msra.mxu0 0.0
      %3168 = vmatpush.msra.mxu0 0.0
      %3169 = vmatpush.msra.mxu0 0.0
      %3170 = vmatpush.msra.mxu0 0.0
      %3171 = vmatpush.msra.mxu0 %v3131
      %3172 = vmatmul.f32.gmra.mxu0 %v610
      %v3173 = vpop.f32.mrf.mxu0
      %v3174 = vadd.f32 0.0, %v3173
      %3175 = vmatmul.f32.gmra.mxu0 %v613
      %v3176 = vpop.f32.mrf.mxu0
      %v3177 = vadd.f32 0.0, %v3176
      %3178 = vdwg.mxu0
      %v3179 = vadd.f32 %v3110, %v3151
      %v3180 = vadd.f32 %v3111, %v3174
      %v3181 = vadd.f32 %v3112, %v3154
      %v3182 = vadd.f32 %v3113, %v3177
      %3183 = vst [vmem:[#allocation1] ss:$2 sm:$0xff] %v2787
      %v3184 = vld.sshfl [vmem:[#allocation1] sm:$0xff pattern:$0x75316420]
      %v3185 = vld.sshfl [vmem:[#allocation1 + $0x8] sm:$0xff pattern:$0x75316420]
      %3188 = vrot.lane.b32.xlu0 %v3184, 113
      %v3189 = vpop.permute.xlu0 %3188
      %3190 = vrot.lane.b32.xlu0 %v3185, 113
      %v3191 = vpop.permute.xlu0 %3190
      %v3192 = vsel %vm680, %v3189, %v3191
      %v3193 = vsel %vm680, %v3191, %v3189
      %v3194 = vmul.f32 %v3192, %v684
      %v3195 = vmul.f32 %v3193, %v685
      %v3197 = vsel %vm235, %v3194, 0
      %v3200 = vsel %vm235, %v3195, 0
      %3202 = vmatpush.msra.mxu0 0.0
      %3203 = vmatpush.msra.mxu0 0.0
      %3204 = vmatpush.msra.mxu0 0.0
      %3205 = vmatpush.msra.mxu0 0.0
      %3206 = vmatpush.msra.mxu0 0.0
      %3207 = vmatpush.msra.mxu0 0.0
      %3208 = vmatpush.msra.mxu0 0.0
      %3209 = vmatpush.msra.mxu0 0.0
      %3210 = vmatpush.msra.mxu0 0.0
      %3211 = vmatpush.msra.mxu0 0.0
      %3212 = vmatpush.msra.mxu0 0.0
      %3213 = vmatpush.msra.mxu0 0.0
      %3214 = vmatpush.msra.mxu0 0.0
      %3215 = vmatpush.msra.mxu0 0.0
      %3216 = vmatpush.msra.mxu0 0.0
      %3217 = vmatpush.msra.mxu0 %v3197
      %3218 = vmatmul.f32.gmra.mxu0 %v691
      %v3219 = vpop.f32.mrf.mxu0
      %v3220 = vadd.f32 0.0, %v3219
      %3221 = vmatmul.f32.gmra.mxu0 %v694
      %v3222 = vpop.f32.mrf.mxu0
      %v3223 = vadd.f32 0.0, %v3222
      %3224 = vdwg.mxu0
      %3225 = vmatpush.msra.mxu0 0.0
      %3226 = vmatpush.msra.mxu0 0.0
      %3227 = vmatpush.msra.mxu0 0.0
      %3228 = vmatpush.msra.mxu0 0.0
      %3229 = vmatpush.msra.mxu0 0.0
      %3230 = vmatpush.msra.mxu0 0.0
      %3231 = vmatpush.msra.mxu0 0.0
      %3232 = vmatpush.msra.mxu0 0.0
      %3233 = vmatpush.msra.mxu0 0.0
      %3234 = vmatpush.msra.mxu0 0.0
      %3235 = vmatpush.msra.mxu0 0.0
      %3236 = vmatpush.msra.mxu0 0.0
      %3237 = vmatpush.msra.mxu0 0.0
      %3238 = vmatpush.msra.mxu0 0.0
      %3239 = vmatpush.msra.mxu0 0.0
      %3240 = vmatpush.msra.mxu0 %v3200
      %3241 = vmatmul.f32.gmra.mxu0 %v691
      %v3242 = vpop.f32.mrf.mxu0
      %v3243 = vadd.f32 0.0, %v3242
      %3244 = vmatmul.f32.gmra.mxu0 %v694
      %v3245 = vpop.f32.mrf.mxu0
      %v3246 = vadd.f32 0.0, %v3245
      %3247 = vdwg.mxu0
      %v3248 = vadd.f32 %v3179, %v3220
      %v3249 = vadd.f32 %v3180, %v3243
      %v3250 = vadd.f32 %v3181, %v3223
      %v3251 = vadd.f32 %v3182, %v3246
      %3252 = vst [vmem:[#allocation1] ss:$2 sm:$0xff] %v2787
      %v3253 = vld.sshfl [vmem:[#allocation1] sm:$0xff pattern:$0x75316420]
      %v3254 = vld.sshfl [vmem:[#allocation1 + $0x8] sm:$0xff pattern:$0x75316420]
      %3257 = vrot.lane.b32.xlu0 %v3253, 112
      %v3258 = vpop.permute.xlu0 %3257
      %3259 = vrot.lane.b32.xlu0 %v3254, 112
      %v3260 = vpop.permute.xlu0 %3259
      %v3261 = vsel %vm761, %v3258, %v3260
      %v3262 = vsel %vm761, %v3260, %v3258
      %v3263 = vmul.f32 %v3261, %v765
      %v3264 = vmul.f32 %v3262, %v766
      %v3266 = vsel %vm235, %v3263, 0
      %v3269 = vsel %vm235, %v3264, 0
      %3271 = vmatpush.msra.mxu0 0.0
      %3272 = vmatpush.msra.mxu0 0.0
      %3273 = vmatpush.msra.mxu0 0.0
      %3274 = vmatpush.msra.mxu0 0.0
      %3275 = vmatpush.msra.mxu0 0.0
      %3276 = vmatpush.msra.mxu0 0.0
      %3277 = vmatpush.msra.mxu0 0.0
      %3278 = vmatpush.msra.mxu0 0.0
      %3279 = vmatpush.msra.mxu0 0.0
      %3280 = vmatpush.msra.mxu0 0.0
      %3281 = vmatpush.msra.mxu0 0.0
      %3282 = vmatpush.msra.mxu0 0.0
      %3283 = vmatpush.msra.mxu0 0.0
      %3284 = vmatpush.msra.mxu0 0.0
      %3285 = vmatpush.msra.mxu0 0.0
      %3286 = vmatpush.msra.mxu0 %v3266
      %3287 = vmatmul.f32.gmra.mxu0 %v772
      %v3288 = vpop.f32.mrf.mxu0
      %v3289 = vadd.f32 0.0, %v3288
      %3290 = vmatmul.f32.gmra.mxu0 %v775
      %v3291 = vpop.f32.mrf.mxu0
      %v3292 = vadd.f32 0.0, %v3291
      %3293 = vdwg.mxu0
      %3294 = vmatpush.msra.mxu0 0.0
      %3295 = vmatpush.msra.mxu0 0.0
      %3296 = vmatpush.msra.mxu0 0.0
      %3297 = vmatpush.msra.mxu0 0.0
      %3298 = vmatpush.msra.mxu0 0.0
      %3299 = vmatpush.msra.mxu0 0.0
      %3300 = vmatpush.msra.mxu0 0.0
      %3301 = vmatpush.msra.mxu0 0.0
      %3302 = vmatpush.msra.mxu0 0.0
      %3303 = vmatpush.msra.mxu0 0.0
      %3304 = vmatpush.msra.mxu0 0.0
      %3305 = vmatpush.msra.mxu0 0.0
      %3306 = vmatpush.msra.mxu0 0.0
      %3307 = vmatpush.msra.mxu0 0.0
      %3308 = vmatpush.msra.mxu0 0.0
      %3309 = vmatpush.msra.mxu0 %v3269
      %3310 = vmatmul.f32.gmra.mxu0 %v772
      %v3311 = vpop.f32.mrf.mxu0
      %v3312 = vadd.f32 0.0, %v3311
      %3313 = vmatmul.f32.gmra.mxu0 %v775
      %v3314 = vpop.f32.mrf.mxu0
      %v3315 = vadd.f32 0.0, %v3314
      %3316 = vdwg.mxu0
      %v3317 = vadd.f32 %v3248, %v3289
      %v3318 = vadd.f32 %v3249, %v3312
      %v3319 = vadd.f32 %v3250, %v3292
      %v3320 = vadd.f32 %v3251, %v3315
      %3321 = vst [vmem:[#allocation1] ss:$2 sm:$0xff] %v2787
      %v3322 = vld.sshfl [vmem:[#allocation1] sm:$0xff pattern:$0x75316420]
      %v3323 = vld.sshfl [vmem:[#allocation1 + $0x8] sm:$0xff pattern:$0x75316420]
      %3326 = vrot.lane.b32.xlu0 %v3322, 111
      %v3327 = vpop.permute.xlu0 %3326
      %3328 = vrot.lane.b32.xlu0 %v3323, 111
      %v3329 = vpop.permute.xlu0 %3328
      %v3330 = vsel %vm842, %v3327, %v3329
      %v3331 = vsel %vm842, %v3329, %v3327
      %v3332 = vmul.f32 %v3330, %v846
      %v3333 = vmul.f32 %v3331, %v847
      %v3335 = vsel %vm235, %v3332, 0
      %v3338 = vsel %vm235, %v3333, 0
      %3340 = vmatpush.msra.mxu0 0.0
      %3341 = vmatpush.msra.mxu0 0.0
      %3342 = vmatpush.msra.mxu0 0.0
      %3343 = vmatpush.msra.mxu0 0.0
      %3344 = vmatpush.msra.mxu0 0.0
      %3345 = vmatpush.msra.mxu0 0.0
      %3346 = vmatpush.msra.mxu0 0.0
      %3347 = vmatpush.msra.mxu0 0.0
      %3348 = vmatpush.msra.mxu0 0.0
      %3349 = vmatpush.msra.mxu0 0.0
      %3350 = vmatpush.msra.mxu0 0.0
      %3351 = vmatpush.msra.mxu0 0.0
      %3352 = vmatpush.msra.mxu0 0.0
      %3353 = vmatpush.msra.mxu0 0.0
      %3354 = vmatpush.msra.mxu0 0.0
      %3355 = vmatpush.msra.mxu0 %v3335
      %3356 = vmatmul.f32.gmra.mxu0 %v853
      %v3357 = vpop.f32.mrf.mxu0
      %v3358 = vadd.f32 0.0, %v3357
      %3359 = vmatmul.f32.gmra.mxu0 %v856
      %v3360 = vpop.f32.mrf.mxu0
      %v3361 = vadd.f32 0.0, %v3360
      %3362 = vdwg.mxu0
      %3363 = vmatpush.msra.mxu0 0.0
      %3364 = vmatpush.msra.mxu0 0.0
      %3365 = vmatpush.msra.mxu0 0.0
      %3366 = vmatpush.msra.mxu0 0.0
      %3367 = vmatpush.msra.mxu0 0.0
      %3368 = vmatpush.msra.mxu0 0.0
      %3369 = vmatpush.msra.mxu0 0.0
      %3370 = vmatpush.msra.mxu0 0.0
      %3371 = vmatpush.msra.mxu0 0.0
      %3372 = vmatpush.msra.mxu0 0.0
      %3373 = vmatpush.msra.mxu0 0.0
      %3374 = vmatpush.msra.mxu0 0.0
      %3375 = vmatpush.msra.mxu0 0.0
      %3376 = vmatpush.msra.mxu0 0.0
      %3377 = vmatpush.msra.mxu0 0.0
      %3378 = vmatpush.msra.mxu0 %v3338
      %3379 = vmatmul.f32.gmra.mxu0 %v853
      %v3380 = vpop.f32.mrf.mxu0
      %v3381 = vadd.f32 0.0, %v3380
      %3382 = vmatmul.f32.gmra.mxu0 %v856
      %v3383 = vpop.f32.mrf.mxu0
      %v3384 = vadd.f32 0.0, %v3383
      %3385 = vdwg.mxu0
      %v3386 = vadd.f32 %v3317, %v3358
      %v3387 = vadd.f32 %v3318, %v3381
      %v3388 = vadd.f32 %v3319, %v3361
      %v3389 = vadd.f32 %v3320, %v3384
      %vm3390 = vcmp.ge.f32.partialorder %v3386, 0.0
      %vm3391 = vcmp.ge.f32.partialorder %v3387, 0.0
      %vm3392 = vcmp.ge.f32.partialorder %v3388, 0.0
      %vm3393 = vcmp.ge.f32.partialorder %v3389, 0.0
      %v3394 = vmul.f32 %v3386, 0.01
      %v3395 = vmul.f32 %v3387, 0.01
      %v3396 = vmul.f32 %v3388, 0.01
      %v3397 = vmul.f32 %v3389, 0.01
      %v3398 = vsel %vm3390, %v3386, %v3394
      %v3399 = vsel %vm3391, %v3387, %v3395
      %v3400 = vsel %vm3392, %v3388, %v3396
      %v3401 = vsel %vm3393, %v3389, %v3397
      %v3402 = vmax.f32 %v2782, %v3398
      %v3403 = vmax.f32 %v2783, %v3399
      %v3404 = vmax.f32 %v2784, %v3400
      %v3405 = vmax.f32 %v2785, %v3401
      %s3406 = scalar_lea.vmem %s170, 40
      %v3407 = vld [vmem:[%s3406] sm:$0x77]
      %3409 = vst [vmem:[#allocation1] ss:$2 sm:$0xff] %v3407
      %v3410 = vld.sshfl [vmem:[#allocation1] sm:$0xff pattern:$0x75316420]
      %v3411 = vld.sshfl [vmem:[#allocation1 + $0x8] sm:$0xff pattern:$0x75316420]
      %3414 = vrot.lane.b32.xlu0 %v3410, 17
      %v3415 = vpop.permute.xlu0 %3414
      %3416 = vrot.lane.b32.xlu0 %v3411, 17
      %v3417 = vpop.permute.xlu0 %3416
      %v3418 = vsel %vm218, %v3415, %v3417
      %v3419 = vsel %vm218, %v3417, %v3415
      %v3420 = vmul.f32 %v3419, %v222
      %v3421 = vmul.f32 %v3418, %v223
      %v3423 = vsel %vm235, %v3420, 0
      %v3426 = vsel %vm235, %v3421, 0
      %3428 = vmatpush.msra.mxu0 0.0
      %3429 = vmatpush.msra.mxu0 0.0
      %3430 = vmatpush.msra.mxu0 0.0
      %3431 = vmatpush.msra.mxu0 0.0
      %3432 = vmatpush.msra.mxu0 0.0
      %3433 = vmatpush.msra.mxu0 0.0
      %3434 = vmatpush.msra.mxu0 0.0
      %3435 = vmatpush.msra.mxu0 0.0
      %3436 = vmatpush.msra.mxu0 0.0
      %3437 = vmatpush.msra.mxu0 0.0
      %3438 = vmatpush.msra.mxu0 0.0
      %3439 = vmatpush.msra.mxu0 0.0
      %3440 = vmatpush.msra.mxu0 0.0
      %3441 = vmatpush.msra.mxu0 0.0
      %3442 = vmatpush.msra.mxu0 0.0
      %3443 = vmatpush.msra.mxu0 %v3423
      %3444 = vmatmul.f32.gmra.mxu0 %v230
      %v3445 = vpop.f32.mrf.mxu0
      %v3446 = vadd.f32 0.0, %v3445
      %3447 = vmatmul.f32.gmra.mxu0 %v233
      %v3448 = vpop.f32.mrf.mxu0
      %v3449 = vadd.f32 0.0, %v3448
      %3450 = vdwg.mxu0
      %3451 = vmatpush.msra.mxu0 0.0
      %3452 = vmatpush.msra.mxu0 0.0
      %3453 = vmatpush.msra.mxu0 0.0
      %3454 = vmatpush.msra.mxu0 0.0
      %3455 = vmatpush.msra.mxu0 0.0
      %3456 = vmatpush.msra.mxu0 0.0
      %3457 = vmatpush.msra.mxu0 0.0
      %3458 = vmatpush.msra.mxu0 0.0
      %3459 = vmatpush.msra.mxu0 0.0
      %3460 = vmatpush.msra.mxu0 0.0
      %3461 = vmatpush.msra.mxu0 0.0
      %3462 = vmatpush.msra.mxu0 0.0
      %3463 = vmatpush.msra.mxu0 0.0
      %3464 = vmatpush.msra.mxu0 0.0
      %3465 = vmatpush.msra.mxu0 0.0
      %3466 = vmatpush.msra.mxu0 %v3426
      %3467 = vmatmul.f32.gmra.mxu0 %v230
      %v3468 = vpop.f32.mrf.mxu0
      %v3469 = vadd.f32 0.0, %v3468
      %3470 = vmatmul.f32.gmra.mxu0 %v233
      %v3471 = vpop.f32.mrf.mxu0
      %v3472 = vadd.f32 0.0, %v3471
      %3473 = vdwg.mxu0
      %3474 = vst [vmem:[#allocation1] ss:$2 sm:$0xff] %v3407
      %v3475 = vld.sshfl [vmem:[#allocation1] sm:$0xff pattern:$0x75316420]
      %v3476 = vld.sshfl [vmem:[#allocation1 + $0x8] sm:$0xff pattern:$0x75316420]
      %v3477 = vsel %vm235, %v3475, 0
      %v3479 = vsel %vm235, %v3476, 0
      %3481 = vmatpush.msra.mxu0 0.0
      %3482 = vmatpush.msra.mxu0 0.0
      %3483 = vmatpush.msra.mxu0 0.0
      %3484 = vmatpush.msra.mxu0 0.0
      %3485 = vmatpush.msra.mxu0 0.0
      %3486 = vmatpush.msra.mxu0 0.0
      %3487 = vmatpush.msra.mxu0 0.0
      %3488 = vmatpush.msra.mxu0 0.0
      %3489 = vmatpush.msra.mxu0 0.0
      %3490 = vmatpush.msra.mxu0 0.0
      %3491 = vmatpush.msra.mxu0 0.0
      %3492 = vmatpush.msra.mxu0 0.0
      %3493 = vmatpush.msra.mxu0 0.0
      %3494 = vmatpush.msra.mxu0 0.0
      %3495 = vmatpush.msra.mxu0 0.0
      %3496 = vmatpush.msra.mxu0 %v3477
      %3497 = vmatmul.f32.gmra.mxu0 %v292
      %v3498 = vpop.f32.mrf.mxu0
      %v3499 = vadd.f32 %v3446, %v3498
      %3500 = vmatmul.f32.gmra.mxu0 %v295
      %v3501 = vpop.f32.mrf.mxu0
      %v3502 = vadd.f32 %v3449, %v3501
      %3503 = vdwg.mxu0
      %3504 = vmatpush.msra.mxu0 0.0
      %3505 = vmatpush.msra.mxu0 0.0
      %3506 = vmatpush.msra.mxu0 0.0
      %3507 = vmatpush.msra.mxu0 0.0
      %3508 = vmatpush.msra.mxu0 0.0
      %3509 = vmatpush.msra.mxu0 0.0
      %3510 = vmatpush.msra.mxu0 0.0
      %3511 = vmatpush.msra.mxu0 0.0
      %3512 = vmatpush.msra.mxu0 0.0
      %3513 = vmatpush.msra.mxu0 0.0
      %3514 = vmatpush.msra.mxu0 0.0
      %3515 = vmatpush.msra.mxu0 0.0
      %3516 = vmatpush.msra.mxu0 0.0
      %3517 = vmatpush.msra.mxu0 0.0
      %3518 = vmatpush.msra.mxu0 0.0
      %3519 = vmatpush.msra.mxu0 %v3479
      %3520 = vmatmul.f32.gmra.mxu0 %v292
      %v3521 = vpop.f32.mrf.mxu0
      %v3522 = vadd.f32 %v3469, %v3521
      %3523 = vmatmul.f32.gmra.mxu0 %v295
      %v3524 = vpop.f32.mrf.mxu0
      %v3525 = vadd.f32 %v3472, %v3524
      %3526 = vdwg.mxu0
      %3527 = vst [vmem:[#allocation1] ss:$2 sm:$0xff] %v3407
      %v3528 = vld.sshfl [vmem:[#allocation1] sm:$0xff pattern:$0x75316420]
      %v3529 = vld.sshfl [vmem:[#allocation1 + $0x8] sm:$0xff pattern:$0x75316420]
      %3532 = vrot.lane.b32.xlu0 %v3528, 16
      %v3533 = vpop.permute.xlu0 %3532
      %3534 = vrot.lane.b32.xlu0 %v3529, 16
      %v3535 = vpop.permute.xlu0 %3534
      %v3536 = vsel %vm356, %v3533, %v3535
      %v3537 = vsel %vm356, %v3535, %v3533
      %v3538 = vmul.f32 %v3537, %v360
      %v3539 = vmul.f32 %v3536, %v361
      %v3541 = vsel %vm235, %v3538, 0
      %v3544 = vsel %vm235, %v3539, 0
      %3546 = vmatpush.msra.mxu0 0.0
      %3547 = vmatpush.msra.mxu0 0.0
      %3548 = vmatpush.msra.mxu0 0.0
      %3549 = vmatpush.msra.mxu0 0.0
      %3550 = vmatpush.msra.mxu0 0.0
      %3551 = vmatpush.msra.mxu0 0.0
      %3552 = vmatpush.msra.mxu0 0.0
      %3553 = vmatpush.msra.mxu0 0.0
      %3554 = vmatpush.msra.mxu0 0.0
      %3555 = vmatpush.msra.mxu0 0.0
      %3556 = vmatpush.msra.mxu0 0.0
      %3557 = vmatpush.msra.mxu0 0.0
      %3558 = vmatpush.msra.mxu0 0.0
      %3559 = vmatpush.msra.mxu0 0.0
      %3560 = vmatpush.msra.mxu0 0.0
      %3561 = vmatpush.msra.mxu0 %v3541
      %3562 = vmatmul.f32.gmra.mxu0 %v367
      %v3563 = vpop.f32.mrf.mxu0
      %v3564 = vadd.f32 0.0, %v3563
      %3565 = vmatmul.f32.gmra.mxu0 %v370
      %v3566 = vpop.f32.mrf.mxu0
      %v3567 = vadd.f32 0.0, %v3566
      %3568 = vdwg.mxu0
      %3569 = vmatpush.msra.mxu0 0.0
      %3570 = vmatpush.msra.mxu0 0.0
      %3571 = vmatpush.msra.mxu0 0.0
      %3572 = vmatpush.msra.mxu0 0.0
      %3573 = vmatpush.msra.mxu0 0.0
      %3574 = vmatpush.msra.mxu0 0.0
      %3575 = vmatpush.msra.mxu0 0.0
      %3576 = vmatpush.msra.mxu0 0.0
      %3577 = vmatpush.msra.mxu0 0.0
      %3578 = vmatpush.msra.mxu0 0.0
      %3579 = vmatpush.msra.mxu0 0.0
      %3580 = vmatpush.msra.mxu0 0.0
      %3581 = vmatpush.msra.mxu0 0.0
      %3582 = vmatpush.msra.mxu0 0.0
      %3583 = vmatpush.msra.mxu0 0.0
      %3584 = vmatpush.msra.mxu0 %v3544
      %3585 = vmatmul.f32.gmra.mxu0 %v367
      %v3586 = vpop.f32.mrf.mxu0
      %v3587 = vadd.f32 0.0, %v3586
      %3588 = vmatmul.f32.gmra.mxu0 %v370
      %v3589 = vpop.f32.mrf.mxu0
      %v3590 = vadd.f32 0.0, %v3589
      %3591 = vdwg.mxu0
      %v3592 = vadd.f32 %v3499, %v3564
      %v3593 = vadd.f32 %v3522, %v3587
      %v3594 = vadd.f32 %v3502, %v3567
      %v3595 = vadd.f32 %v3525, %v3590
      %3596 = vst [vmem:[#allocation1] ss:$2 sm:$0xff] %v3407
      %v3597 = vld.sshfl [vmem:[#allocation1] sm:$0xff pattern:$0x75316420]
      %v3598 = vld.sshfl [vmem:[#allocation1 + $0x8] sm:$0xff pattern:$0x75316420]
      %3601 = vrot.lane.b32.xlu0 %v3597, 15
      %v3602 = vpop.permute.xlu0 %3601
      %3603 = vrot.lane.b32.xlu0 %v3598, 15
      %v3604 = vpop.permute.xlu0 %3603
      %v3605 = vsel %vm437, %v3602, %v3604
      %v3606 = vsel %vm437, %v3604, %v3602
      %v3607 = vmul.f32 %v3606, %v441
      %v3608 = vmul.f32 %v3605, %v442
      %v3610 = vsel %vm235, %v3607, 0
      %v3613 = vsel %vm235, %v3608, 0
      %3615 = vmatpush.msra.mxu0 0.0
      %3616 = vmatpush.msra.mxu0 0.0
      %3617 = vmatpush.msra.mxu0 0.0
      %3618 = vmatpush.msra.mxu0 0.0
      %3619 = vmatpush.msra.mxu0 0.0
      %3620 = vmatpush.msra.mxu0 0.0
      %3621 = vmatpush.msra.mxu0 0.0
      %3622 = vmatpush.msra.mxu0 0.0
      %3623 = vmatpush.msra.mxu0 0.0
      %3624 = vmatpush.msra.mxu0 0.0
      %3625 = vmatpush.msra.mxu0 0.0
      %3626 = vmatpush.msra.mxu0 0.0
      %3627 = vmatpush.msra.mxu0 0.0
      %3628 = vmatpush.msra.mxu0 0.0
      %3629 = vmatpush.msra.mxu0 0.0
      %3630 = vmatpush.msra.mxu0 %v3610
      %3631 = vmatmul.f32.gmra.mxu0 %v448
      %v3632 = vpop.f32.mrf.mxu0
      %v3633 = vadd.f32 0.0, %v3632
      %3634 = vmatmul.f32.gmra.mxu0 %v451
      %v3635 = vpop.f32.mrf.mxu0
      %v3636 = vadd.f32 0.0, %v3635
      %3637 = vdwg.mxu0
      %3638 = vmatpush.msra.mxu0 0.0
      %3639 = vmatpush.msra.mxu0 0.0
      %3640 = vmatpush.msra.mxu0 0.0
      %3641 = vmatpush.msra.mxu0 0.0
      %3642 = vmatpush.msra.mxu0 0.0
      %3643 = vmatpush.msra.mxu0 0.0
      %3644 = vmatpush.msra.mxu0 0.0
      %3645 = vmatpush.msra.mxu0 0.0
      %3646 = vmatpush.msra.mxu0 0.0
      %3647 = vmatpush.msra.mxu0 0.0
      %3648 = vmatpush.msra.mxu0 0.0
      %3649 = vmatpush.msra.mxu0 0.0
      %3650 = vmatpush.msra.mxu0 0.0
      %3651 = vmatpush.msra.mxu0 0.0
      %3652 = vmatpush.msra.mxu0 0.0
      %3653 = vmatpush.msra.mxu0 %v3613
      %3654 = vmatmul.f32.gmra.mxu0 %v448
      %v3655 = vpop.f32.mrf.mxu0
      %v3656 = vadd.f32 0.0, %v3655
      %3657 = vmatmul.f32.gmra.mxu0 %v451
      %v3658 = vpop.f32.mrf.mxu0
      %v3659 = vadd.f32 0.0, %v3658
      %3660 = vdwg.mxu0
      %v3661 = vadd.f32 %v3592, %v3633
      %v3662 = vadd.f32 %v3593, %v3656
      %v3663 = vadd.f32 %v3594, %v3636
      %v3664 = vadd.f32 %v3595, %v3659
      %3665 = vst [vmem:[#allocation1] ss:$2 sm:$0xff] %v3407
      %v3666 = vld.sshfl [vmem:[#allocation1] sm:$0xff pattern:$0x75316420]
      %v3667 = vld.sshfl [vmem:[#allocation1 + $0x8] sm:$0xff pattern:$0x75316420]
      %3670 = vrot.lane.b32.xlu0 %v3666, 1
      %v3671 = vpop.permute.xlu0 %3670
      %3672 = vrot.lane.b32.xlu0 %v3667, 1
      %v3673 = vpop.permute.xlu0 %3672
      %v3674 = vsel %vm518, %v3671, %v3673
      %v3675 = vsel %vm518, %v3673, %v3671
      %v3676 = vmul.f32 %v3675, %v522
      %v3677 = vmul.f32 %v3674, %v523
      %v3679 = vsel %vm235, %v3676, 0
      %v3682 = vsel %vm235, %v3677, 0
      %3684 = vmatpush.msra.mxu0 0.0
      %3685 = vmatpush.msra.mxu0 0.0
      %3686 = vmatpush.msra.mxu0 0.0
      %3687 = vmatpush.msra.mxu0 0.0
      %3688 = vmatpush.msra.mxu0 0.0
      %3689 = vmatpush.msra.mxu0 0.0
      %3690 = vmatpush.msra.mxu0 0.0
      %3691 = vmatpush.msra.mxu0 0.0
      %3692 = vmatpush.msra.mxu0 0.0
      %3693 = vmatpush.msra.mxu0 0.0
      %3694 = vmatpush.msra.mxu0 0.0
      %3695 = vmatpush.msra.mxu0 0.0
      %3696 = vmatpush.msra.mxu0 0.0
      %3697 = vmatpush.msra.mxu0 0.0
      %3698 = vmatpush.msra.mxu0 0.0
      %3699 = vmatpush.msra.mxu0 %v3679
      %3700 = vmatmul.f32.gmra.mxu0 %v529
      %v3701 = vpop.f32.mrf.mxu0
      %v3702 = vadd.f32 0.0, %v3701
      %3703 = vmatmul.f32.gmra.mxu0 %v532
      %v3704 = vpop.f32.mrf.mxu0
      %v3705 = vadd.f32 0.0, %v3704
      %3706 = vdwg.mxu0
      %3707 = vmatpush.msra.mxu0 0.0
      %3708 = vmatpush.msra.mxu0 0.0
      %3709 = vmatpush.msra.mxu0 0.0
      %3710 = vmatpush.msra.mxu0 0.0
      %3711 = vmatpush.msra.mxu0 0.0
      %3712 = vmatpush.msra.mxu0 0.0
      %3713 = vmatpush.msra.mxu0 0.0
      %3714 = vmatpush.msra.mxu0 0.0
      %3715 = vmatpush.msra.mxu0 0.0
      %3716 = vmatpush.msra.mxu0 0.0
      %3717 = vmatpush.msra.mxu0 0.0
      %3718 = vmatpush.msra.mxu0 0.0
      %3719 = vmatpush.msra.mxu0 0.0
      %3720 = vmatpush.msra.mxu0 0.0
      %3721 = vmatpush.msra.mxu0 0.0
      %3722 = vmatpush.msra.mxu0 %v3682
      %3723 = vmatmul.f32.gmra.mxu0 %v529
      %v3724 = vpop.f32.mrf.mxu0
      %v3725 = vadd.f32 0.0, %v3724
      %3726 = vmatmul.f32.gmra.mxu0 %v532
      %v3727 = vpop.f32.mrf.mxu0
      %v3728 = vadd.f32 0.0, %v3727
      %3729 = vdwg.mxu0
      %v3730 = vadd.f32 %v3661, %v3702
      %v3731 = vadd.f32 %v3662, %v3725
      %v3732 = vadd.f32 %v3663, %v3705
      %v3733 = vadd.f32 %v3664, %v3728
      %3734 = vst [vmem:[#allocation1] ss:$2 sm:$0xff] %v3407
      %v3735 = vld.sshfl [vmem:[#allocation1] sm:$0xff pattern:$0x75316420]
      %v3736 = vld.sshfl [vmem:[#allocation1 + $0x8] sm:$0xff pattern:$0x75316420]
      %3739 = vrot.lane.b32.xlu0 %v3735, 127
      %v3740 = vpop.permute.xlu0 %3739
      %3741 = vrot.lane.b32.xlu0 %v3736, 127
      %v3742 = vpop.permute.xlu0 %3741
      %v3743 = vsel %vm599, %v3740, %v3742
      %v3744 = vsel %vm599, %v3742, %v3740
      %v3745 = vmul.f32 %v3743, %v603
      %v3746 = vmul.f32 %v3744, %v604
      %v3748 = vsel %vm235, %v3745, 0
      %v3751 = vsel %vm235, %v3746, 0
      %3753 = vmatpush.msra.mxu0 0.0
      %3754 = vmatpush.msra.mxu0 0.0
      %3755 = vmatpush.msra.mxu0 0.0
      %3756 = vmatpush.msra.mxu0 0.0
      %3757 = vmatpush.msra.mxu0 0.0
      %3758 = vmatpush.msra.mxu0 0.0
      %3759 = vmatpush.msra.mxu0 0.0
      %3760 = vmatpush.msra.mxu0 0.0
      %3761 = vmatpush.msra.mxu0 0.0
      %3762 = vmatpush.msra.mxu0 0.0
      %3763 = vmatpush.msra.mxu0 0.0
      %3764 = vmatpush.msra.mxu0 0.0
      %3765 = vmatpush.msra.mxu0 0.0
      %3766 = vmatpush.msra.mxu0 0.0
      %3767 = vmatpush.msra.mxu0 0.0
      %3768 = vmatpush.msra.mxu0 %v3748
      %3769 = vmatmul.f32.gmra.mxu0 %v610
      %v3770 = vpop.f32.mrf.mxu0
      %v3771 = vadd.f32 0.0, %v3770
      %3772 = vmatmul.f32.gmra.mxu0 %v613
      %v3773 = vpop.f32.mrf.mxu0
      %v3774 = vadd.f32 0.0, %v3773
      %3775 = vdwg.mxu0
      %3776 = vmatpush.msra.mxu0 0.0
      %3777 = vmatpush.msra.mxu0 0.0
      %3778 = vmatpush.msra.mxu0 0.0
      %3779 = vmatpush.msra.mxu0 0.0
      %3780 = vmatpush.msra.mxu0 0.0
      %3781 = vmatpush.msra.mxu0 0.0
      %3782 = vmatpush.msra.mxu0 0.0
      %3783 = vmatpush.msra.mxu0 0.0
      %3784 = vmatpush.msra.mxu0 0.0
      %3785 = vmatpush.msra.mxu0 0.0
      %3786 = vmatpush.msra.mxu0 0.0
      %3787 = vmatpush.msra.mxu0 0.0
      %3788 = vmatpush.msra.mxu0 0.0
      %3789 = vmatpush.msra.mxu0 0.0
      %3790 = vmatpush.msra.mxu0 0.0
      %3791 = vmatpush.msra.mxu0 %v3751
      %3792 = vmatmul.f32.gmra.mxu0 %v610
      %v3793 = vpop.f32.mrf.mxu0
      %v3794 = vadd.f32 0.0, %v3793
      %3795 = vmatmul.f32.gmra.mxu0 %v613
      %v3796 = vpop.f32.mrf.mxu0
      %v3797 = vadd.f32 0.0, %v3796
      %3798 = vdwg.mxu0
      %v3799 = vadd.f32 %v3730, %v3771
      %v3800 = vadd.f32 %v3731, %v3794
      %v3801 = vadd.f32 %v3732, %v3774
      %v3802 = vadd.f32 %v3733, %v3797
      %3803 = vst [vmem:[#allocation1] ss:$2 sm:$0xff] %v3407
      %v3804 = vld.sshfl [vmem:[#allocation1] sm:$0xff pattern:$0x75316420]
      %v3805 = vld.sshfl [vmem:[#allocation1 + $0x8] sm:$0xff pattern:$0x75316420]
      %3808 = vrot.lane.b32.xlu0 %v3804, 113
      %v3809 = vpop.permute.xlu0 %3808
      %3810 = vrot.lane.b32.xlu0 %v3805, 113
      %v3811 = vpop.permute.xlu0 %3810
      %v3812 = vsel %vm680, %v3809, %v3811
      %v3813 = vsel %vm680, %v3811, %v3809
      %v3814 = vmul.f32 %v3812, %v684
      %v3815 = vmul.f32 %v3813, %v685
      %v3817 = vsel %vm235, %v3814, 0
      %v3820 = vsel %vm235, %v3815, 0
      %3822 = vmatpush.msra.mxu0 0.0
      %3823 = vmatpush.msra.mxu0 0.0
      %3824 = vmatpush.msra.mxu0 0.0
      %3825 = vmatpush.msra.mxu0 0.0
      %3826 = vmatpush.msra.mxu0 0.0
      %3827 = vmatpush.msra.mxu0 0.0
      %3828 = vmatpush.msra.mxu0 0.0
      %3829 = vmatpush.msra.mxu0 0.0
      %3830 = vmatpush.msra.mxu0 0.0
      %3831 = vmatpush.msra.mxu0 0.0
      %3832 = vmatpush.msra.mxu0 0.0
      %3833 = vmatpush.msra.mxu0 0.0
      %3834 = vmatpush.msra.mxu0 0.0
      %3835 = vmatpush.msra.mxu0 0.0
      %3836 = vmatpush.msra.mxu0 0.0
      %3837 = vmatpush.msra.mxu0 %v3817
      %3838 = vmatmul.f32.gmra.mxu0 %v691
      %v3839 = vpop.f32.mrf.mxu0
      %v3840 = vadd.f32 0.0, %v3839
      %3841 = vmatmul.f32.gmra.mxu0 %v694
      %v3842 = vpop.f32.mrf.mxu0
      %v3843 = vadd.f32 0.0, %v3842
      %3844 = vdwg.mxu0
      %3845 = vmatpush.msra.mxu0 0.0
      %3846 = vmatpush.msra.mxu0 0.0
      %3847 = vmatpush.msra.mxu0 0.0
      %3848 = vmatpush.msra.mxu0 0.0
      %3849 = vmatpush.msra.mxu0 0.0
      %3850 = vmatpush.msra.mxu0 0.0
      %3851 = vmatpush.msra.mxu0 0.0
      %3852 = vmatpush.msra.mxu0 0.0
      %3853 = vmatpush.msra.mxu0 0.0
      %3854 = vmatpush.msra.mxu0 0.0
      %3855 = vmatpush.msra.mxu0 0.0
      %3856 = vmatpush.msra.mxu0 0.0
      %3857 = vmatpush.msra.mxu0 0.0
      %3858 = vmatpush.msra.mxu0 0.0
      %3859 = vmatpush.msra.mxu0 0.0
      %3860 = vmatpush.msra.mxu0 %v3820
      %3861 = vmatmul.f32.gmra.mxu0 %v691
      %v3862 = vpop.f32.mrf.mxu0
      %v3863 = vadd.f32 0.0, %v3862
      %3864 = vmatmul.f32.gmra.mxu0 %v694
      %v3865 = vpop.f32.mrf.mxu0
      %v3866 = vadd.f32 0.0, %v3865
      %3867 = vdwg.mxu0
      %v3868 = vadd.f32 %v3799, %v3840
      %v3869 = vadd.f32 %v3800, %v3863
      %v3870 = vadd.f32 %v3801, %v3843
      %v3871 = vadd.f32 %v3802, %v3866
      %3872 = vst [vmem:[#allocation1] ss:$2 sm:$0xff] %v3407
      %v3873 = vld.sshfl [vmem:[#allocation1] sm:$0xff pattern:$0x75316420]
      %v3874 = vld.sshfl [vmem:[#allocation1 + $0x8] sm:$0xff pattern:$0x75316420]
      %3877 = vrot.lane.b32.xlu0 %v3873, 112
      %v3878 = vpop.permute.xlu0 %3877
      %3879 = vrot.lane.b32.xlu0 %v3874, 112
      %v3880 = vpop.permute.xlu0 %3879
      %v3881 = vsel %vm761, %v3878, %v3880
      %v3882 = vsel %vm761, %v3880, %v3878
      %v3883 = vmul.f32 %v3881, %v765
      %v3884 = vmul.f32 %v3882, %v766
      %v3886 = vsel %vm235, %v3883, 0
      %v3889 = vsel %vm235, %v3884, 0
      %3891 = vmatpush.msra.mxu0 0.0
      %3892 = vmatpush.msra.mxu0 0.0
      %3893 = vmatpush.msra.mxu0 0.0
      %3894 = vmatpush.msra.mxu0 0.0
      %3895 = vmatpush.msra.mxu0 0.0
      %3896 = vmatpush.msra.mxu0 0.0
      %3897 = vmatpush.msra.mxu0 0.0
      %3898 = vmatpush.msra.mxu0 0.0
      %3899 = vmatpush.msra.mxu0 0.0
      %3900 = vmatpush.msra.mxu0 0.0
      %3901 = vmatpush.msra.mxu0 0.0
      %3902 = vmatpush.msra.mxu0 0.0
      %3903 = vmatpush.msra.mxu0 0.0
      %3904 = vmatpush.msra.mxu0 0.0
      %3905 = vmatpush.msra.mxu0 0.0
      %3906 = vmatpush.msra.mxu0 %v3886
      %3907 = vmatmul.f32.gmra.mxu0 %v772
      %v3908 = vpop.f32.mrf.mxu0
      %v3909 = vadd.f32 0.0, %v3908
      %3910 = vmatmul.f32.gmra.mxu0 %v775
      %v3911 = vpop.f32.mrf.mxu0
      %v3912 = vadd.f32 0.0, %v3911
      %3913 = vdwg.mxu0
      %3914 = vmatpush.msra.mxu0 0.0
      %3915 = vmatpush.msra.mxu0 0.0
      %3916 = vmatpush.msra.mxu0 0.0
      %3917 = vmatpush.msra.mxu0 0.0
      %3918 = vmatpush.msra.mxu0 0.0
      %3919 = vmatpush.msra.mxu0 0.0
      %3920 = vmatpush.msra.mxu0 0.0
      %3921 = vmatpush.msra.mxu0 0.0
      %3922 = vmatpush.msra.mxu0 0.0
      %3923 = vmatpush.msra.mxu0 0.0
      %3924 = vmatpush.msra.mxu0 0.0
      %3925 = vmatpush.msra.mxu0 0.0
      %3926 = vmatpush.msra.mxu0 0.0
      %3927 = vmatpush.msra.mxu0 0.0
      %3928 = vmatpush.msra.mxu0 0.0
      %3929 = vmatpush.msra.mxu0 %v3889
      %3930 = vmatmul.f32.gmra.mxu0 %v772
      %v3931 = vpop.f32.mrf.mxu0
      %v3932 = vadd.f32 0.0, %v3931
      %3933 = vmatmul.f32.gmra.mxu0 %v775
      %v3934 = vpop.f32.mrf.mxu0
      %v3935 = vadd.f32 0.0, %v3934
      %3936 = vdwg.mxu0
      %v3937 = vadd.f32 %v3868, %v3909
      %v3938 = vadd.f32 %v3869, %v3932
      %v3939 = vadd.f32 %v3870, %v3912
      %v3940 = vadd.f32 %v3871, %v3935
      %3941 = vst [vmem:[#allocation1] ss:$2 sm:$0xff] %v3407
      %v3942 = vld.sshfl [vmem:[#allocation1] sm:$0xff pattern:$0x75316420]
      %v3943 = vld.sshfl [vmem:[#allocation1 + $0x8] sm:$0xff pattern:$0x75316420]
      %3946 = vrot.lane.b32.xlu0 %v3942, 111
      %v3947 = vpop.permute.xlu0 %3946
      %3948 = vrot.lane.b32.xlu0 %v3943, 111
      %v3949 = vpop.permute.xlu0 %3948
      %v3950 = vsel %vm842, %v3947, %v3949
      %v3951 = vsel %vm842, %v3949, %v3947
      %v3952 = vmul.f32 %v3950, %v846
      %v3953 = vmul.f32 %v3951, %v847
      %v3955 = vsel %vm235, %v3952, 0
      %v3958 = vsel %vm235, %v3953, 0
      %3960 = vmatpush.msra.mxu0 0.0
      %3961 = vmatpush.msra.mxu0 0.0
      %3962 = vmatpush.msra.mxu0 0.0
      %3963 = vmatpush.msra.mxu0 0.0
      %3964 = vmatpush.msra.mxu0 0.0
      %3965 = vmatpush.msra.mxu0 0.0
      %3966 = vmatpush.msra.mxu0 0.0
      %3967 = vmatpush.msra.mxu0 0.0
      %3968 = vmatpush.msra.mxu0 0.0
      %3969 = vmatpush.msra.mxu0 0.0
      %3970 = vmatpush.msra.mxu0 0.0
      %3971 = vmatpush.msra.mxu0 0.0
      %3972 = vmatpush.msra.mxu0 0.0
      %3973 = vmatpush.msra.mxu0 0.0
      %3974 = vmatpush.msra.mxu0 0.0
      %3975 = vmatpush.msra.mxu0 %v3955
      %3976 = vmatmul.f32.gmra.mxu0 %v853
      %v3977 = vpop.f32.mrf.mxu0
      %v3978 = vadd.f32 0.0, %v3977
      %3979 = vmatmul.f32.gmra.mxu0 %v856
      %v3980 = vpop.f32.mrf.mxu0
      %v3981 = vadd.f32 0.0, %v3980
      %3982 = vdwg.mxu0
      %3983 = vmatpush.msra.mxu0 0.0
      %3984 = vmatpush.msra.mxu0 0.0
      %3985 = vmatpush.msra.mxu0 0.0
      %3986 = vmatpush.msra.mxu0 0.0
      %3987 = vmatpush.msra.mxu0 0.0
      %3988 = vmatpush.msra.mxu0 0.0
      %3989 = vmatpush.msra.mxu0 0.0
      %3990 = vmatpush.msra.mxu0 0.0
      %3991 = vmatpush.msra.mxu0 0.0
      %3992 = vmatpush.msra.mxu0 0.0
      %3993 = vmatpush.msra.mxu0 0.0
      %3994 = vmatpush.msra.mxu0 0.0
      %3995 = vmatpush.msra.mxu0 0.0
      %3996 = vmatpush.msra.mxu0 0.0
      %3997 = vmatpush.msra.mxu0 0.0
      %3998 = vmatpush.msra.mxu0 %v3958
      %3999 = vmatmul.f32.gmra.mxu0 %v853
      %v4000 = vpop.f32.mrf.mxu0
      %v4001 = vadd.f32 0.0, %v4000
      %4002 = vmatmul.f32.gmra.mxu0 %v856
      %v4003 = vpop.f32.mrf.mxu0
      %v4004 = vadd.f32 0.0, %v4003
      %4005 = vdwg.mxu0
      %v4006 = vadd.f32 %v3937, %v3978
      %v4007 = vadd.f32 %v3938, %v4001
      %v4008 = vadd.f32 %v3939, %v3981
      %v4009 = vadd.f32 %v3940, %v4004
      %vm4010 = vcmp.ge.f32.partialorder %v4006, 0.0
      %vm4011 = vcmp.ge.f32.partialorder %v4007, 0.0
      %vm4012 = vcmp.ge.f32.partialorder %v4008, 0.0
      %vm4013 = vcmp.ge.f32.partialorder %v4009, 0.0
      %v4014 = vmul.f32 %v4006, 0.01
      %v4015 = vmul.f32 %v4007, 0.01
      %v4016 = vmul.f32 %v4008, 0.01
      %v4017 = vmul.f32 %v4009, 0.01
      %v4018 = vsel %vm4010, %v4006, %v4014
      %v4019 = vsel %vm4011, %v4007, %v4015
      %v4020 = vsel %vm4012, %v4008, %v4016
      %v4021 = vsel %vm4013, %v4009, %v4017
      %v4022 = vmax.f32 %v3402, %v4018
      %v4023 = vmax.f32 %v3403, %v4019
      %v4024 = vmax.f32 %v3404, %v4020
      %v4025 = vmax.f32 %v3405, %v4021
      %s4026 = scalar_lea.vmem %s177, 32
      %4027 = vst [vmem:[%s4026] sm:$0xff] %v4022
      %4028 = vst [vmem:[%s4026 + $0x8] sm:$0xff] %v4023
      %4029 = vst [vmem:[%s4026 + $0x10] sm:$0xff] %v4024
      %4030 = vst [vmem:[%s4026 + $0x18] sm:$0xff] %v4025
      %s4031 = smul.u32 2, %s14
      %p4032 = scmp.lt.s32.totalorder %s4031, 3
      %s4033 = scalar_select %p4032, %s4031, 3
      %s4034 = smul.addr %s4033, 4
      %s4035 = smul.addr %s4034, 8
      %s4036 = scalar_lea.vmem %s3, %s4035
      // Predicated region
      $region33: #{_forward_stem1.1} parent=31 // pred_check
        %p4037 = pneg %p100
      $region34: #{_forward_stem1.1} parent=31 // pred_check_branch
        %4039 = sbr.rel (%p4037) target = $region36
      $region35: #{_forward_stem1.1} parent=31 // pred_region
        %s4040 = smul.u32 2, %s14
      $region36: #{_forward_stem1.1} parent=31 // pred_fallthru
        _
    $region32: #{_forward_stem1.1} parent=5 // pred_fallthru
      _
    %p4041 = scmp.le.s32.totalorder 2, %s9
    // Predicated region
    $region37: #{_forward_stem1.1} parent=5 // pred_check
      %p4042 = pneg %p4041
    $region38: #{_forward_stem1.1} parent=5 // pred_check_branch
      %4044 = sbr.rel (%p4042) target = $region40
    $region39: #{_forward_stem1.1} parent=5 // pred_region
      %s4045 = ssub.s32 %s9, 2
      // Predicated region
      $region41: #{_forward_stem1.1} parent=39 // pred_check
        %p4046 = pneg %p106
      $region42: #{_forward_stem1.1} parent=39 // pred_check_branch
        %4048 = sbr.rel (%p4046) target = $region44
      $region43: #{_forward_stem1.1} parent=39 // pred_region
        %s4049 = smul.u32 2, %s15
        %p4050 = scmp.lt.s32.totalorder %s4049, 3
        %s4051 = scalar_select %p4050, %s4049, 3
        %s4052 = smul.addr %s4051, 4
        %s4053 = smul.addr %s4052, 8
        %s4054 = scalar_lea.vmem %s3, %s4053
      $region44: #{_forward_stem1.1} parent=39 // pred_fallthru
        _
    $region40: #{_forward_stem1.1} parent=5 // pred_fallthru
      _
  $region6: #{_forward_stem1.1} parent=0 // loop_footer
    %s13 = sadd.s32 1, %s9
  $region7: #{_forward_stem1.1} parent=0 // loop_footer_branch
    %8 = sbr.rel target = $region3
  $region8: #{_forward_stem1.1} parent=0 // loop_exit
    _

</llo_original>
